<compile_context>
chip_gen: v7x
topology: tpu7x:2x2x1
jax: 0.10.0
libtpu: 0.0.40
codegen_flags: <defaults>
</compile_context>

<pallas_src>
import functools

import jax
import jax.numpy as jnp
from jax.experimental import pallas as pl
from jax.experimental.pallas import tpu as pltpu


# ----------------------------- Pallas kernel --------------------------------

def make_inception_kernel(hw, n1x1, n3x3red, n3x3, n5x5red, n5x5, pool_planes):
    c1 = n1x1 + n3x3red + n5x5red          # fused 1x1 stage output channels
    c23 = n3x3 + n5x5                      # fused first-3x3 stage channels

    def kernel(x_ref, s_ref, m_ref, w1_ref, t1_ref, w23_ref, t23_ref,
               w3b_ref, t3b_ref, w4_ref, t4_ref, o_ref):
        f32, bf16 = jnp.float32, jnp.bfloat16
        xb = x_ref[...]                                          # (Cin, HW) bf16

        # -------- fused 1x1 stage: branch1 + branch2-reduce + branch3-reduce
        ya = jnp.dot(w1_ref[...], xb, preferred_element_type=f32) + t1_ref[...]
        ya = jnp.maximum(ya, 0.0)                                # (c1, HW) f32
        yab = ya.astype(bf16)

        # -------- 3x3 window taps: shifts as permutation matmuls on the MXU,
        # shared between the two first 3x3 convs and the maxpool.
        acc23 = jnp.zeros((c23, hw), f32)
        pooled = None
        for k in range(9):
            s_k = s_ref[k]                                       # (HW, HW) bf16 0/1
            ya_s = jnp.dot(yab, s_k, preferred_element_type=f32).astype(bf16)
            acc23 = acc23 + jnp.dot(w23_ref[k], ya_s,
                                    preferred_element_type=f32)
            x_s = jnp.dot(xb, s_k, preferred_element_type=f32) + m_ref[k]
            pooled = x_s if pooled is None else jnp.maximum(pooled, x_s)

        h23 = jnp.maximum(acc23 + t23_ref[...], 0.0)             # (c23, HW)
        y2 = h23[:n3x3]                                          # branch-2 out
        h3 = h23[n3x3:c23].astype(bf16)                          # branch-3 mid

        # -------- branch 3, second 3x3 conv
        acc3 = jnp.zeros((n5x5, hw), f32)
        for k in range(9):
            h3_s = jnp.dot(h3, s_ref[k],
                           preferred_element_type=f32).astype(bf16)
            acc3 = acc3 + jnp.dot(w3b_ref[k], h3_s,
                                  preferred_element_type=f32)
        y3 = jnp.maximum(acc3 + t3b_ref[...], 0.0)

        # -------- branch 4: maxpool (done above) -> 1x1 conv
        y4 = jnp.dot(w4_ref[...], pooled.astype(bf16),
                     preferred_element_type=f32)
        y4 = jnp.maximum(y4 + t4_ref[...], 0.0)

        # -------- lane-dense channel concat straight into the output slab
        o_ref[:n1x1, :] = ya[:n1x1]
        o_ref[n1x1:n1x1 + n3x3, :] = y2
        o_ref[n1x1 + n3x3:n1x1 + n3x3 + n5x5, :] = y3
        o_ref[n1x1 + n3x3 + n5x5:n1x1 + n3x3 + n5x5 + pool_planes, :] = y4

    return kernel


# ------------------------------ JAX-side prep --------------------------------

def fold_bn(bias, gamma, beta, mean, var, eps=1e-5):
    scale = gamma / jnp.sqrt(var + eps)
    shift = (bias - mean) * scale + beta
    return scale, shift


def build_shift_mats(h, w):
    """9 (HW,HW) 0/1 shift matrices + additive pool masks for a 3x3/s1/p1 window."""
    hw = h * w
    idx = jnp.arange(hw)
    yy, xx = idx // w, idx % w
    mats, masks = [], []
    for dy in (-1, 0, 1):
        for dx in (-1, 0, 1):
            valid = ((yy + dy >= 0) & (yy + dy < h) &
                     (xx + dx >= 0) & (xx + dx < w))              # (HW,)
            src = idx + dy * w + dx
            s = (jnp.arange(hw)[:, None] == src[None, :]) & valid[None, :]
            mats.append(s.astype(jnp.bfloat16))                   # shifted = a @ s
            masks.append(jnp.where(valid, 0.0, -1e30).astype(jnp.float32)[None, :])
    return jnp.stack(mats, 0), jnp.stack(masks, 0)                # (9,HW,HW),(9,1,HW)


def prep_params(p, cfg):
    """Fold BN scale into bf16 weights; build the fused / tap-major layouts."""
    n1x1, n3x3red, n3x3, n5x5red, n5x5, pool_planes = cfg
    c1 = n1x1 + n3x3red + n5x5red

    s1, tb1 = fold_bn(p["b1_b"], *p["b1_bn"])
    s21, t21 = fold_bn(p["b2_b1"], *p["b2_bn1"])
    s22, t22 = fold_bn(p["b2_b2"], *p["b2_bn2"])
    s31, t31 = fold_bn(p["b3_b1"], *p["b3_bn1"])
    s32, t32 = fold_bn(p["b3_b2"], *p["b3_bn2"])
    s33, t33 = fold_bn(p["b3_b3"], *p["b3_bn3"])
    s4, t4s = fold_bn(p["b4_b"], *p["b4_bn"])

    # fused 1x1 stage (branch1 + both reduce convs), scale folded, (Cout, Cin)
    w1 = jnp.concatenate([p["b1_w"] * s1, p["b2_w1"] * s21, p["b3_w1"] * s31],
                         axis=1).T
    t1 = jnp.concatenate([tb1, t21, t31]).reshape(c1, 1)

    def conv3_taps(w_hwio, scale):        # (3,3,Cin,Cout) -> (9, Cout, Cin)
        wf = w_hwio * scale
        return jnp.transpose(wf, (0, 1, 3, 2)).reshape(9, wf.shape[3], wf.shape[2])

    w2t = conv3_taps(p["b2_w2"], s22)     # (9, n3x3, n3x3red)
    w3at = conv3_taps(p["b3_w2"], s32)    # (9, n5x5, n5x5red)
    w3bt = conv3_taps(p["b3_w3"], s33)    # (9, n5x5, n5x5)

    # expand first-3x3 weights to read the fused stage-1 slab directly
    # (zero columns select the right channels -> no value slicing in-kernel)
    w23 = jnp.zeros((9, n3x3 + n5x5, c1), jnp.float32)
    w23 = w23.at[:, :n3x3, n1x1:n1x1 + n3x3red].set(w2t)
    w23 = w23.at[:, n3x3:, n1x1 + n3x3red:].set(w3at)
    t23 = jnp.concatenate([t22, t32]).reshape(n3x3 + n5x5, 1)

    bf = jnp.bfloat16
    return dict(w1=w1.astype(bf), t1=t1,
                w23=w23.astype(bf), t23=t23,
                w3b=w3bt.astype(bf), t3b=t33.reshape(n5x5, 1),
                w4=((p["b4_w"] * s4).T).astype(bf),
                t4=t4s.reshape(pool_planes, 1))


def inception_forward(x_nchw, params, cfg):
    n1x1, n3x3red, n3x3, n5x5red, n5x5, pool_planes = cfg
    n, cin, h, w = x_nchw.shape
    hw = h * w
    c1 = n1x1 + n3x3red + n5x5red
    c23 = n3x3 + n5x5
    ctot = n1x1 + n3x3 + n5x5 + pool_planes

    x = x_nchw.reshape(n, cin, hw).astype(jnp.bfloat16)   # NCHW -> (N, C, HW), free
    smat, pmask = build_shift_mats(h, w)
    pp = prep_params(params, cfg)

    kernel = make_inception_kernel(hw, *cfg)
    inv = lambda shape: pl.BlockSpec(shape, lambda i, _s=len(shape): (0,) * _s)

    out = pl.pallas_call(
        kernel,
        out_shape=jax.ShapeDtypeStruct((n, ctot, hw), jnp.float32),
        grid=(n,),
        in_specs=[
            pl.BlockSpec((None, cin, hw), lambda i: (i, 0, 0)),   # x (per image)
            inv((9, hw, hw)),                                     # shift matrices
            inv((9, 1, hw)),                                      # pool masks
            inv((c1, cin)), inv((c1, 1)),                         # fused 1x1 stage
            inv((9, c23, c1)), inv((c23, 1)),                     # first 3x3 stage
            inv((9, n5x5, n5x5)), inv((n5x5, 1)),                 # second 3x3 (b3)
            inv((pool_planes, cin)), inv((pool_planes, 1)),       # pool-branch 1x1
        ],
        out_specs=pl.BlockSpec((None, ctot, hw), lambda i: (i, 0, 0)),
        compiler_params=pltpu.CompilerParams(
            dimension_semantics=("parallel",),
            vmem_limit_bytes=32 * 1024 * 1024),
    )(x, smat, pmask, pp["w1"], pp["t1"], pp["w23"], pp["t23"],
      pp["w3b"], pp["t3b"], pp["w4"], pp["t4"])

    return out.reshape(n, ctot, h, w)                             # NCHW


# ----------------------- pure-JAX reference (for checking) -------------------

def ref_inception(x_nchw, p, eps=1e-5):
    x = jnp.transpose(x_nchw, (0, 2, 3, 1)).astype(jnp.float32)   # NHWC

    def cbr(hin, w_hwio, bias, bn):
        gamma, beta, mean, var = bn
        scale = gamma / jnp.sqrt(var + eps)
        shift = (bias - mean) * scale + beta
        wf = (w_hwio * scale).astype(jnp.bfloat16)                # same folding as kernel
        pad = (wf.shape[0] - 1) // 2
        y = jax.lax.conv_general_dilated(
            hin.astype(jnp.bfloat16), wf, (1, 1), [(pad, pad), (pad, pad)],
            dimension_numbers=("NHWC", "HWIO", "NHWC"),
            preferred_element_type=jnp.float32)
        return jnp.maximum(y + shift, 0.0)

    as4d = lambda w2d: w2d.reshape(1, 1, *w2d.shape)
    y1 = cbr(x, as4d(p["b1_w"]), p["b1_b"], p["b1_bn"])
    h = cbr(x, as4d(p["b2_w1"]), p["b2_b1"], p["b2_bn1"])
    y2 = cbr(h, p["b2_w2"], p["b2_b2"], p["b2_bn2"])
    h = cbr(x, as4d(p["b3_w1"]), p["b3_b1"], p["b3_bn1"])
    h = cbr(h, p["b3_w2"], p["b3_b2"], p["b3_bn2"])
    y3 = cbr(h, p["b3_w3"], p["b3_b3"], p["b3_bn3"])
    pooled = jax.lax.reduce_window(x, -jnp.inf, jax.lax.max,
                                   (1, 3, 3, 1), (1, 1, 1, 1),
                                   [(0, 0), (1, 1), (1, 1), (0, 0)])
    y4 = cbr(pooled, as4d(p["b4_w"]), p["b4_b"], p["b4_bn"])
    out = jnp.concatenate([y1, y2, y3, y4], axis=-1)
    return jnp.transpose(out, (0, 3, 1, 2))


# ------------------------------ parameter init -------------------------------

def init_conv(key, cin, cout, k):
    kw, kb = jax.random.split(key)
    fan_in = cin * k * k
    bound = (1.0 / fan_in) ** 0.5
    if k == 1:
        w = jax.random.uniform(kw, (cin, cout), jnp.float32, -bound, bound)
    else:
        w = jax.random.uniform(kw, (k, k, cin, cout), jnp.float32, -bound, bound)
    b = jax.random.uniform(kb, (cout,), jnp.float32, -bound, bound)
    return w, b


def init_bn(key, c):
    k1, k2, k3, k4 = jax.random.split(key, 4)
    return (jax.random.uniform(k1, (c,), jnp.float32, 0.5, 1.5),
            jax.random.uniform(k2, (c,), jnp.float32, -0.5, 0.5),
            jax.random.uniform(k3, (c,), jnp.float32, -0.5, 0.5),
            jax.random.uniform(k4, (c,), jnp.float32, 0.5, 1.5))


def init_inception_params(key, in_planes, n1x1, n3x3red, n3x3, n5x5red, n5x5,
                          pool_planes):
    keys = jax.random.split(key, 20)
    p = {}
    p["b1_w"], p["b1_b"] = init_conv(keys[0], in_planes, n1x1, 1)
    p["b1_bn"] = init_bn(keys[1], n1x1)
    p["b2_w1"], p["b2_b1"] = init_conv(keys[2], in_planes, n3x3red, 1)
    p["b2_bn1"] = init_bn(keys[3], n3x3red)
    p["b2_w2"], p["b2_b2"] = init_conv(keys[4], n3x3red, n3x3, 3)
    p["b2_bn2"] = init_bn(keys[5], n3x3)
    p["b3_w1"], p["b3_b1"] = init_conv(keys[6], in_planes, n5x5red, 1)
    p["b3_bn1"] = init_bn(keys[7], n5x5red)
    p["b3_w2"], p["b3_b2"] = init_conv(keys[8], n5x5red, n5x5, 3)
    p["b3_bn2"] = init_bn(keys[9], n5x5)
    p["b3_w3"], p["b3_b3"] = init_conv(keys[10], n5x5, n5x5, 3)
    p["b3_bn3"] = init_bn(keys[11], n5x5)
    p["b4_w"], p["b4_b"] = init_conv(keys[12], in_planes, pool_planes, 1)
    p["b4_bn"] = init_bn(keys[13], pool_planes)
    return p


# ---------------------------------- main --------------------------------------

if __name__ == "__main__":
    key = jax.random.PRNGKey(0)
    k_x, k_p = jax.random.split(key)

    # Inception(in_planes=4, n1x1=8, n3x3red=4, n3x3=8, n5x5red=4, n5x5=8, pool=8)
    in_planes = 4
    cfg = (8, 4, 8, 4, 8, 8)   # n1x1, n3x3red, n3x3, n5x5red, n5x5, pool_planes
    x = jax.random.normal(k_x, (2, in_planes, 16, 16), jnp.float32)   # NCHW
    params = init_inception_params(k_p, in_planes, *cfg)

    fwd = jax.jit(functools.partial(inception_forward, cfg=cfg))
    out = jax.block_until_ready(fwd(x, params))

    ctot = cfg[0] + cfg[2] + cfg[4] + cfg[5]
    assert out.shape == (2, ctot, 16, 16), out.shape

    # correctness check against an independent lax.conv / reduce_window reference
    ref = jax.block_until_ready(ref_inception(x, params))
    err = float(jnp.max(jnp.abs(out - ref)))
    assert jnp.allclose(out, ref, rtol=5e-3, atol=5e-3), err

    print("KERNEL_OK")
</pallas_src>

<mosaic_0001>
module attributes {stable_mosaic.version = 11 : i64} {
  func.func @kernel(%arg0: i32, %arg1: memref<1x4x256xbf16, #tpu.memory_space<vmem>>, %arg2: memref<9x256x256xbf16, #tpu.memory_space<vmem>>, %arg3: memref<9x1x256xf32, #tpu.memory_space<vmem>>, %arg4: memref<16x4xbf16, #tpu.memory_space<vmem>>, %arg5: memref<16x1xf32, #tpu.memory_space<vmem>>, %arg6: memref<9x16x16xbf16, #tpu.memory_space<vmem>>, %arg7: memref<16x1xf32, #tpu.memory_space<vmem>>, %arg8: memref<9x8x8xbf16, #tpu.memory_space<vmem>>, %arg9: memref<8x1xf32, #tpu.memory_space<vmem>>, %arg10: memref<8x4xbf16, #tpu.memory_space<vmem>>, %arg11: memref<8x1xf32, #tpu.memory_space<vmem>>, %arg12: memref<1x32x256xf32, #tpu.memory_space<vmem>>) attributes {dimension_semantics = [#tpu.dimension_semantics<parallel>], iteration_bounds = array<i64: 2>, scalar_prefetch = 0 : i64, scratch_operands = 0 : i64, tpu.core_type = #tpu.core_type<tc>, window_params = [{transform_indices = @transform_0, window_bounds = array<i64: 1, 4, 256>}, {pipeline_mode = #tpu.pipeline_mode<synchronous>, transform_indices = @transform_1, window_bounds = array<i64: 9, 256, 256>}, {pipeline_mode = #tpu.pipeline_mode<synchronous>, transform_indices = @transform_2, window_bounds = array<i64: 9, 1, 256>}, {pipeline_mode = #tpu.pipeline_mode<synchronous>, transform_indices = @transform_3, window_bounds = array<i64: 16, 4>}, {pipeline_mode = #tpu.pipeline_mode<synchronous>, transform_indices = @transform_4, window_bounds = array<i64: 16, 1>}, {pipeline_mode = #tpu.pipeline_mode<synchronous>, transform_indices = @transform_5, window_bounds = array<i64: 9, 16, 16>}, {pipeline_mode = #tpu.pipeline_mode<synchronous>, transform_indices = @transform_6, window_bounds = array<i64: 16, 1>}, {pipeline_mode = #tpu.pipeline_mode<synchronous>, transform_indices = @transform_7, window_bounds = array<i64: 9, 8, 8>}, {pipeline_mode = #tpu.pipeline_mode<synchronous>, transform_indices = @transform_8, window_bounds = array<i64: 8, 1>}, {pipeline_mode = #tpu.pipeline_mode<synchronous>, transform_indices = @transform_9, window_bounds = array<i64: 8, 4>}, {pipeline_mode = #tpu.pipeline_mode<synchronous>, transform_indices = @transform_10, window_bounds = array<i64: 8, 1>}, {transform_indices = @transform_11, window_bounds = array<i64: 1, 32, 256>}]} {
    %c0 = arith.constant 0 : index
    %c0_0 = arith.constant 0 : index
    %c0_1 = arith.constant 0 : index
    %0 = vector.load %arg1[%c0, %c0_0, %c0_1] : memref<1x4x256xbf16, #tpu.memory_space<vmem>>, vector<1x4x256xbf16>
    %1 = vector.shape_cast %0 : vector<1x4x256xbf16> to vector<4x256xbf16>
    %c0_2 = arith.constant 0 : index
    %c0_3 = arith.constant 0 : index
    %2 = vector.load %arg4[%c0_2, %c0_3] : memref<16x4xbf16, #tpu.memory_space<vmem>>, vector<16x4xbf16>
    %cst = arith.constant dense<0.000000e+00> : vector<16x256xf32>
    %3 = tpu.matmul %2, %1, %cst {dimension_numbers = #tpu.dot_dimension_numbers<[1], [0], [0], [1], [0, 0, 1, 1], [], []>} : vector<16x4xbf16>, vector<4x256xbf16>, vector<16x256xf32> -> vector<16x256xf32>
    %c0_4 = arith.constant 0 : index
    %c0_5 = arith.constant 0 : index
    %4 = vector.load %arg5[%c0_4, %c0_5] : memref<16x1xf32, #tpu.memory_space<vmem>>, vector<16x1xf32>
    %5 = vector.broadcast %4 : vector<16x1xf32> to vector<16x256xf32>
    %6 = arith.addf %3, %5 : vector<16x256xf32>
    %cst_6 = arith.constant 0.000000e+00 : f32
    %7 = vector.broadcast %cst_6 : f32 to vector<16x256xf32>
    %8 = arith.maximumf %6, %7 : vector<16x256xf32>
    %9 = arith.truncf %8 : vector<16x256xf32> to vector<16x256xbf16>
    %cst_7 = arith.constant 0.000000e+00 : f32
    %10 = vector.broadcast %cst_7 : f32 to vector<16x256xf32>
    %c0_8 = arith.constant 0 : index
    %c0_9 = arith.constant 0 : index
    %c0_10 = arith.constant 0 : index
    %11 = vector.load %arg2[%c0_8, %c0_9, %c0_10] : memref<9x256x256xbf16, #tpu.memory_space<vmem>>, vector<1x256x256xbf16>
    %12 = vector.shape_cast %11 : vector<1x256x256xbf16> to vector<256x256xbf16>
    %cst_11 = arith.constant dense<0.000000e+00> : vector<16x256xf32>
    %13 = tpu.matmul %9, %12, %cst_11 {dimension_numbers = #tpu.dot_dimension_numbers<[1], [0], [0], [1], [0, 0, 1, 1], [], []>} : vector<16x256xbf16>, vector<256x256xbf16>, vector<16x256xf32> -> vector<16x256xf32>
    %14 = arith.truncf %13 : vector<16x256xf32> to vector<16x256xbf16>
    %c0_12 = arith.constant 0 : index
    %c0_13 = arith.constant 0 : index
    %c0_14 = arith.constant 0 : index
    %15 = vector.load %arg6[%c0_12, %c0_13, %c0_14] : memref<9x16x16xbf16, #tpu.memory_space<vmem>>, vector<1x16x16xbf16>
    %16 = vector.shape_cast %15 : vector<1x16x16xbf16> to vector<16x16xbf16>
    %cst_15 = arith.constant dense<0.000000e+00> : vector<16x256xf32>
    %17 = tpu.matmul %16, %14, %cst_15 {dimension_numbers = #tpu.dot_dimension_numbers<[1], [0], [0], [1], [0, 0, 1, 1], [], []>} : vector<16x16xbf16>, vector<16x256xbf16>, vector<16x256xf32> -> vector<16x256xf32>
    %18 = arith.addf %10, %17 : vector<16x256xf32>
    %cst_16 = arith.constant dense<0.000000e+00> : vector<4x256xf32>
    %19 = tpu.matmul %1, %12, %cst_16 {dimension_numbers = #tpu.dot_dimension_numbers<[1], [0], [0], [1], [0, 0, 1, 1], [], []>} : vector<4x256xbf16>, vector<256x256xbf16>, vector<4x256xf32> -> vector<4x256xf32>
    %c0_17 = arith.constant 0 : index
    %c0_18 = arith.constant 0 : index
    %c0_19 = arith.constant 0 : index
    %20 = vector.load %arg3[%c0_17, %c0_18, %c0_19] : memref<9x1x256xf32, #tpu.memory_space<vmem>>, vector<1x1x256xf32>
    %21 = vector.shape_cast %20 : vector<1x1x256xf32> to vector<1x256xf32>
    %22 = vector.broadcast %21 : vector<1x256xf32> to vector<4x256xf32>
    %23 = arith.addf %19, %22 : vector<4x256xf32>
    %c1 = arith.constant 1 : index
    %c0_20 = arith.constant 0 : index
    %c0_21 = arith.constant 0 : index
    %24 = vector.load %arg2[%c1, %c0_20, %c0_21] : memref<9x256x256xbf16, #tpu.memory_space<vmem>>, vector<1x256x256xbf16>
    %25 = vector.shape_cast %24 : vector<1x256x256xbf16> to vector<256x256xbf16>
    %cst_22 = arith.constant dense<0.000000e+00> : vector<16x256xf32>
    %26 = tpu.matmul %9, %25, %cst_22 {dimension_numbers = #tpu.dot_dimension_numbers<[1], [0], [0], [1], [0, 0, 1, 1], [], []>} : vector<16x256xbf16>, vector<256x256xbf16>, vector<16x256xf32> -> vector<16x256xf32>
    %27 = arith.truncf %26 : vector<16x256xf32> to vector<16x256xbf16>
    %c1_23 = arith.constant 1 : index
    %c0_24 = arith.constant 0 : index
    %c0_25 = arith.constant 0 : index
    %28 = vector.load %arg6[%c1_23, %c0_24, %c0_25] : memref<9x16x16xbf16, #tpu.memory_space<vmem>>, vector<1x16x16xbf16>
    %29 = vector.shape_cast %28 : vector<1x16x16xbf16> to vector<16x16xbf16>
    %cst_26 = arith.constant dense<0.000000e+00> : vector<16x256xf32>
    %30 = tpu.matmul %29, %27, %cst_26 {dimension_numbers = #tpu.dot_dimension_numbers<[1], [0], [0], [1], [0, 0, 1, 1], [], []>} : vector<16x16xbf16>, vector<16x256xbf16>, vector<16x256xf32> -> vector<16x256xf32>
    %31 = arith.addf %18, %30 : vector<16x256xf32>
    %cst_27 = arith.constant dense<0.000000e+00> : vector<4x256xf32>
    %32 = tpu.matmul %1, %25, %cst_27 {dimension_numbers = #tpu.dot_dimension_numbers<[1], [0], [0], [1], [0, 0, 1, 1], [], []>} : vector<4x256xbf16>, vector<256x256xbf16>, vector<4x256xf32> -> vector<4x256xf32>
    %c1_28 = arith.constant 1 : index
    %c0_29 = arith.constant 0 : index
    %c0_30 = arith.constant 0 : index
    %33 = vector.load %arg3[%c1_28, %c0_29, %c0_30] : memref<9x1x256xf32, #tpu.memory_space<vmem>>, vector<1x1x256xf32>
    %34 = vector.shape_cast %33 : vector<1x1x256xf32> to vector<1x256xf32>
    %35 = vector.broadcast %34 : vector<1x256xf32> to vector<4x256xf32>
    %36 = arith.addf %32, %35 : vector<4x256xf32>
    %37 = arith.maximumf %23, %36 : vector<4x256xf32>
    %c2 = arith.constant 2 : index
    %c0_31 = arith.constant 0 : index
    %c0_32 = arith.constant 0 : index
    %38 = vector.load %arg2[%c2, %c0_31, %c0_32] : memref<9x256x256xbf16, #tpu.memory_space<vmem>>, vector<1x256x256xbf16>
    %39 = vector.shape_cast %38 : vector<1x256x256xbf16> to vector<256x256xbf16>
    %cst_33 = arith.constant dense<0.000000e+00> : vector<16x256xf32>
    %40 = tpu.matmul %9, %39, %cst_33 {dimension_numbers = #tpu.dot_dimension_numbers<[1], [0], [0], [1], [0, 0, 1, 1], [], []>} : vector<16x256xbf16>, vector<256x256xbf16>, vector<16x256xf32> -> vector<16x256xf32>
    %41 = arith.truncf %40 : vector<16x256xf32> to vector<16x256xbf16>
    %c2_34 = arith.constant 2 : index
    %c0_35 = arith.constant 0 : index
    %c0_36 = arith.constant 0 : index
    %42 = vector.load %arg6[%c2_34, %c0_35, %c0_36] : memref<9x16x16xbf16, #tpu.memory_space<vmem>>, vector<1x16x16xbf16>
    %43 = vector.shape_cast %42 : vector<1x16x16xbf16> to vector<16x16xbf16>
    %cst_37 = arith.constant dense<0.000000e+00> : vector<16x256xf32>
    %44 = tpu.matmul %43, %41, %cst_37 {dimension_numbers = #tpu.dot_dimension_numbers<[1], [0], [0], [1], [0, 0, 1, 1], [], []>} : vector<16x16xbf16>, vector<16x256xbf16>, vector<16x256xf32> -> vector<16x256xf32>
    %45 = arith.addf %31, %44 : vector<16x256xf32>
    %cst_38 = arith.constant dense<0.000000e+00> : vector<4x256xf32>
    %46 = tpu.matmul %1, %39, %cst_38 {dimension_numbers = #tpu.dot_dimension_numbers<[1], [0], [0], [1], [0, 0, 1, 1], [], []>} : vector<4x256xbf16>, vector<256x256xbf16>, vector<4x256xf32> -> vector<4x256xf32>
    %c2_39 = arith.constant 2 : index
    %c0_40 = arith.constant 0 : index
    %c0_41 = arith.constant 0 : index
    %47 = vector.load %arg3[%c2_39, %c0_40, %c0_41] : memref<9x1x256xf32, #tpu.memory_space<vmem>>, vector<1x1x256xf32>
    %48 = vector.shape_cast %47 : vector<1x1x256xf32> to vector<1x256xf32>
    %49 = vector.broadcast %48 : vector<1x256xf32> to vector<4x256xf32>
    %50 = arith.addf %46, %49 : vector<4x256xf32>
    %51 = arith.maximumf %37, %50 : vector<4x256xf32>
    %c3 = arith.constant 3 : index
    %c0_42 = arith.constant 0 : index
    %c0_43 = arith.constant 0 : index
    %52 = vector.load %arg2[%c3, %c0_42, %c0_43] : memref<9x256x256xbf16, #tpu.memory_space<vmem>>, vector<1x256x256xbf16>
    %53 = vector.shape_cast %52 : vector<1x256x256xbf16> to vector<256x256xbf16>
    %cst_44 = arith.constant dense<0.000000e+00> : vector<16x256xf32>
    %54 = tpu.matmul %9, %53, %cst_44 {dimension_numbers = #tpu.dot_dimension_numbers<[1], [0], [0], [1], [0, 0, 1, 1], [], []>} : vector<16x256xbf16>, vector<256x256xbf16>, vector<16x256xf32> -> vector<16x256xf32>
    %55 = arith.truncf %54 : vector<16x256xf32> to vector<16x256xbf16>
    %c3_45 = arith.constant 3 : index
    %c0_46 = arith.constant 0 : index
    %c0_47 = arith.constant 0 : index
    %56 = vector.load %arg6[%c3_45, %c0_46, %c0_47] : memref<9x16x16xbf16, #tpu.memory_space<vmem>>, vector<1x16x16xbf16>
    %57 = vector.shape_cast %56 : vector<1x16x16xbf16> to vector<16x16xbf16>
    %cst_48 = arith.constant dense<0.000000e+00> : vector<16x256xf32>
    %58 = tpu.matmul %57, %55, %cst_48 {dimension_numbers = #tpu.dot_dimension_numbers<[1], [0], [0], [1], [0, 0, 1, 1], [], []>} : vector<16x16xbf16>, vector<16x256xbf16>, vector<16x256xf32> -> vector<16x256xf32>
    %59 = arith.addf %45, %58 : vector<16x256xf32>
    %cst_49 = arith.constant dense<0.000000e+00> : vector<4x256xf32>
    %60 = tpu.matmul %1, %53, %cst_49 {dimension_numbers = #tpu.dot_dimension_numbers<[1], [0], [0], [1], [0, 0, 1, 1], [], []>} : vector<4x256xbf16>, vector<256x256xbf16>, vector<4x256xf32> -> vector<4x256xf32>
    %c3_50 = arith.constant 3 : index
    %c0_51 = arith.constant 0 : index
    %c0_52 = arith.constant 0 : index
    %61 = vector.load %arg3[%c3_50, %c0_51, %c0_52] : memref<9x1x256xf32, #tpu.memory_space<vmem>>, vector<1x1x256xf32>
    %62 = vector.shape_cast %61 : vector<1x1x256xf32> to vector<1x256xf32>
    %63 = vector.broadcast %62 : vector<1x256xf32> to vector<4x256xf32>
    %64 = arith.addf %60, %63 : vector<4x256xf32>
    %65 = arith.maximumf %51, %64 : vector<4x256xf32>
    %c4 = arith.constant 4 : index
    %c0_53 = arith.constant 0 : index
    %c0_54 = arith.constant 0 : index
    %66 = vector.load %arg2[%c4, %c0_53, %c0_54] : memref<9x256x256xbf16, #tpu.memory_space<vmem>>, vector<1x256x256xbf16>
    %67 = vector.shape_cast %66 : vector<1x256x256xbf16> to vector<256x256xbf16>
    %cst_55 = arith.constant dense<0.000000e+00> : vector<16x256xf32>
    %68 = tpu.matmul %9, %67, %cst_55 {dimension_numbers = #tpu.dot_dimension_numbers<[1], [0], [0], [1], [0, 0, 1, 1], [], []>} : vector<16x256xbf16>, vector<256x256xbf16>, vector<16x256xf32> -> vector<16x256xf32>
    %69 = arith.truncf %68 : vector<16x256xf32> to vector<16x256xbf16>
    %c4_56 = arith.constant 4 : index
    %c0_57 = arith.constant 0 : index
    %c0_58 = arith.constant 0 : index
    %70 = vector.load %arg6[%c4_56, %c0_57, %c0_58] : memref<9x16x16xbf16, #tpu.memory_space<vmem>>, vector<1x16x16xbf16>
    %71 = vector.shape_cast %70 : vector<1x16x16xbf16> to vector<16x16xbf16>
    %cst_59 = arith.constant dense<0.000000e+00> : vector<16x256xf32>
    %72 = tpu.matmul %71, %69, %cst_59 {dimension_numbers = #tpu.dot_dimension_numbers<[1], [0], [0], [1], [0, 0, 1, 1], [], []>} : vector<16x16xbf16>, vector<16x256xbf16>, vector<16x256xf32> -> vector<16x256xf32>
    %73 = arith.addf %59, %72 : vector<16x256xf32>
    %cst_60 = arith.constant dense<0.000000e+00> : vector<4x256xf32>
    %74 = tpu.matmul %1, %67, %cst_60 {dimension_numbers = #tpu.dot_dimension_numbers<[1], [0], [0], [1], [0, 0, 1, 1], [], []>} : vector<4x256xbf16>, vector<256x256xbf16>, vector<4x256xf32> -> vector<4x256xf32>
    %c4_61 = arith.constant 4 : index
    %c0_62 = arith.constant 0 : index
    %c0_63 = arith.constant 0 : index
    %75 = vector.load %arg3[%c4_61, %c0_62, %c0_63] : memref<9x1x256xf32, #tpu.memory_space<vmem>>, vector<1x1x256xf32>
    %76 = vector.shape_cast %75 : vector<1x1x256xf32> to vector<1x256xf32>
    %77 = vector.broadcast %76 : vector<1x256xf32> to vector<4x256xf32>
    %78 = arith.addf %74, %77 : vector<4x256xf32>
    %79 = arith.maximumf %65, %78 : vector<4x256xf32>
    %c5 = arith.constant 5 : index
    %c0_64 = arith.constant 0 : index
    %c0_65 = arith.constant 0 : index
    %80 = vector.load %arg2[%c5, %c0_64, %c0_65] : memref<9x256x256xbf16, #tpu.memory_space<vmem>>, vector<1x256x256xbf16>
    %81 = vector.shape_cast %80 : vector<1x256x256xbf16> to vector<256x256xbf16>
    %cst_66 = arith.constant dense<0.000000e+00> : vector<16x256xf32>
    %82 = tpu.matmul %9, %81, %cst_66 {dimension_numbers = #tpu.dot_dimension_numbers<[1], [0], [0], [1], [0, 0, 1, 1], [], []>} : vector<16x256xbf16>, vector<256x256xbf16>, vector<16x256xf32> -> vector<16x256xf32>
    %83 = arith.truncf %82 : vector<16x256xf32> to vector<16x256xbf16>
    %c5_67 = arith.constant 5 : index
    %c0_68 = arith.constant 0 : index
    %c0_69 = arith.constant 0 : index
    %84 = vector.load %arg6[%c5_67, %c0_68, %c0_69] : memref<9x16x16xbf16, #tpu.memory_space<vmem>>, vector<1x16x16xbf16>
    %85 = vector.shape_cast %84 : vector<1x16x16xbf16> to vector<16x16xbf16>
    %cst_70 = arith.constant dense<0.000000e+00> : vector<16x256xf32>
    %86 = tpu.matmul %85, %83, %cst_70 {dimension_numbers = #tpu.dot_dimension_numbers<[1], [0], [0], [1], [0, 0, 1, 1], [], []>} : vector<16x16xbf16>, vector<16x256xbf16>, vector<16x256xf32> -> vector<16x256xf32>
    %87 = arith.addf %73, %86 : vector<16x256xf32>
    %cst_71 = arith.constant dense<0.000000e+00> : vector<4x256xf32>
    %88 = tpu.matmul %1, %81, %cst_71 {dimension_numbers = #tpu.dot_dimension_numbers<[1], [0], [0], [1], [0, 0, 1, 1], [], []>} : vector<4x256xbf16>, vector<256x256xbf16>, vector<4x256xf32> -> vector<4x256xf32>
    %c5_72 = arith.constant 5 : index
    %c0_73 = arith.constant 0 : index
    %c0_74 = arith.constant 0 : index
    %89 = vector.load %arg3[%c5_72, %c0_73, %c0_74] : memref<9x1x256xf32, #tpu.memory_space<vmem>>, vector<1x1x256xf32>
    %90 = vector.shape_cast %89 : vector<1x1x256xf32> to vector<1x256xf32>
    %91 = vector.broadcast %90 : vector<1x256xf32> to vector<4x256xf32>
    %92 = arith.addf %88, %91 : vector<4x256xf32>
    %93 = arith.maximumf %79, %92 : vector<4x256xf32>
    %c6 = arith.constant 6 : index
    %c0_75 = arith.constant 0 : index
    %c0_76 = arith.constant 0 : index
    %94 = vector.load %arg2[%c6, %c0_75, %c0_76] : memref<9x256x256xbf16, #tpu.memory_space<vmem>>, vector<1x256x256xbf16>
    %95 = vector.shape_cast %94 : vector<1x256x256xbf16> to vector<256x256xbf16>
    %cst_77 = arith.constant dense<0.000000e+00> : vector<16x256xf32>
    %96 = tpu.matmul %9, %95, %cst_77 {dimension_numbers = #tpu.dot_dimension_numbers<[1], [0], [0], [1], [0, 0, 1, 1], [], []>} : vector<16x256xbf16>, vector<256x256xbf16>, vector<16x256xf32> -> vector<16x256xf32>
    %97 = arith.truncf %96 : vector<16x256xf32> to vector<16x256xbf16>
    %c6_78 = arith.constant 6 : index
    %c0_79 = arith.constant 0 : index
    %c0_80 = arith.constant 0 : index
    %98 = vector.load %arg6[%c6_78, %c0_79, %c0_80] : memref<9x16x16xbf16, #tpu.memory_space<vmem>>, vector<1x16x16xbf16>
    %99 = vector.shape_cast %98 : vector<1x16x16xbf16> to vector<16x16xbf16>
    %cst_81 = arith.constant dense<0.000000e+00> : vector<16x256xf32>
    %100 = tpu.matmul %99, %97, %cst_81 {dimension_numbers = #tpu.dot_dimension_numbers<[1], [0], [0], [1], [0, 0, 1, 1], [], []>} : vector<16x16xbf16>, vector<16x256xbf16>, vector<16x256xf32> -> vector<16x256xf32>
    %101 = arith.addf %87, %100 : vector<16x256xf32>
    %cst_82 = arith.constant dense<0.000000e+00> : vector<4x256xf32>
    %102 = tpu.matmul %1, %95, %cst_82 {dimension_numbers = #tpu.dot_dimension_numbers<[1], [0], [0], [1], [0, 0, 1, 1], [], []>} : vector<4x256xbf16>, vector<256x256xbf16>, vector<4x256xf32> -> vector<4x256xf32>
    %c6_83 = arith.constant 6 : index
    %c0_84 = arith.constant 0 : index
    %c0_85 = arith.constant 0 : index
    %103 = vector.load %arg3[%c6_83, %c0_84, %c0_85] : memref<9x1x256xf32, #tpu.memory_space<vmem>>, vector<1x1x256xf32>
    %104 = vector.shape_cast %103 : vector<1x1x256xf32> to vector<1x256xf32>
    %105 = vector.broadcast %104 : vector<1x256xf32> to vector<4x256xf32>
    %106 = arith.addf %102, %105 : vector<4x256xf32>
    %107 = arith.maximumf %93, %106 : vector<4x256xf32>
    %c7 = arith.constant 7 : index
    %c0_86 = arith.constant 0 : index
    %c0_87 = arith.constant 0 : index
    %108 = vector.load %arg2[%c7, %c0_86, %c0_87] : memref<9x256x256xbf16, #tpu.memory_space<vmem>>, vector<1x256x256xbf16>
    %109 = vector.shape_cast %108 : vector<1x256x256xbf16> to vector<256x256xbf16>
    %cst_88 = arith.constant dense<0.000000e+00> : vector<16x256xf32>
    %110 = tpu.matmul %9, %109, %cst_88 {dimension_numbers = #tpu.dot_dimension_numbers<[1], [0], [0], [1], [0, 0, 1, 1], [], []>} : vector<16x256xbf16>, vector<256x256xbf16>, vector<16x256xf32> -> vector<16x256xf32>
    %111 = arith.truncf %110 : vector<16x256xf32> to vector<16x256xbf16>
    %c7_89 = arith.constant 7 : index
    %c0_90 = arith.constant 0 : index
    %c0_91 = arith.constant 0 : index
    %112 = vector.load %arg6[%c7_89, %c0_90, %c0_91] : memref<9x16x16xbf16, #tpu.memory_space<vmem>>, vector<1x16x16xbf16>
    %113 = vector.shape_cast %112 : vector<1x16x16xbf16> to vector<16x16xbf16>
    %cst_92 = arith.constant dense<0.000000e+00> : vector<16x256xf32>
    %114 = tpu.matmul %113, %111, %cst_92 {dimension_numbers = #tpu.dot_dimension_numbers<[1], [0], [0], [1], [0, 0, 1, 1], [], []>} : vector<16x16xbf16>, vector<16x256xbf16>, vector<16x256xf32> -> vector<16x256xf32>
    %115 = arith.addf %101, %114 : vector<16x256xf32>
    %cst_93 = arith.constant dense<0.000000e+00> : vector<4x256xf32>
    %116 = tpu.matmul %1, %109, %cst_93 {dimension_numbers = #tpu.dot_dimension_numbers<[1], [0], [0], [1], [0, 0, 1, 1], [], []>} : vector<4x256xbf16>, vector<256x256xbf16>, vector<4x256xf32> -> vector<4x256xf32>
    %c7_94 = arith.constant 7 : index
    %c0_95 = arith.constant 0 : index
    %c0_96 = arith.constant 0 : index
    %117 = vector.load %arg3[%c7_94, %c0_95, %c0_96] : memref<9x1x256xf32, #tpu.memory_space<vmem>>, vector<1x1x256xf32>
    %118 = vector.shape_cast %117 : vector<1x1x256xf32> to vector<1x256xf32>
    %119 = vector.broadcast %118 : vector<1x256xf32> to vector<4x256xf32>
    %120 = arith.addf %116, %119 : vector<4x256xf32>
    %121 = arith.maximumf %107, %120 : vector<4x256xf32>
    %c8 = arith.constant 8 : index
    %c0_97 = arith.constant 0 : index
    %c0_98 = arith.constant 0 : index
    %122 = vector.load %arg2[%c8, %c0_97, %c0_98] : memref<9x256x256xbf16, #tpu.memory_space<vmem>>, vector<1x256x256xbf16>
    %123 = vector.shape_cast %122 : vector<1x256x256xbf16> to vector<256x256xbf16>
    %cst_99 = arith.constant dense<0.000000e+00> : vector<16x256xf32>
    %124 = tpu.matmul %9, %123, %cst_99 {dimension_numbers = #tpu.dot_dimension_numbers<[1], [0], [0], [1], [0, 0, 1, 1], [], []>} : vector<16x256xbf16>, vector<256x256xbf16>, vector<16x256xf32> -> vector<16x256xf32>
    %125 = arith.truncf %124 : vector<16x256xf32> to vector<16x256xbf16>
    %c8_100 = arith.constant 8 : index
    %c0_101 = arith.constant 0 : index
    %c0_102 = arith.constant 0 : index
    %126 = vector.load %arg6[%c8_100, %c0_101, %c0_102] : memref<9x16x16xbf16, #tpu.memory_space<vmem>>, vector<1x16x16xbf16>
    %127 = vector.shape_cast %126 : vector<1x16x16xbf16> to vector<16x16xbf16>
    %cst_103 = arith.constant dense<0.000000e+00> : vector<16x256xf32>
    %128 = tpu.matmul %127, %125, %cst_103 {dimension_numbers = #tpu.dot_dimension_numbers<[1], [0], [0], [1], [0, 0, 1, 1], [], []>} : vector<16x16xbf16>, vector<16x256xbf16>, vector<16x256xf32> -> vector<16x256xf32>
    %129 = arith.addf %115, %128 : vector<16x256xf32>
    %cst_104 = arith.constant dense<0.000000e+00> : vector<4x256xf32>
    %130 = tpu.matmul %1, %123, %cst_104 {dimension_numbers = #tpu.dot_dimension_numbers<[1], [0], [0], [1], [0, 0, 1, 1], [], []>} : vector<4x256xbf16>, vector<256x256xbf16>, vector<4x256xf32> -> vector<4x256xf32>
    %c8_105 = arith.constant 8 : index
    %c0_106 = arith.constant 0 : index
    %c0_107 = arith.constant 0 : index
    %131 = vector.load %arg3[%c8_105, %c0_106, %c0_107] : memref<9x1x256xf32, #tpu.memory_space<vmem>>, vector<1x1x256xf32>
    %132 = vector.shape_cast %131 : vector<1x1x256xf32> to vector<1x256xf32>
    %133 = vector.broadcast %132 : vector<1x256xf32> to vector<4x256xf32>
    %134 = arith.addf %130, %133 : vector<4x256xf32>
    %135 = arith.maximumf %121, %134 : vector<4x256xf32>
    %c0_108 = arith.constant 0 : index
    %c0_109 = arith.constant 0 : index
    %136 = vector.load %arg7[%c0_108, %c0_109] : memref<16x1xf32, #tpu.memory_space<vmem>>, vector<16x1xf32>
    %137 = vector.broadcast %136 : vector<16x1xf32> to vector<16x256xf32>
    %138 = arith.addf %129, %137 : vector<16x256xf32>
    %cst_110 = arith.constant 0.000000e+00 : f32
    %139 = vector.broadcast %cst_110 : f32 to vector<16x256xf32>
    %140 = arith.maximumf %138, %139 : vector<16x256xf32>
    %141 = vector.extract_strided_slice %140 {offsets = [0, 0], sizes = [8, 256], strides = [1, 1]} : vector<16x256xf32> to vector<8x256xf32>
    %142 = vector.extract_strided_slice %140 {offsets = [8, 0], sizes = [8, 256], strides = [1, 1]} : vector<16x256xf32> to vector<8x256xf32>
    %143 = arith.truncf %142 : vector<8x256xf32> to vector<8x256xbf16>
    %cst_111 = arith.constant 0.000000e+00 : f32
    %144 = vector.broadcast %cst_111 : f32 to vector<8x256xf32>
    %c0_112 = arith.constant 0 : index
    %c0_113 = arith.constant 0 : index
    %c0_114 = arith.constant 0 : index
    %145 = vector.load %arg2[%c0_112, %c0_113, %c0_114] : memref<9x256x256xbf16, #tpu.memory_space<vmem>>, vector<1x256x256xbf16>
    %146 = vector.shape_cast %145 : vector<1x256x256xbf16> to vector<256x256xbf16>
    %cst_115 = arith.constant dense<0.000000e+00> : vector<8x256xf32>
    %147 = tpu.matmul %143, %146, %cst_115 {dimension_numbers = #tpu.dot_dimension_numbers<[1], [0], [0], [1], [0, 0, 1, 1], [], []>} : vector<8x256xbf16>, vector<256x256xbf16>, vector<8x256xf32> -> vector<8x256xf32>
    %148 = arith.truncf %147 : vector<8x256xf32> to vector<8x256xbf16>
    %c0_116 = arith.constant 0 : index
    %c0_117 = arith.constant 0 : index
    %c0_118 = arith.constant 0 : index
    %149 = vector.load %arg8[%c0_116, %c0_117, %c0_118] : memref<9x8x8xbf16, #tpu.memory_space<vmem>>, vector<1x8x8xbf16>
    %150 = vector.shape_cast %149 : vector<1x8x8xbf16> to vector<8x8xbf16>
    %cst_119 = arith.constant dense<0.000000e+00> : vector<8x256xf32>
    %151 = tpu.matmul %150, %148, %cst_119 {dimension_numbers = #tpu.dot_dimension_numbers<[1], [0], [0], [1], [0, 0, 1, 1], [], []>} : vector<8x8xbf16>, vector<8x256xbf16>, vector<8x256xf32> -> vector<8x256xf32>
    %152 = arith.addf %144, %151 : vector<8x256xf32>
    %c1_120 = arith.constant 1 : index
    %c0_121 = arith.constant 0 : index
    %c0_122 = arith.constant 0 : index
    %153 = vector.load %arg2[%c1_120, %c0_121, %c0_122] : memref<9x256x256xbf16, #tpu.memory_space<vmem>>, vector<1x256x256xbf16>
    %154 = vector.shape_cast %153 : vector<1x256x256xbf16> to vector<256x256xbf16>
    %cst_123 = arith.constant dense<0.000000e+00> : vector<8x256xf32>
    %155 = tpu.matmul %143, %154, %cst_123 {dimension_numbers = #tpu.dot_dimension_numbers<[1], [0], [0], [1], [0, 0, 1, 1], [], []>} : vector<8x256xbf16>, vector<256x256xbf16>, vector<8x256xf32> -> vector<8x256xf32>
    %156 = arith.truncf %155 : vector<8x256xf32> to vector<8x256xbf16>
    %c1_124 = arith.constant 1 : index
    %c0_125 = arith.constant 0 : index
    %c0_126 = arith.constant 0 : index
    %157 = vector.load %arg8[%c1_124, %c0_125, %c0_126] : memref<9x8x8xbf16, #tpu.memory_space<vmem>>, vector<1x8x8xbf16>
    %158 = vector.shape_cast %157 : vector<1x8x8xbf16> to vector<8x8xbf16>
    %cst_127 = arith.constant dense<0.000000e+00> : vector<8x256xf32>
    %159 = tpu.matmul %158, %156, %cst_127 {dimension_numbers = #tpu.dot_dimension_numbers<[1], [0], [0], [1], [0, 0, 1, 1], [], []>} : vector<8x8xbf16>, vector<8x256xbf16>, vector<8x256xf32> -> vector<8x256xf32>
    %160 = arith.addf %152, %159 : vector<8x256xf32>
    %c2_128 = arith.constant 2 : index
    %c0_129 = arith.constant 0 : index
    %c0_130 = arith.constant 0 : index
    %161 = vector.load %arg2[%c2_128, %c0_129, %c0_130] : memref<9x256x256xbf16, #tpu.memory_space<vmem>>, vector<1x256x256xbf16>
    %162 = vector.shape_cast %161 : vector<1x256x256xbf16> to vector<256x256xbf16>
    %cst_131 = arith.constant dense<0.000000e+00> : vector<8x256xf32>
    %163 = tpu.matmul %143, %162, %cst_131 {dimension_numbers = #tpu.dot_dimension_numbers<[1], [0], [0], [1], [0, 0, 1, 1], [], []>} : vector<8x256xbf16>, vector<256x256xbf16>, vector<8x256xf32> -> vector<8x256xf32>
    %164 = arith.truncf %163 : vector<8x256xf32> to vector<8x256xbf16>
    %c2_132 = arith.constant 2 : index
    %c0_133 = arith.constant 0 : index
    %c0_134 = arith.constant 0 : index
    %165 = vector.load %arg8[%c2_132, %c0_133, %c0_134] : memref<9x8x8xbf16, #tpu.memory_space<vmem>>, vector<1x8x8xbf16>
    %166 = vector.shape_cast %165 : vector<1x8x8xbf16> to vector<8x8xbf16>
    %cst_135 = arith.constant dense<0.000000e+00> : vector<8x256xf32>
    %167 = tpu.matmul %166, %164, %cst_135 {dimension_numbers = #tpu.dot_dimension_numbers<[1], [0], [0], [1], [0, 0, 1, 1], [], []>} : vector<8x8xbf16>, vector<8x256xbf16>, vector<8x256xf32> -> vector<8x256xf32>
    %168 = arith.addf %160, %167 : vector<8x256xf32>
    %c3_136 = arith.constant 3 : index
    %c0_137 = arith.constant 0 : index
    %c0_138 = arith.constant 0 : index
    %169 = vector.load %arg2[%c3_136, %c0_137, %c0_138] : memref<9x256x256xbf16, #tpu.memory_space<vmem>>, vector<1x256x256xbf16>
    %170 = vector.shape_cast %169 : vector<1x256x256xbf16> to vector<256x256xbf16>
    %cst_139 = arith.constant dense<0.000000e+00> : vector<8x256xf32>
    %171 = tpu.matmul %143, %170, %cst_139 {dimension_numbers = #tpu.dot_dimension_numbers<[1], [0], [0], [1], [0, 0, 1, 1], [], []>} : vector<8x256xbf16>, vector<256x256xbf16>, vector<8x256xf32> -> vector<8x256xf32>
    %172 = arith.truncf %171 : vector<8x256xf32> to vector<8x256xbf16>
    %c3_140 = arith.constant 3 : index
    %c0_141 = arith.constant 0 : index
    %c0_142 = arith.constant 0 : index
    %173 = vector.load %arg8[%c3_140, %c0_141, %c0_142] : memref<9x8x8xbf16, #tpu.memory_space<vmem>>, vector<1x8x8xbf16>
    %174 = vector.shape_cast %173 : vector<1x8x8xbf16> to vector<8x8xbf16>
    %cst_143 = arith.constant dense<0.000000e+00> : vector<8x256xf32>
    %175 = tpu.matmul %174, %172, %cst_143 {dimension_numbers = #tpu.dot_dimension_numbers<[1], [0], [0], [1], [0, 0, 1, 1], [], []>} : vector<8x8xbf16>, vector<8x256xbf16>, vector<8x256xf32> -> vector<8x256xf32>
    %176 = arith.addf %168, %175 : vector<8x256xf32>
    %c4_144 = arith.constant 4 : index
    %c0_145 = arith.constant 0 : index
    %c0_146 = arith.constant 0 : index
    %177 = vector.load %arg2[%c4_144, %c0_145, %c0_146] : memref<9x256x256xbf16, #tpu.memory_space<vmem>>, vector<1x256x256xbf16>
    %178 = vector.shape_cast %177 : vector<1x256x256xbf16> to vector<256x256xbf16>
    %cst_147 = arith.constant dense<0.000000e+00> : vector<8x256xf32>
    %179 = tpu.matmul %143, %178, %cst_147 {dimension_numbers = #tpu.dot_dimension_numbers<[1], [0], [0], [1], [0, 0, 1, 1], [], []>} : vector<8x256xbf16>, vector<256x256xbf16>, vector<8x256xf32> -> vector<8x256xf32>
    %180 = arith.truncf %179 : vector<8x256xf32> to vector<8x256xbf16>
    %c4_148 = arith.constant 4 : index
    %c0_149 = arith.constant 0 : index
    %c0_150 = arith.constant 0 : index
    %181 = vector.load %arg8[%c4_148, %c0_149, %c0_150] : memref<9x8x8xbf16, #tpu.memory_space<vmem>>, vector<1x8x8xbf16>
    %182 = vector.shape_cast %181 : vector<1x8x8xbf16> to vector<8x8xbf16>
    %cst_151 = arith.constant dense<0.000000e+00> : vector<8x256xf32>
    %183 = tpu.matmul %182, %180, %cst_151 {dimension_numbers = #tpu.dot_dimension_numbers<[1], [0], [0], [1], [0, 0, 1, 1], [], []>} : vector<8x8xbf16>, vector<8x256xbf16>, vector<8x256xf32> -> vector<8x256xf32>
    %184 = arith.addf %176, %183 : vector<8x256xf32>
    %c5_152 = arith.constant 5 : index
    %c0_153 = arith.constant 0 : index
    %c0_154 = arith.constant 0 : index
    %185 = vector.load %arg2[%c5_152, %c0_153, %c0_154] : memref<9x256x256xbf16, #tpu.memory_space<vmem>>, vector<1x256x256xbf16>
    %186 = vector.shape_cast %185 : vector<1x256x256xbf16> to vector<256x256xbf16>
    %cst_155 = arith.constant dense<0.000000e+00> : vector<8x256xf32>
    %187 = tpu.matmul %143, %186, %cst_155 {dimension_numbers = #tpu.dot_dimension_numbers<[1], [0], [0], [1], [0, 0, 1, 1], [], []>} : vector<8x256xbf16>, vector<256x256xbf16>, vector<8x256xf32> -> vector<8x256xf32>
    %188 = arith.truncf %187 : vector<8x256xf32> to vector<8x256xbf16>
    %c5_156 = arith.constant 5 : index
    %c0_157 = arith.constant 0 : index
    %c0_158 = arith.constant 0 : index
    %189 = vector.load %arg8[%c5_156, %c0_157, %c0_158] : memref<9x8x8xbf16, #tpu.memory_space<vmem>>, vector<1x8x8xbf16>
    %190 = vector.shape_cast %189 : vector<1x8x8xbf16> to vector<8x8xbf16>
    %cst_159 = arith.constant dense<0.000000e+00> : vector<8x256xf32>
    %191 = tpu.matmul %190, %188, %cst_159 {dimension_numbers = #tpu.dot_dimension_numbers<[1], [0], [0], [1], [0, 0, 1, 1], [], []>} : vector<8x8xbf16>, vector<8x256xbf16>, vector<8x256xf32> -> vector<8x256xf32>
    %192 = arith.addf %184, %191 : vector<8x256xf32>
    %c6_160 = arith.constant 6 : index
    %c0_161 = arith.constant 0 : index
    %c0_162 = arith.constant 0 : index
    %193 = vector.load %arg2[%c6_160, %c0_161, %c0_162] : memref<9x256x256xbf16, #tpu.memory_space<vmem>>, vector<1x256x256xbf16>
    %194 = vector.shape_cast %193 : vector<1x256x256xbf16> to vector<256x256xbf16>
    %cst_163 = arith.constant dense<0.000000e+00> : vector<8x256xf32>
    %195 = tpu.matmul %143, %194, %cst_163 {dimension_numbers = #tpu.dot_dimension_numbers<[1], [0], [0], [1], [0, 0, 1, 1], [], []>} : vector<8x256xbf16>, vector<256x256xbf16>, vector<8x256xf32> -> vector<8x256xf32>
    %196 = arith.truncf %195 : vector<8x256xf32> to vector<8x256xbf16>
    %c6_164 = arith.constant 6 : index
    %c0_165 = arith.constant 0 : index
    %c0_166 = arith.constant 0 : index
    %197 = vector.load %arg8[%c6_164, %c0_165, %c0_166] : memref<9x8x8xbf16, #tpu.memory_space<vmem>>, vector<1x8x8xbf16>
    %198 = vector.shape_cast %197 : vector<1x8x8xbf16> to vector<8x8xbf16>
    %cst_167 = arith.constant dense<0.000000e+00> : vector<8x256xf32>
    %199 = tpu.matmul %198, %196, %cst_167 {dimension_numbers = #tpu.dot_dimension_numbers<[1], [0], [0], [1], [0, 0, 1, 1], [], []>} : vector<8x8xbf16>, vector<8x256xbf16>, vector<8x256xf32> -> vector<8x256xf32>
    %200 = arith.addf %192, %199 : vector<8x256xf32>
    %c7_168 = arith.constant 7 : index
    %c0_169 = arith.constant 0 : index
    %c0_170 = arith.constant 0 : index
    %201 = vector.load %arg2[%c7_168, %c0_169, %c0_170] : memref<9x256x256xbf16, #tpu.memory_space<vmem>>, vector<1x256x256xbf16>
    %202 = vector.shape_cast %201 : vector<1x256x256xbf16> to vector<256x256xbf16>
    %cst_171 = arith.constant dense<0.000000e+00> : vector<8x256xf32>
    %203 = tpu.matmul %143, %202, %cst_171 {dimension_numbers = #tpu.dot_dimension_numbers<[1], [0], [0], [1], [0, 0, 1, 1], [], []>} : vector<8x256xbf16>, vector<256x256xbf16>, vector<8x256xf32> -> vector<8x256xf32>
    %204 = arith.truncf %203 : vector<8x256xf32> to vector<8x256xbf16>
    %c7_172 = arith.constant 7 : index
    %c0_173 = arith.constant 0 : index
    %c0_174 = arith.constant 0 : index
    %205 = vector.load %arg8[%c7_172, %c0_173, %c0_174] : memref<9x8x8xbf16, #tpu.memory_space<vmem>>, vector<1x8x8xbf16>
    %206 = vector.shape_cast %205 : vector<1x8x8xbf16> to vector<8x8xbf16>
    %cst_175 = arith.constant dense<0.000000e+00> : vector<8x256xf32>
    %207 = tpu.matmul %206, %204, %cst_175 {dimension_numbers = #tpu.dot_dimension_numbers<[1], [0], [0], [1], [0, 0, 1, 1], [], []>} : vector<8x8xbf16>, vector<8x256xbf16>, vector<8x256xf32> -> vector<8x256xf32>
    %208 = arith.addf %200, %207 : vector<8x256xf32>
    %c8_176 = arith.constant 8 : index
    %c0_177 = arith.constant 0 : index
    %c0_178 = arith.constant 0 : index
    %209 = vector.load %arg2[%c8_176, %c0_177, %c0_178] : memref<9x256x256xbf16, #tpu.memory_space<vmem>>, vector<1x256x256xbf16>
    %210 = vector.shape_cast %209 : vector<1x256x256xbf16> to vector<256x256xbf16>
    %cst_179 = arith.constant dense<0.000000e+00> : vector<8x256xf32>
    %211 = tpu.matmul %143, %210, %cst_179 {dimension_numbers = #tpu.dot_dimension_numbers<[1], [0], [0], [1], [0, 0, 1, 1], [], []>} : vector<8x256xbf16>, vector<256x256xbf16>, vector<8x256xf32> -> vector<8x256xf32>
    %212 = arith.truncf %211 : vector<8x256xf32> to vector<8x256xbf16>
    %c8_180 = arith.constant 8 : index
    %c0_181 = arith.constant 0 : index
    %c0_182 = arith.constant 0 : index
    %213 = vector.load %arg8[%c8_180, %c0_181, %c0_182] : memref<9x8x8xbf16, #tpu.memory_space<vmem>>, vector<1x8x8xbf16>
    %214 = vector.shape_cast %213 : vector<1x8x8xbf16> to vector<8x8xbf16>
    %cst_183 = arith.constant dense<0.000000e+00> : vector<8x256xf32>
    %215 = tpu.matmul %214, %212, %cst_183 {dimension_numbers = #tpu.dot_dimension_numbers<[1], [0], [0], [1], [0, 0, 1, 1], [], []>} : vector<8x8xbf16>, vector<8x256xbf16>, vector<8x256xf32> -> vector<8x256xf32>
    %216 = arith.addf %208, %215 : vector<8x256xf32>
    %c0_184 = arith.constant 0 : index
    %c0_185 = arith.constant 0 : index
    %217 = vector.load %arg9[%c0_184, %c0_185] : memref<8x1xf32, #tpu.memory_space<vmem>>, vector<8x1xf32>
    %218 = vector.broadcast %217 : vector<8x1xf32> to vector<8x256xf32>
    %219 = arith.addf %216, %218 : vector<8x256xf32>
    %cst_186 = arith.constant 0.000000e+00 : f32
    %220 = vector.broadcast %cst_186 : f32 to vector<8x256xf32>
    %221 = arith.maximumf %219, %220 : vector<8x256xf32>
    %c0_187 = arith.constant 0 : index
    %c0_188 = arith.constant 0 : index
    %222 = vector.load %arg10[%c0_187, %c0_188] : memref<8x4xbf16, #tpu.memory_space<vmem>>, vector<8x4xbf16>
    %223 = arith.truncf %135 : vector<4x256xf32> to vector<4x256xbf16>
    %cst_189 = arith.constant dense<0.000000e+00> : vector<8x256xf32>
    %224 = tpu.matmul %222, %223, %cst_189 {dimension_numbers = #tpu.dot_dimension_numbers<[1], [0], [0], [1], [0, 0, 1, 1], [], []>} : vector<8x4xbf16>, vector<4x256xbf16>, vector<8x256xf32> -> vector<8x256xf32>
    %c0_190 = arith.constant 0 : index
    %c0_191 = arith.constant 0 : index
    %225 = vector.load %arg11[%c0_190, %c0_191] : memref<8x1xf32, #tpu.memory_space<vmem>>, vector<8x1xf32>
    %226 = vector.broadcast %225 : vector<8x1xf32> to vector<8x256xf32>
    %227 = arith.addf %224, %226 : vector<8x256xf32>
    %cst_192 = arith.constant 0.000000e+00 : f32
    %228 = vector.broadcast %cst_192 : f32 to vector<8x256xf32>
    %229 = arith.maximumf %227, %228 : vector<8x256xf32>
    %230 = vector.extract_strided_slice %8 {offsets = [0, 0], sizes = [8, 256], strides = [1, 1]} : vector<16x256xf32> to vector<8x256xf32>
    %c0_193 = arith.constant 0 : index
    %c0_194 = arith.constant 0 : index
    %c0_195 = arith.constant 0 : index
    %231 = vector.load %arg12[%c0_193, %c0_194, %c0_195] : memref<1x32x256xf32, #tpu.memory_space<vmem>>, vector<1x8x256xf32>
    %232 = vector.shape_cast %231 : vector<1x8x256xf32> to vector<8x256xf32>
    %233 = vector.shape_cast %230 : vector<8x256xf32> to vector<1x8x256xf32>
    tpu.vector_store %arg12[%c0_193, %c0_194, %c0_195], %233 {strides = array<i32>} : memref<1x32x256xf32, #tpu.memory_space<vmem>>, vector<1x8x256xf32>,
    %c0_196 = arith.constant 0 : index
    %c8_197 = arith.constant 8 : index
    %c0_198 = arith.constant 0 : index
    %234 = vector.load %arg12[%c0_196, %c8_197, %c0_198] : memref<1x32x256xf32, #tpu.memory_space<vmem>>, vector<1x8x256xf32>
    %235 = vector.shape_cast %234 : vector<1x8x256xf32> to vector<8x256xf32>
    %236 = vector.shape_cast %141 : vector<8x256xf32> to vector<1x8x256xf32>
    tpu.vector_store %arg12[%c0_196, %c8_197, %c0_198], %236 {strides = array<i32>} : memref<1x32x256xf32, #tpu.memory_space<vmem>>, vector<1x8x256xf32>,
    %c0_199 = arith.constant 0 : index
    %c16 = arith.constant 16 : index
    %c0_200 = arith.constant 0 : index
    %237 = vector.load %arg12[%c0_199, %c16, %c0_200] : memref<1x32x256xf32, #tpu.memory_space<vmem>>, vector<1x8x256xf32>
    %238 = vector.shape_cast %237 : vector<1x8x256xf32> to vector<8x256xf32>
    %239 = vector.shape_cast %221 : vector<8x256xf32> to vector<1x8x256xf32>
    tpu.vector_store %arg12[%c0_199, %c16, %c0_200], %239 {strides = array<i32>} : memref<1x32x256xf32, #tpu.memory_space<vmem>>, vector<1x8x256xf32>,
    %c0_201 = arith.constant 0 : index
    %c24 = arith.constant 24 : index
    %c0_202 = arith.constant 0 : index
    %240 = vector.load %arg12[%c0_201, %c24, %c0_202] : memref<1x32x256xf32, #tpu.memory_space<vmem>>, vector<1x8x256xf32>
    %241 = vector.shape_cast %240 : vector<1x8x256xf32> to vector<8x256xf32>
    %242 = vector.shape_cast %229 : vector<8x256xf32> to vector<1x8x256xf32>
    tpu.vector_store %arg12[%c0_201, %c24, %c0_202], %242 {strides = array<i32>} : memref<1x32x256xf32, #tpu.memory_space<vmem>>, vector<1x8x256xf32>,
    return
  }
  func.func @transform_0(%arg0: i32) -> (i32, i32, i32) {
    %c0_i32 = arith.constant 0 : i32
    %c0_i32_0 = arith.constant 0 : i32
    %c0_i32_1 = arith.constant 0 : i32
    return %arg0, %c0_i32, %c0_i32_0 : i32, i32, i32
  }
  func.func @transform_1(%arg0: i32) -> (i32, i32, i32) {
    %c0_i32 = arith.constant 0 : i32
    %c0_i32_0 = arith.constant 0 : i32
    %c0_i32_1 = arith.constant 0 : i32
    %c0_i32_2 = arith.constant 0 : i32
    return %c0_i32, %c0_i32_0, %c0_i32_1 : i32, i32, i32
  }
  func.func @transform_2(%arg0: i32) -> (i32, i32, i32) {
    %c0_i32 = arith.constant 0 : i32
    %c0_i32_0 = arith.constant 0 : i32
    %c0_i32_1 = arith.constant 0 : i32
    %c0_i32_2 = arith.constant 0 : i32
    return %c0_i32, %c0_i32_0, %c0_i32_1 : i32, i32, i32
  }
  func.func @transform_3(%arg0: i32) -> (i32, i32) {
    %c0_i32 = arith.constant 0 : i32
    %c0_i32_0 = arith.constant 0 : i32
    %c0_i32_1 = arith.constant 0 : i32
    return %c0_i32, %c0_i32_0 : i32, i32
  }
  func.func @transform_4(%arg0: i32) -> (i32, i32) {
    %c0_i32 = arith.constant 0 : i32
    %c0_i32_0 = arith.constant 0 : i32
    %c0_i32_1 = arith.constant 0 : i32
    return %c0_i32, %c0_i32_0 : i32, i32
  }
  func.func @transform_5(%arg0: i32) -> (i32, i32, i32) {
    %c0_i32 = arith.constant 0 : i32
    %c0_i32_0 = arith.constant 0 : i32
    %c0_i32_1 = arith.constant 0 : i32
    %c0_i32_2 = arith.constant 0 : i32
    return %c0_i32, %c0_i32_0, %c0_i32_1 : i32, i32, i32
  }
  func.func @transform_6(%arg0: i32) -> (i32, i32) {
    %c0_i32 = arith.constant 0 : i32
    %c0_i32_0 = arith.constant 0 : i32
    %c0_i32_1 = arith.constant 0 : i32
    return %c0_i32, %c0_i32_0 : i32, i32
  }
  func.func @transform_7(%arg0: i32) -> (i32, i32, i32) {
    %c0_i32 = arith.constant 0 : i32
    %c0_i32_0 = arith.constant 0 : i32
    %c0_i32_1 = arith.constant 0 : i32
    %c0_i32_2 = arith.constant 0 : i32
    return %c0_i32, %c0_i32_0, %c0_i32_1 : i32, i32, i32
  }
  func.func @transform_8(%arg0: i32) -> (i32, i32) {
    %c0_i32 = arith.constant 0 : i32
    %c0_i32_0 = arith.constant 0 : i32
    %c0_i32_1 = arith.constant 0 : i32
    return %c0_i32, %c0_i32_0 : i32, i32
  }
  func.func @transform_9(%arg0: i32) -> (i32, i32) {
    %c0_i32 = arith.constant 0 : i32
    %c0_i32_0 = arith.constant 0 : i32
    %c0_i32_1 = arith.constant 0 : i32
    return %c0_i32, %c0_i32_0 : i32, i32
  }
  func.func @transform_10(%arg0: i32) -> (i32, i32) {
    %c0_i32 = arith.constant 0 : i32
    %c0_i32_0 = arith.constant 0 : i32
    %c0_i32_1 = arith.constant 0 : i32
    return %c0_i32, %c0_i32_0 : i32, i32
  }
  func.func @transform_11(%arg0: i32) -> (i32, i32, i32) {
    %c0_i32 = arith.constant 0 : i32
    %c0_i32_0 = arith.constant 0 : i32
    %c0_i32_1 = arith.constant 0 : i32
    return %arg0, %c0_i32, %c0_i32_0 : i32, i32, i32
  }
}

</mosaic_0001>

<llo_original>
// kernel: inception_forward.1
$region0: #{inception_forward.1}
  #allocation0 [shape = 'u32[]', space=smem, size = 0x4, offset = 0x4, fixed_abs, tag = 'smem constant byte address 0x4 - core index']
  #allocation1 [shape = 'u32[144,128]{1,0:T(1,128)}', space=vmem, size = 0x12000, scoped, tag = 'internal scratch']
  %s0 = inlined_call_operand.vmem [shape: bf16[2,4,256], index: 0, kind: input, shape index: {}]
  %s1 = inlined_call_operand.vmem [shape: bf16[9,256,256], index: 1, kind: input, shape index: {}]
  %s2 = inlined_call_operand.vmem [shape: f32[9,1,256], index: 2, kind: input, shape index: {}]
  %s3 = inlined_call_operand.vmem [shape: bf16[16,4], index: 3, kind: input, shape index: {}]
  %s4 = inlined_call_operand.vmem [shape: f32[16,1], index: 4, kind: input, shape index: {}]
  %s5 = inlined_call_operand.vmem [shape: bf16[9,16,16], index: 5, kind: input, shape index: {}]
  %s6 = inlined_call_operand.vmem [shape: f32[16,1], index: 6, kind: input, shape index: {}]
  %s7 = inlined_call_operand.vmem [shape: bf16[9,8,8], index: 7, kind: input, shape index: {}]
  %s8 = inlined_call_operand.vmem [shape: f32[8,1], index: 8, kind: input, shape index: {}]
  %s9 = inlined_call_operand.vmem [shape: bf16[8,4], index: 9, kind: input, shape index: {}]
  %s10 = inlined_call_operand.vmem [shape: f32[8,1], index: 10, kind: input, shape index: {}]
  %s11 = inlined_call_operand.vmem [shape: f32[2,32,256], index: 11, kind: output, shape index: {}]
  %s12 = sld [smem:[#allocation0]]
  $region77: #{inception_forward.1} parent=0
    _
  %s14 = ssub.s32 1, %s12
  %s15 = scalar_select 0, %s14, %s12
  loop: start=0, step=1, limit=4
  $region2: #{inception_forward.1} parent=0 // loop_pre_header
    _
  $region3: #{inception_forward.1} parent=0 // loop_header
    %s17 = sphi 0, %s21
    %p18 = scmp.ge.s32.totalorder %s17, 4
    %s27 = sphi 0, %s29
    %s30 = sphi 0, %s27
    %s31 = sphi 0, %s30
    %s47 = sphi 0, %s31
    %s51 = sphi 0, %s51
    %s53 = sphi 0, %s51
    %s54 = sphi 0, %s53
    %s68 = sphi 0, %s54
    %s72 = sphi 0, %s72
    %s74 = sphi 0, %s72
    %s75 = sphi 0, %s74
    %s89 = sphi 0, %s75
    %s93 = sphi 0, %s93
    %s95 = sphi 0, %s93
    %s96 = sphi 0, %s95
    %s110 = sphi 0, %s96
    %s114 = sphi 0, %s114
    %s116 = sphi 0, %s114
    %s117 = sphi 0, %s116
    %s131 = sphi 0, %s117
    %s135 = sphi 0, %s135
    %s137 = sphi 0, %s135
    %s138 = sphi 0, %s137
    %s152 = sphi 0, %s138
    %s156 = sphi 0, %s156
    %s158 = sphi 0, %s156
    %s159 = sphi 0, %s158
    %s173 = sphi 0, %s159
    %s177 = sphi 0, %s177
    %s179 = sphi 0, %s177
    %s180 = sphi 0, %s179
    %s194 = sphi 0, %s180
    %s198 = sphi 0, %s198
    %s200 = sphi 0, %s198
    %s201 = sphi 0, %s200
    %s215 = sphi 0, %s201
    %s219 = sphi 0, %s219
    %s221 = sphi 0, %s219
    %s222 = sphi 0, %s221
    %s236 = sphi 0, %s222
    %s240 = sphi 0, %s240
    %s242 = sphi 0, %s240
    %s243 = sphi 0, %s242
    %s257 = sphi 0, %s243
    %s263 = sphi 0, %s265
    %s266 = sphi 0, %s263
    %s267 = sphi 0, %s266
    %s283 = sphi 0, %s267
  $region4: #{inception_forward.1} parent=0 // loop_header_branch
    %20 = sbr.rel (%p18) target = $region8
  $region5: #{inception_forward.1} parent=0 // loop_body
    %s22 = ssub.s32 %s17, 1
    %s23 = ssub.s32 %s17, 2
    %s24 = sadd.s32 %s17, 1
    %s25 = ssub.s32 %s17, %s24
    %p26 = scmp.eq.s32.totalorder %s25, 0
    %s28 = sadd.s32 %s27, 1
    %s29 = scalar_select %p26, %s27, %s28
    %p32 = pneg %p26
    %p33 = scmp.eq.s32.totalorder %s17, 1
    %p34 = por %p32, %p33
    %p35 = scmp.ne.s32.totalorder %s27, %s30
    %p36 = scmp.eq.s32.totalorder %s17, 0
    %p37 = por %p35, %p36
    %p38 = scmp.ne.s32.totalorder %s27, %s30
    %p39 = scmp.eq.s32.totalorder %s22, 1
    %p40 = por %p38, %p39
    %p41 = scmp.ne.s32.totalorder %s30, %s31
    %p42 = scmp.eq.s32.totalorder %s22, 0
    %p43 = por %p41, %p42
    %p44 = scmp.ne.s32.totalorder %s30, %s31
    %p45 = scmp.eq.s32.totalorder %s23, 1
    %p46 = por %p44, %p45
    %p48 = scmp.ne.s32.totalorder %s31, %s47
    %p49 = scmp.eq.s32.totalorder %s23, 0
    %p50 = por %p48, %p49
    %s52 = sadd.s32 %s51, 1
    %p55 = scmp.eq.s32.totalorder %s17, 1
    %p56 = scmp.ne.s32.totalorder %s51, %s53
    %p57 = scmp.eq.s32.totalorder %s17, 0
    %p58 = por %p56, %p57
    %p59 = scmp.ne.s32.totalorder %s51, %s53
    %p60 = scmp.eq.s32.totalorder %s22, 1
    %p61 = por %p59, %p60
    %p62 = scmp.ne.s32.totalorder %s53, %s54
    %p63 = scmp.eq.s32.totalorder %s22, 0
    %p64 = por %p62, %p63
    %p65 = scmp.ne.s32.totalorder %s53, %s54
    %p66 = scmp.eq.s32.totalorder %s23, 1
    %p67 = por %p65, %p66
    %p69 = scmp.ne.s32.totalorder %s54, %s68
    %p70 = scmp.eq.s32.totalorder %s23, 0
    %p71 = por %p69, %p70
    %s73 = sadd.s32 %s72, 1
    %p76 = scmp.eq.s32.totalorder %s17, 1
    %p77 = scmp.ne.s32.totalorder %s72, %s74
    %p78 = scmp.eq.s32.totalorder %s17, 0
    %p79 = por %p77, %p78
    %p80 = scmp.ne.s32.totalorder %s72, %s74
    %p81 = scmp.eq.s32.totalorder %s22, 1
    %p82 = por %p80, %p81
    %p83 = scmp.ne.s32.totalorder %s74, %s75
    %p84 = scmp.eq.s32.totalorder %s22, 0
    %p85 = por %p83, %p84
    %p86 = scmp.ne.s32.totalorder %s74, %s75
    %p87 = scmp.eq.s32.totalorder %s23, 1
    %p88 = por %p86, %p87
    %p90 = scmp.ne.s32.totalorder %s75, %s89
    %p91 = scmp.eq.s32.totalorder %s23, 0
    %p92 = por %p90, %p91
    %s94 = sadd.s32 %s93, 1
    %p97 = scmp.eq.s32.totalorder %s17, 1
    %p98 = scmp.ne.s32.totalorder %s93, %s95
    %p99 = scmp.eq.s32.totalorder %s17, 0
    %p100 = por %p98, %p99
    %p101 = scmp.ne.s32.totalorder %s93, %s95
    %p102 = scmp.eq.s32.totalorder %s22, 1
    %p103 = por %p101, %p102
    %p104 = scmp.ne.s32.totalorder %s95, %s96
    %p105 = scmp.eq.s32.totalorder %s22, 0
    %p106 = por %p104, %p105
    %p107 = scmp.ne.s32.totalorder %s95, %s96
    %p108 = scmp.eq.s32.totalorder %s23, 1
    %p109 = por %p107, %p108
    %p111 = scmp.ne.s32.totalorder %s96, %s110
    %p112 = scmp.eq.s32.totalorder %s23, 0
    %p113 = por %p111, %p112
    %s115 = sadd.s32 %s114, 1
    %p118 = scmp.eq.s32.totalorder %s17, 1
    %p119 = scmp.ne.s32.totalorder %s114, %s116
    %p120 = scmp.eq.s32.totalorder %s17, 0
    %p121 = por %p119, %p120
    %p122 = scmp.ne.s32.totalorder %s114, %s116
    %p123 = scmp.eq.s32.totalorder %s22, 1
    %p124 = por %p122, %p123
    %p125 = scmp.ne.s32.totalorder %s116, %s117
    %p126 = scmp.eq.s32.totalorder %s22, 0
    %p127 = por %p125, %p126
    %p128 = scmp.ne.s32.totalorder %s116, %s117
    %p129 = scmp.eq.s32.totalorder %s23, 1
    %p130 = por %p128, %p129
    %p132 = scmp.ne.s32.totalorder %s117, %s131
    %p133 = scmp.eq.s32.totalorder %s23, 0
    %p134 = por %p132, %p133
    %s136 = sadd.s32 %s135, 1
    %p139 = scmp.eq.s32.totalorder %s17, 1
    %p140 = scmp.ne.s32.totalorder %s135, %s137
    %p141 = scmp.eq.s32.totalorder %s17, 0
    %p142 = por %p140, %p141
    %p143 = scmp.ne.s32.totalorder %s135, %s137
    %p144 = scmp.eq.s32.totalorder %s22, 1
    %p145 = por %p143, %p144
    %p146 = scmp.ne.s32.totalorder %s137, %s138
    %p147 = scmp.eq.s32.totalorder %s22, 0
    %p148 = por %p146, %p147
    %p149 = scmp.ne.s32.totalorder %s137, %s138
    %p150 = scmp.eq.s32.totalorder %s23, 1
    %p151 = por %p149, %p150
    %p153 = scmp.ne.s32.totalorder %s138, %s152
    %p154 = scmp.eq.s32.totalorder %s23, 0
    %p155 = por %p153, %p154
    %s157 = sadd.s32 %s156, 1
    %p160 = scmp.eq.s32.totalorder %s17, 1
    %p161 = scmp.ne.s32.totalorder %s156, %s158
    %p162 = scmp.eq.s32.totalorder %s17, 0
    %p163 = por %p161, %p162
    %p164 = scmp.ne.s32.totalorder %s156, %s158
    %p165 = scmp.eq.s32.totalorder %s22, 1
    %p166 = por %p164, %p165
    %p167 = scmp.ne.s32.totalorder %s158, %s159
    %p168 = scmp.eq.s32.totalorder %s22, 0
    %p169 = por %p167, %p168
    %p170 = scmp.ne.s32.totalorder %s158, %s159
    %p171 = scmp.eq.s32.totalorder %s23, 1
    %p172 = por %p170, %p171
    %p174 = scmp.ne.s32.totalorder %s159, %s173
    %p175 = scmp.eq.s32.totalorder %s23, 0
    %p176 = por %p174, %p175
    %s178 = sadd.s32 %s177, 1
    %p181 = scmp.eq.s32.totalorder %s17, 1
    %p182 = scmp.ne.s32.totalorder %s177, %s179
    %p183 = scmp.eq.s32.totalorder %s17, 0
    %p184 = por %p182, %p183
    %p185 = scmp.ne.s32.totalorder %s177, %s179
    %p186 = scmp.eq.s32.totalorder %s22, 1
    %p187 = por %p185, %p186
    %p188 = scmp.ne.s32.totalorder %s179, %s180
    %p189 = scmp.eq.s32.totalorder %s22, 0
    %p190 = por %p188, %p189
    %p191 = scmp.ne.s32.totalorder %s179, %s180
    %p192 = scmp.eq.s32.totalorder %s23, 1
    %p193 = por %p191, %p192
    %p195 = scmp.ne.s32.totalorder %s180, %s194
    %p196 = scmp.eq.s32.totalorder %s23, 0
    %p197 = por %p195, %p196
    %s199 = sadd.s32 %s198, 1
    %p202 = scmp.eq.s32.totalorder %s17, 1
    %p203 = scmp.ne.s32.totalorder %s198, %s200
    %p204 = scmp.eq.s32.totalorder %s17, 0
    %p205 = por %p203, %p204
    %p206 = scmp.ne.s32.totalorder %s198, %s200
    %p207 = scmp.eq.s32.totalorder %s22, 1
    %p208 = por %p206, %p207
    %p209 = scmp.ne.s32.totalorder %s200, %s201
    %p210 = scmp.eq.s32.totalorder %s22, 0
    %p211 = por %p209, %p210
    %p212 = scmp.ne.s32.totalorder %s200, %s201
    %p213 = scmp.eq.s32.totalorder %s23, 1
    %p214 = por %p212, %p213
    %p216 = scmp.ne.s32.totalorder %s201, %s215
    %p217 = scmp.eq.s32.totalorder %s23, 0
    %p218 = por %p216, %p217
    %s220 = sadd.s32 %s219, 1
    %p223 = scmp.eq.s32.totalorder %s17, 1
    %p224 = scmp.ne.s32.totalorder %s219, %s221
    %p225 = scmp.eq.s32.totalorder %s17, 0
    %p226 = por %p224, %p225
    %p227 = scmp.ne.s32.totalorder %s219, %s221
    %p228 = scmp.eq.s32.totalorder %s22, 1
    %p229 = por %p227, %p228
    %p230 = scmp.ne.s32.totalorder %s221, %s222
    %p231 = scmp.eq.s32.totalorder %s22, 0
    %p232 = por %p230, %p231
    %p233 = scmp.ne.s32.totalorder %s221, %s222
    %p234 = scmp.eq.s32.totalorder %s23, 1
    %p235 = por %p233, %p234
    %p237 = scmp.ne.s32.totalorder %s222, %s236
    %p238 = scmp.eq.s32.totalorder %s23, 0
    %p239 = por %p237, %p238
    %s241 = sadd.s32 %s240, 1
    %p244 = scmp.eq.s32.totalorder %s17, 1
    %p245 = scmp.ne.s32.totalorder %s240, %s242
    %p246 = scmp.eq.s32.totalorder %s17, 0
    %p247 = por %p245, %p246
    %p248 = scmp.ne.s32.totalorder %s240, %s242
    %p249 = scmp.eq.s32.totalorder %s22, 1
    %p250 = por %p248, %p249
    %p251 = scmp.ne.s32.totalorder %s242, %s243
    %p252 = scmp.eq.s32.totalorder %s22, 0
    %p253 = por %p251, %p252
    %p254 = scmp.ne.s32.totalorder %s242, %s243
    %p255 = scmp.eq.s32.totalorder %s23, 1
    %p256 = por %p254, %p255
    %p258 = scmp.ne.s32.totalorder %s243, %s257
    %p259 = scmp.eq.s32.totalorder %s23, 0
    %p260 = por %p258, %p259
    %s261 = ssub.s32 %s17, %s24
    %p262 = scmp.eq.s32.totalorder %s261, 0
    %s264 = sadd.s32 %s263, 1
    %s265 = scalar_select %p262, %s263, %s264
    %p268 = pneg %p262
    %p269 = scmp.eq.s32.totalorder %s17, 1
    %p270 = por %p268, %p269
    %p271 = scmp.ne.s32.totalorder %s263, %s266
    %p272 = scmp.eq.s32.totalorder %s17, 0
    %p273 = por %p271, %p272
    %p274 = scmp.ne.s32.totalorder %s263, %s266
    %p275 = scmp.eq.s32.totalorder %s22, 1
    %p276 = por %p274, %p275
    %p277 = scmp.ne.s32.totalorder %s266, %s267
    %p278 = scmp.eq.s32.totalorder %s22, 0
    %p279 = por %p277, %p278
    %p280 = scmp.ne.s32.totalorder %s266, %s267
    %p281 = scmp.eq.s32.totalorder %s23, 1
    %p282 = por %p280, %p281
    %p284 = scmp.ne.s32.totalorder %s267, %s283
    %p285 = scmp.eq.s32.totalorder %s23, 0
    %p286 = por %p284, %p285
    %p287 = scmp.le.s32.totalorder 1, %s17
    %p288 = scmp.lt.s32.totalorder %s17, 3
    %p289 = pnand %p287, %p288
    %p290 = pneg %p289
    // Predicated region
    $region9: #{inception_forward.1} parent=5 // pred_check
      _
    $region10: #{inception_forward.1} parent=5 // pred_check_branch
      %292 = sbr.rel (%p289) target = $region12
    $region11: #{inception_forward.1} parent=5 // pred_region
      %s293 = ssub.s32 %s17, 1
      // Predicated region
      $region13: #{inception_forward.1} parent=11 // pred_check
        %p294 = pneg %p64
      $region14: #{inception_forward.1} parent=11 // pred_check_branch
        %296 = sbr.rel (%p294) target = $region16
      $region15: #{inception_forward.1} parent=11 // pred_region
        _
      $region16: #{inception_forward.1} parent=11 // pred_fallthru
        _
      // Predicated region
      $region17: #{inception_forward.1} parent=11 // pred_check
        %p297 = pneg %p85
      $region18: #{inception_forward.1} parent=11 // pred_check_branch
        %299 = sbr.rel (%p297) target = $region20
      $region19: #{inception_forward.1} parent=11 // pred_region
        _
      $region20: #{inception_forward.1} parent=11 // pred_fallthru
        _
      // Predicated region
      $region21: #{inception_forward.1} parent=11 // pred_check
        %p300 = pneg %p106
      $region22: #{inception_forward.1} parent=11 // pred_check_branch
        %302 = sbr.rel (%p300) target = $region24
      $region23: #{inception_forward.1} parent=11 // pred_region
        _
      $region24: #{inception_forward.1} parent=11 // pred_fallthru
        _
      // Predicated region
      $region25: #{inception_forward.1} parent=11 // pred_check
        %p303 = pneg %p127
      $region26: #{inception_forward.1} parent=11 // pred_check_branch
        %305 = sbr.rel (%p303) target = $region28
      $region27: #{inception_forward.1} parent=11 // pred_region
        _
      $region28: #{inception_forward.1} parent=11 // pred_fallthru
        _
      // Predicated region
      $region29: #{inception_forward.1} parent=11 // pred_check
        %p306 = pneg %p148
      $region30: #{inception_forward.1} parent=11 // pred_check_branch
        %308 = sbr.rel (%p306) target = $region32
      $region31: #{inception_forward.1} parent=11 // pred_region
        _
      $region32: #{inception_forward.1} parent=11 // pred_fallthru
        _
      // Predicated region
      $region33: #{inception_forward.1} parent=11 // pred_check
        %p309 = pneg %p169
      $region34: #{inception_forward.1} parent=11 // pred_check_branch
        %311 = sbr.rel (%p309) target = $region36
      $region35: #{inception_forward.1} parent=11 // pred_region
        _
      $region36: #{inception_forward.1} parent=11 // pred_fallthru
        _
      // Predicated region
      $region37: #{inception_forward.1} parent=11 // pred_check
        %p312 = pneg %p190
      $region38: #{inception_forward.1} parent=11 // pred_check_branch
        %314 = sbr.rel (%p312) target = $region40
      $region39: #{inception_forward.1} parent=11 // pred_region
        _
      $region40: #{inception_forward.1} parent=11 // pred_fallthru
        _
      // Predicated region
      $region41: #{inception_forward.1} parent=11 // pred_check
        %p315 = pneg %p211
      $region42: #{inception_forward.1} parent=11 // pred_check_branch
        %317 = sbr.rel (%p315) target = $region44
      $region43: #{inception_forward.1} parent=11 // pred_region
        _
      $region44: #{inception_forward.1} parent=11 // pred_fallthru
        _
      // Predicated region
      $region45: #{inception_forward.1} parent=11 // pred_check
        %p318 = pneg %p232
      $region46: #{inception_forward.1} parent=11 // pred_check_branch
        %320 = sbr.rel (%p318) target = $region48
      $region47: #{inception_forward.1} parent=11 // pred_region
        _
      $region48: #{inception_forward.1} parent=11 // pred_fallthru
        _
      // Predicated region
      $region49: #{inception_forward.1} parent=11 // pred_check
        %p321 = pneg %p253
      $region50: #{inception_forward.1} parent=11 // pred_check_branch
        %323 = sbr.rel (%p321) target = $region52
      $region51: #{inception_forward.1} parent=11 // pred_region
        _
      $region52: #{inception_forward.1} parent=11 // pred_fallthru
        _
    $region12: #{inception_forward.1} parent=5 // pred_fallthru
      _
    %p324 = scmp.lt.s32.totalorder %s17, 2
    // Predicated region
    $region53: #{inception_forward.1} parent=5 // pred_check
      %p325 = pneg %p324
    $region54: #{inception_forward.1} parent=5 // pred_check_branch
      %327 = sbr.rel (%p325) target = $region56
    $region55: #{inception_forward.1} parent=5 // pred_region
      // Predicated region
      $region57: #{inception_forward.1} parent=55 // pred_check
        %p328 = pneg %p37
      $region58: #{inception_forward.1} parent=55 // pred_check_branch
        %330 = sbr.rel (%p328) target = $region60
      $region59: #{inception_forward.1} parent=55 // pred_region
        %p331 = scmp.lt.s32.totalorder %s17, 1
        %s332 = scalar_select %p331, %s17, 1
        %s333 = smul.addr %s332, 2
        %s334 = smul.addr %s333, 2
        %s335 = scalar_lea.vmem %s0, %s334
      $region60: #{inception_forward.1} parent=55 // pred_fallthru
        _
    $region56: #{inception_forward.1} parent=5 // pred_fallthru
      _
    %p336 = scmp.le.s32.totalorder 1, %s17
    %p337 = scmp.lt.s32.totalorder %s17, 3
    %p338 = pnand %p336, %p337
    %p339 = pneg %p338
    // Predicated region
    $region61: #{inception_forward.1} parent=5 // pred_check
      _
    $region62: #{inception_forward.1} parent=5 // pred_check_branch
      %341 = sbr.rel (%p338) target = $region64
    $region63: #{inception_forward.1} parent=5 // pred_region
      %s342 = ssub.s32 %s17, 1
      %p343 = scmp.lt.s32.totalorder %s22, 1
      %s344 = scalar_select %p343, %s22, 1
      %s345 = smul.addr %s344, 2
      %s346 = smul.addr %s345, 2
      %s347 = scalar_lea.vmem %s0, %s346
      %p348 = pneg %p43
      %p349 = pneg %p40
      %p350 = pneg %p64
      %p351 = pneg %p61
      %p352 = pneg %p85
      %p353 = pneg %p82
      %p354 = pneg %p106
      %p355 = pneg %p103
      %p356 = pneg %p127
      %p357 = pneg %p124
      %p358 = pneg %p148
      %p359 = pneg %p145
      %p360 = pneg %p169
      %p361 = pneg %p166
      %p362 = pneg %p190
      %p363 = pneg %p187
      %p364 = pneg %p211
      %p365 = pneg %p208
      %p366 = pneg %p232
      %p367 = pneg %p229
      %p368 = pneg %p253
      %p369 = pneg %p250
      %p370 = pneg %p279
      %p371 = pneg %p276
      %p372 = scmp.lt.s32.totalorder %s22, 1
      %s373 = scalar_select %p372, %s22, 1
      %s374 = smul.addr %s373, 8
      %s375 = smul.addr %s374, 8
      %s376 = scalar_lea.vmem %s11, %s375
      %p377 = scmp.lt.s32.totalorder %s22, 1
      %s378 = scalar_select %p377, %s22, 1
      %s379 = smul.addr %s378, 2
      %s380 = smul.addr %s379, 2
      %s381 = scalar_lea.vmem %s0, %s380
      %p382 = scmp.lt.s32.totalorder %s22, 1
      %s383 = scalar_select %p382, %s22, 1
      %s384 = smul.addr %s383, 8
      %s385 = smul.addr %s384, 8
      %s386 = scalar_lea.vmem %s11, %s385
      %v388 = vld [vmem:[%s381] sm:$0xf]
      %v389 = vld [vmem:[%s3] sm:$0xf]
      %v390 = vld [vmem:[%s3 + $0x4] sm:$0xf]
      %v391 = vld [vmem:[%s4] sm:$0xff]
      %v392 = vld [vmem:[%s4 + $0x8] sm:$0xff]
      %394 = vset.pattern.permute.xlu0 0
      %395 = vperm.xlu0 %394, %v391
      %v396 = vpop.permute.xlu0 %395
      %399 = vset.pattern.permute.xlu0 0
      %400 = vperm.xlu0 %399, %v392
      %v401 = vpop.permute.xlu0 %400
      %v405 = vunpack.c.l.b16 %v389
      %v406 = vunpack.c.l.b16 %v390
      %v407 = vpack.c.b16 %v406, %v405
      %v410 = vunpack.c.l.s4 1983009808
      %v411 = vunpack.c.0.s8 %v410
      %v412 = vlaneseq
      %v413 = vshrl.u32 %v412, 7
      %v414 = vsub.s32 %v411, %v413
      %v415 = vrot.slane %v388, %v414
      %v416 = vcombine.high %v415, %v415
      %vm417 = vcmask 31744
      %v419 = vsel %vm417, %v407, 0
      %vm421 = vcmask 1041408
      %v423 = vsel %vm421, %v415, 0
      %v426 = vsel %vm421, %v416, 0
      %428 = vmatprep.subr.bf16.mxu0 %v426
      %429 = vmatpush1.bf16.msra.mxu0 %v423
      %430 = vmatprep.subr.bf16.mxu0 0
      %431 = vmatpush1.bf16.msra.mxu0 0
      %432 = vmatprep.subr.bf16.mxu0 0
      %433 = vmatpush1.bf16.msra.mxu0 0
      %434 = vmatprep.subr.bf16.mxu0 0
      %435 = vmatpush1.bf16.msra.mxu0 0
      %436 = vmatprep.subr.bf16.mxu0 0
      %437 = vmatpush1.bf16.msra.mxu0 0
      %438 = vmatprep.subr.bf16.mxu0 0
      %439 = vmatpush1.bf16.msra.mxu0 0
      %440 = vmatprep.subr.bf16.mxu0 0
      %441 = vmatpush1.bf16.msra.mxu0 0
      %442 = vmatprep.subr.bf16.mxu0 0
      %443 = vmatpush1.bf16.msra.mxu0 0
      %444 = vmatprep.subr.bf16.mxu0 0
      %445 = vmatpush1.bf16.msra.mxu0 0
      %446 = vmatprep.subr.bf16.mxu0 0
      %447 = vmatpush1.bf16.msra.mxu0 0
      %448 = vmatprep.subr.bf16.mxu0 0
      %449 = vmatpush1.bf16.msra.mxu0 0
      %450 = vmatprep.subr.bf16.mxu0 0
      %451 = vmatpush1.bf16.msra.mxu0 0
      %452 = vmatprep.subr.bf16.mxu0 0
      %453 = vmatpush1.bf16.msra.mxu0 0
      %454 = vmatprep.subr.bf16.mxu0 0
      %455 = vmatpush1.bf16.msra.mxu0 0
      %456 = vmatprep.subr.bf16.mxu0 0
      %457 = vmatpush1.bf16.msra.mxu0 0
      %458 = vmatprep.subr.bf16.mxu0 0
      %459 = vmatpush1.bf16.msra.mxu0 0
      %460 = vmatprep.mubr.bf16.mxu0 0
      %461 = vmatmul.mubr.bf16.gmra.mrb[0].mxu0 %v419
      %v462 = vpop.f32.mrb[0].mxu0
      %v463 = vadd.f32 %v396, %v462
      %v464 = vpop.f32.mrb[0].mxu0
      %v465 = vadd.f32 %v396, %v464
      %v466 = vpop.f32.mrb[0].mxu0
      %v467 = vadd.f32 %v401, %v466
      %v468 = vpop.f32.mrb[0].mxu0
      %v469 = vadd.f32 %v401, %v468
      %470 = vdwg.mxu0
      %v471 = vmax.f32 %v463, 0.0
      %v472 = vmax.f32 %v465, 0.0
      %v473 = vmax.f32 %v467, 0.0
      %v474 = vmax.f32 %v469, 0.0
      %v475 = vpack.c.bf16 %v473, %v471
      %v476 = vpack.c.bf16 %v474, %v472
      %v477 = vld [vmem:[%s1] sm:$0xff]
      %v478 = vld [vmem:[%s1 + $0x8] sm:$0xff]
      %v479 = vld [vmem:[%s1 + $0x10] sm:$0xff]
      %v480 = vld [vmem:[%s1 + $0x18] sm:$0xff]
      %v481 = vld [vmem:[%s1 + $0x20] sm:$0xff]
      %v482 = vld [vmem:[%s1 + $0x28] sm:$0xff]
      %v483 = vld [vmem:[%s1 + $0x30] sm:$0xff]
      %v484 = vld [vmem:[%s1 + $0x38] sm:$0xff]
      %v485 = vld [vmem:[%s1 + $0x40] sm:$0xff]
      %v486 = vld [vmem:[%s1 + $0x48] sm:$0xff]
      %v487 = vld [vmem:[%s1 + $0x50] sm:$0xff]
      %v488 = vld [vmem:[%s1 + $0x58] sm:$0xff]
      %v489 = vld [vmem:[%s1 + $0x60] sm:$0xff]
      %v490 = vld [vmem:[%s1 + $0x68] sm:$0xff]
      %v491 = vld [vmem:[%s1 + $0x70] sm:$0xff]
      %v492 = vld [vmem:[%s1 + $0x78] sm:$0xff]
      %v493 = vld [vmem:[%s1 + $0x80] sm:$0xff]
      %v494 = vld [vmem:[%s1 + $0x88] sm:$0xff]
      %v495 = vld [vmem:[%s1 + $0x90] sm:$0xff]
      %v496 = vld [vmem:[%s1 + $0x98] sm:$0xff]
      %v497 = vld [vmem:[%s1 + $0xa0] sm:$0xff]
      %v498 = vld [vmem:[%s1 + $0xa8] sm:$0xff]
      %v499 = vld [vmem:[%s1 + $0xb0] sm:$0xff]
      %v500 = vld [vmem:[%s1 + $0xb8] sm:$0xff]
      %v501 = vld [vmem:[%s1 + $0xc0] sm:$0xff]
      %v502 = vld [vmem:[%s1 + $0xc8] sm:$0xff]
      %v503 = vld [vmem:[%s1 + $0xd0] sm:$0xff]
      %v504 = vld [vmem:[%s1 + $0xd8] sm:$0xff]
      %v505 = vld [vmem:[%s1 + $0xe0] sm:$0xff]
      %v506 = vld [vmem:[%s1 + $0xe8] sm:$0xff]
      %v507 = vld [vmem:[%s1 + $0xf0] sm:$0xff]
      %v508 = vld [vmem:[%s1 + $0xf8] sm:$0xff]
      %v541 = vunpack.c.l.b16 %v477
      %v542 = vunpack.c.h.b16 %v477
      %v543 = vunpack.c.l.b16 %v478
      %v544 = vunpack.c.h.b16 %v478
      %v545 = vunpack.c.l.b16 %v479
      %v546 = vunpack.c.h.b16 %v479
      %v547 = vunpack.c.l.b16 %v480
      %v548 = vunpack.c.h.b16 %v480
      %v549 = vunpack.c.l.b16 %v481
      %v550 = vunpack.c.h.b16 %v481
      %v551 = vunpack.c.l.b16 %v482
      %v552 = vunpack.c.h.b16 %v482
      %v553 = vunpack.c.l.b16 %v483
      %v554 = vunpack.c.h.b16 %v483
      %v555 = vunpack.c.l.b16 %v484
      %v556 = vunpack.c.h.b16 %v484
      %v557 = vunpack.c.l.b16 %v485
      %v558 = vunpack.c.h.b16 %v485
      %v559 = vunpack.c.l.b16 %v486
      %v560 = vunpack.c.h.b16 %v486
      %v561 = vunpack.c.l.b16 %v487
      %v562 = vunpack.c.h.b16 %v487
      %v563 = vunpack.c.l.b16 %v488
      %v564 = vunpack.c.h.b16 %v488
      %v565 = vunpack.c.l.b16 %v489
      %v566 = vunpack.c.h.b16 %v489
      %v567 = vunpack.c.l.b16 %v490
      %v568 = vunpack.c.h.b16 %v490
      %v569 = vunpack.c.l.b16 %v491
      %v570 = vunpack.c.h.b16 %v491
      %v571 = vunpack.c.l.b16 %v492
      %v572 = vunpack.c.h.b16 %v492
      %v573 = vunpack.c.l.b16 %v493
      %v574 = vunpack.c.h.b16 %v493
      %v575 = vunpack.c.l.b16 %v494
      %v576 = vunpack.c.h.b16 %v494
      %v577 = vunpack.c.l.b16 %v495
      %v578 = vunpack.c.h.b16 %v495
      %v579 = vunpack.c.l.b16 %v496
      %v580 = vunpack.c.h.b16 %v496
      %v581 = vunpack.c.l.b16 %v497
      %v582 = vunpack.c.h.b16 %v497
      %v583 = vunpack.c.l.b16 %v498
      %v584 = vunpack.c.h.b16 %v498
      %v585 = vunpack.c.l.b16 %v499
      %v586 = vunpack.c.h.b16 %v499
      %v587 = vunpack.c.l.b16 %v500
      %v588 = vunpack.c.h.b16 %v500
      %v589 = vunpack.c.l.b16 %v501
      %v590 = vunpack.c.h.b16 %v501
      %v591 = vunpack.c.l.b16 %v502
      %v592 = vunpack.c.h.b16 %v502
      %v593 = vunpack.c.l.b16 %v503
      %v594 = vunpack.c.h.b16 %v503
      %v595 = vunpack.c.l.b16 %v504
      %v596 = vunpack.c.h.b16 %v504
      %v597 = vunpack.c.l.b16 %v505
      %v598 = vunpack.c.h.b16 %v505
      %v599 = vunpack.c.l.b16 %v506
      %v600 = vunpack.c.h.b16 %v506
      %v601 = vunpack.c.l.b16 %v507
      %v602 = vunpack.c.h.b16 %v507
      %v603 = vunpack.c.l.b16 %v508
      %v604 = vunpack.c.h.b16 %v508
      %v605 = vpack.c.b16 %v543, %v541
      %v606 = vpack.c.b16 %v544, %v542
      %v607 = vpack.c.b16 %v547, %v545
      %v608 = vpack.c.b16 %v548, %v546
      %v609 = vpack.c.b16 %v551, %v549
      %v610 = vpack.c.b16 %v552, %v550
      %v611 = vpack.c.b16 %v555, %v553
      %v612 = vpack.c.b16 %v556, %v554
      %v613 = vpack.c.b16 %v559, %v557
      %v614 = vpack.c.b16 %v560, %v558
      %v615 = vpack.c.b16 %v563, %v561
      %v616 = vpack.c.b16 %v564, %v562
      %v617 = vpack.c.b16 %v567, %v565
      %v618 = vpack.c.b16 %v568, %v566
      %v619 = vpack.c.b16 %v571, %v569
      %v620 = vpack.c.b16 %v572, %v570
      %v621 = vpack.c.b16 %v575, %v573
      %v622 = vpack.c.b16 %v576, %v574
      %v623 = vpack.c.b16 %v579, %v577
      %v624 = vpack.c.b16 %v580, %v578
      %v625 = vpack.c.b16 %v583, %v581
      %v626 = vpack.c.b16 %v584, %v582
      %v627 = vpack.c.b16 %v587, %v585
      %v628 = vpack.c.b16 %v588, %v586
      %v629 = vpack.c.b16 %v591, %v589
      %v630 = vpack.c.b16 %v592, %v590
      %v631 = vpack.c.b16 %v595, %v593
      %v632 = vpack.c.b16 %v596, %v594
      %v633 = vpack.c.b16 %v599, %v597
      %v634 = vpack.c.b16 %v600, %v598
      %v635 = vpack.c.b16 %v603, %v601
      %v636 = vpack.c.b16 %v604, %v602
      %669 = vmatprep.subr.bf16.mxu0 %v606
      %670 = vmatpush1.bf16.msra.mxu0 %v605
      %671 = vmatprep.subr.bf16.mxu0 %v608
      %672 = vmatpush1.bf16.msra.mxu0 %v607
      %673 = vmatprep.subr.bf16.mxu0 %v610
      %674 = vmatpush1.bf16.msra.mxu0 %v609
      %675 = vmatprep.subr.bf16.mxu0 %v612
      %676 = vmatpush1.bf16.msra.mxu0 %v611
      %677 = vmatprep.subr.bf16.mxu0 %v614
      %678 = vmatpush1.bf16.msra.mxu0 %v613
      %679 = vmatprep.subr.bf16.mxu0 %v616
      %680 = vmatpush1.bf16.msra.mxu0 %v615
      %681 = vmatprep.subr.bf16.mxu0 %v618
      %682 = vmatpush1.bf16.msra.mxu0 %v617
      %683 = vmatprep.subr.bf16.mxu0 %v620
      %684 = vmatpush1.bf16.msra.mxu0 %v619
      %685 = vmatprep.subr.bf16.mxu0 %v622
      %686 = vmatpush1.bf16.msra.mxu0 %v621
      %687 = vmatprep.subr.bf16.mxu0 %v624
      %688 = vmatpush1.bf16.msra.mxu0 %v623
      %689 = vmatprep.subr.bf16.mxu0 %v626
      %690 = vmatpush1.bf16.msra.mxu0 %v625
      %691 = vmatprep.subr.bf16.mxu0 %v628
      %692 = vmatpush1.bf16.msra.mxu0 %v627
      %693 = vmatprep.subr.bf16.mxu0 %v630
      %694 = vmatpush1.bf16.msra.mxu0 %v629
      %695 = vmatprep.subr.bf16.mxu0 %v632
      %696 = vmatpush1.bf16.msra.mxu0 %v631
      %697 = vmatprep.subr.bf16.mxu0 %v634
      %698 = vmatpush1.bf16.msra.mxu0 %v633
      %699 = vmatprep.subr.bf16.mxu0 %v636
      %700 = vmatpush1.bf16.msra.mxu0 %v635
      %701 = vmatprep.mubr.bf16.mxu0 %v476
      %702 = vmatmul.mubr.bf16.gmra.mrb[0].mxu0 %v475
      %v703 = vpop.f32.mrb[0].mxu0
      %v704 = vadd.f32 0.0, %v703
      %v705 = vpop.f32.mrb[0].mxu0
      %v706 = vadd.f32 0.0, %v705
      %v707 = vpop.f32.mrb[0].mxu0
      %v708 = vadd.f32 0.0, %v707
      %v709 = vpop.f32.mrb[0].mxu0
      %v710 = vadd.f32 0.0, %v709
      %711 = vdwg.mxu0
      %v712 = vpack.c.bf16 %v708, %v704
      %v713 = vpack.c.bf16 %v710, %v706
      %v714 = vld [vmem:[%s5] sm:$0xf]
      %v715 = vld [vmem:[%s5 + $0x4] sm:$0xf]
      %v716 = vld [vmem:[%s2] sm:$0x3]
      %v718 = vlaneseq
      %v719 = vshrl.u32 %v718, 7
      %v720 = vsub.s32 0, %v719
      %v721 = vrot.slane %v716, %v720
      %v722 = vlaneseq
      %v723 = vshrl.u32 %v722, 7
      %v724 = vsub.s32 1, %v723
      %v725 = vrot.slane %v716, %v724
      %730 = vmatprep.subr.bf16.mxu0 %v606
      %731 = vmatpush1.bf16.msra.mxu0 %v605
      %732 = vmatprep.subr.bf16.mxu0 %v608
      %733 = vmatpush1.bf16.msra.mxu0 %v607
      %734 = vmatprep.subr.bf16.mxu0 %v610
      %735 = vmatpush1.bf16.msra.mxu0 %v609
      %736 = vmatprep.subr.bf16.mxu0 %v612
      %737 = vmatpush1.bf16.msra.mxu0 %v611
      %738 = vmatprep.subr.bf16.mxu0 %v614
      %739 = vmatpush1.bf16.msra.mxu0 %v613
      %740 = vmatprep.subr.bf16.mxu0 %v616
      %741 = vmatpush1.bf16.msra.mxu0 %v615
      %742 = vmatprep.subr.bf16.mxu0 %v618
      %743 = vmatpush1.bf16.msra.mxu0 %v617
      %744 = vmatprep.subr.bf16.mxu0 %v620
      %745 = vmatpush1.bf16.msra.mxu0 %v619
      %746 = vmatprep.subr.bf16.mxu0 %v622
      %747 = vmatpush1.bf16.msra.mxu0 %v621
      %748 = vmatprep.subr.bf16.mxu0 %v624
      %749 = vmatpush1.bf16.msra.mxu0 %v623
      %750 = vmatprep.subr.bf16.mxu0 %v626
      %751 = vmatpush1.bf16.msra.mxu0 %v625
      %752 = vmatprep.subr.bf16.mxu0 %v628
      %753 = vmatpush1.bf16.msra.mxu0 %v627
      %754 = vmatprep.subr.bf16.mxu0 %v630
      %755 = vmatpush1.bf16.msra.mxu0 %v629
      %756 = vmatprep.subr.bf16.mxu0 %v632
      %757 = vmatpush1.bf16.msra.mxu0 %v631
      %758 = vmatprep.subr.bf16.mxu0 %v634
      %759 = vmatpush1.bf16.msra.mxu0 %v633
      %760 = vmatprep.subr.bf16.mxu0 %v636
      %761 = vmatpush1.bf16.msra.mxu0 %v635
      %762 = vmatprep.mubr.bf16.mxu0 %v416
      %763 = vmatmul.mubr.bf16.gmra.mrb[0].mxu0 %v415
      %v764 = vpop.f32.mrb[0].mxu0
      %v765 = vadd.f32 %v721, %v764
      %v766 = vpop.f32.mrb[0].mxu0
      %v767 = vadd.f32 %v725, %v766
      %v768 = vpop.f32.mrb[0].mxu0
      %v769 = vpop.f32.mrb[0].mxu0
      %770 = vdwg.mxu0
      %s771 = scalar_lea.vmem %s1, 256
      %v772 = vld [vmem:[%s771] sm:$0xff]
      %v773 = vld [vmem:[%s771 + $0x8] sm:$0xff]
      %v774 = vld [vmem:[%s771 + $0x10] sm:$0xff]
      %v775 = vld [vmem:[%s771 + $0x18] sm:$0xff]
      %v776 = vld [vmem:[%s771 + $0x20] sm:$0xff]
      %v777 = vld [vmem:[%s771 + $0x28] sm:$0xff]
      %v778 = vld [vmem:[%s771 + $0x30] sm:$0xff]
      %v779 = vld [vmem:[%s771 + $0x38] sm:$0xff]
      %v780 = vld [vmem:[%s771 + $0x40] sm:$0xff]
      %v781 = vld [vmem:[%s771 + $0x48] sm:$0xff]
      %v782 = vld [vmem:[%s771 + $0x50] sm:$0xff]
      %v783 = vld [vmem:[%s771 + $0x58] sm:$0xff]
      %v784 = vld [vmem:[%s771 + $0x60] sm:$0xff]
      %v785 = vld [vmem:[%s771 + $0x68] sm:$0xff]
      %v786 = vld [vmem:[%s771 + $0x70] sm:$0xff]
      %v787 = vld [vmem:[%s771 + $0x78] sm:$0xff]
      %v788 = vld [vmem:[%s771 + $0x80] sm:$0xff]
      %v789 = vld [vmem:[%s771 + $0x88] sm:$0xff]
      %v790 = vld [vmem:[%s771 + $0x90] sm:$0xff]
      %v791 = vld [vmem:[%s771 + $0x98] sm:$0xff]
      %v792 = vld [vmem:[%s771 + $0xa0] sm:$0xff]
      %v793 = vld [vmem:[%s771 + $0xa8] sm:$0xff]
      %v794 = vld [vmem:[%s771 + $0xb0] sm:$0xff]
      %v795 = vld [vmem:[%s771 + $0xb8] sm:$0xff]
      %v796 = vld [vmem:[%s771 + $0xc0] sm:$0xff]
      %v797 = vld [vmem:[%s771 + $0xc8] sm:$0xff]
      %v798 = vld [vmem:[%s771 + $0xd0] sm:$0xff]
      %v799 = vld [vmem:[%s771 + $0xd8] sm:$0xff]
      %v800 = vld [vmem:[%s771 + $0xe0] sm:$0xff]
      %v801 = vld [vmem:[%s771 + $0xe8] sm:$0xff]
      %v802 = vld [vmem:[%s771 + $0xf0] sm:$0xff]
      %v803 = vld [vmem:[%s771 + $0xf8] sm:$0xff]
      %v836 = vunpack.c.l.b16 %v772
      %v837 = vunpack.c.h.b16 %v772
      %v838 = vunpack.c.l.b16 %v773
      %v839 = vunpack.c.h.b16 %v773
      %v840 = vunpack.c.l.b16 %v774
      %v841 = vunpack.c.h.b16 %v774
      %v842 = vunpack.c.l.b16 %v775
      %v843 = vunpack.c.h.b16 %v775
      %v844 = vunpack.c.l.b16 %v776
      %v845 = vunpack.c.h.b16 %v776
      %v846 = vunpack.c.l.b16 %v777
      %v847 = vunpack.c.h.b16 %v777
      %v848 = vunpack.c.l.b16 %v778
      %v849 = vunpack.c.h.b16 %v778
      %v850 = vunpack.c.l.b16 %v779
      %v851 = vunpack.c.h.b16 %v779
      %v852 = vunpack.c.l.b16 %v780
      %v853 = vunpack.c.h.b16 %v780
      %v854 = vunpack.c.l.b16 %v781
      %v855 = vunpack.c.h.b16 %v781
      %v856 = vunpack.c.l.b16 %v782
      %v857 = vunpack.c.h.b16 %v782
      %v858 = vunpack.c.l.b16 %v783
      %v859 = vunpack.c.h.b16 %v783
      %v860 = vunpack.c.l.b16 %v784
      %v861 = vunpack.c.h.b16 %v784
      %v862 = vunpack.c.l.b16 %v785
      %v863 = vunpack.c.h.b16 %v785
      %v864 = vunpack.c.l.b16 %v786
      %v865 = vunpack.c.h.b16 %v786
      %v866 = vunpack.c.l.b16 %v787
      %v867 = vunpack.c.h.b16 %v787
      %v868 = vunpack.c.l.b16 %v788
      %v869 = vunpack.c.h.b16 %v788
      %v870 = vunpack.c.l.b16 %v789
      %v871 = vunpack.c.h.b16 %v789
      %v872 = vunpack.c.l.b16 %v790
      %v873 = vunpack.c.h.b16 %v790
      %v874 = vunpack.c.l.b16 %v791
      %v875 = vunpack.c.h.b16 %v791
      %v876 = vunpack.c.l.b16 %v792
      %v877 = vunpack.c.h.b16 %v792
      %v878 = vunpack.c.l.b16 %v793
      %v879 = vunpack.c.h.b16 %v793
      %v880 = vunpack.c.l.b16 %v794
      %v881 = vunpack.c.h.b16 %v794
      %v882 = vunpack.c.l.b16 %v795
      %v883 = vunpack.c.h.b16 %v795
      %v884 = vunpack.c.l.b16 %v796
      %v885 = vunpack.c.h.b16 %v796
      %v886 = vunpack.c.l.b16 %v797
      %v887 = vunpack.c.h.b16 %v797
      %v888 = vunpack.c.l.b16 %v798
      %v889 = vunpack.c.h.b16 %v798
      %v890 = vunpack.c.l.b16 %v799
      %v891 = vunpack.c.h.b16 %v799
      %v892 = vunpack.c.l.b16 %v800
      %v893 = vunpack.c.h.b16 %v800
      %v894 = vunpack.c.l.b16 %v801
      %v895 = vunpack.c.h.b16 %v801
      %v896 = vunpack.c.l.b16 %v802
      %v897 = vunpack.c.h.b16 %v802
      %v898 = vunpack.c.l.b16 %v803
      %v899 = vunpack.c.h.b16 %v803
      %v900 = vpack.c.b16 %v838, %v836
      %v901 = vpack.c.b16 %v839, %v837
      %v902 = vpack.c.b16 %v842, %v840
      %v903 = vpack.c.b16 %v843, %v841
      %v904 = vpack.c.b16 %v846, %v844
      %v905 = vpack.c.b16 %v847, %v845
      %v906 = vpack.c.b16 %v850, %v848
      %v907 = vpack.c.b16 %v851, %v849
      %v908 = vpack.c.b16 %v854, %v852
      %v909 = vpack.c.b16 %v855, %v853
      %v910 = vpack.c.b16 %v858, %v856
      %v911 = vpack.c.b16 %v859, %v857
      %v912 = vpack.c.b16 %v862, %v860
      %v913 = vpack.c.b16 %v863, %v861
      %v914 = vpack.c.b16 %v866, %v864
      %v915 = vpack.c.b16 %v867, %v865
      %v916 = vpack.c.b16 %v870, %v868
      %v917 = vpack.c.b16 %v871, %v869
      %v918 = vpack.c.b16 %v874, %v872
      %v919 = vpack.c.b16 %v875, %v873
      %v920 = vpack.c.b16 %v878, %v876
      %v921 = vpack.c.b16 %v879, %v877
      %v922 = vpack.c.b16 %v882, %v880
      %v923 = vpack.c.b16 %v883, %v881
      %v924 = vpack.c.b16 %v886, %v884
      %v925 = vpack.c.b16 %v887, %v885
      %v926 = vpack.c.b16 %v890, %v888
      %v927 = vpack.c.b16 %v891, %v889
      %v928 = vpack.c.b16 %v894, %v892
      %v929 = vpack.c.b16 %v895, %v893
      %v930 = vpack.c.b16 %v898, %v896
      %v931 = vpack.c.b16 %v899, %v897
      %964 = vmatprep.subr.bf16.mxu0 %v901
      %965 = vmatpush1.bf16.msra.mxu0 %v900
      %966 = vmatprep.subr.bf16.mxu0 %v903
      %967 = vmatpush1.bf16.msra.mxu0 %v902
      %968 = vmatprep.subr.bf16.mxu0 %v905
      %969 = vmatpush1.bf16.msra.mxu0 %v904
      %970 = vmatprep.subr.bf16.mxu0 %v907
      %971 = vmatpush1.bf16.msra.mxu0 %v906
      %972 = vmatprep.subr.bf16.mxu0 %v909
      %973 = vmatpush1.bf16.msra.mxu0 %v908
      %974 = vmatprep.subr.bf16.mxu0 %v911
      %975 = vmatpush1.bf16.msra.mxu0 %v910
      %976 = vmatprep.subr.bf16.mxu0 %v913
      %977 = vmatpush1.bf16.msra.mxu0 %v912
      %978 = vmatprep.subr.bf16.mxu0 %v915
      %979 = vmatpush1.bf16.msra.mxu0 %v914
      %980 = vmatprep.subr.bf16.mxu0 %v917
      %981 = vmatpush1.bf16.msra.mxu0 %v916
      %982 = vmatprep.subr.bf16.mxu0 %v919
      %983 = vmatpush1.bf16.msra.mxu0 %v918
      %984 = vmatprep.subr.bf16.mxu0 %v921
      %985 = vmatpush1.bf16.msra.mxu0 %v920
      %986 = vmatprep.subr.bf16.mxu0 %v923
      %987 = vmatpush1.bf16.msra.mxu0 %v922
      %988 = vmatprep.subr.bf16.mxu0 %v925
      %989 = vmatpush1.bf16.msra.mxu0 %v924
      %990 = vmatprep.subr.bf16.mxu0 %v927
      %991 = vmatpush1.bf16.msra.mxu0 %v926
      %992 = vmatprep.subr.bf16.mxu0 %v929
      %993 = vmatpush1.bf16.msra.mxu0 %v928
      %994 = vmatprep.subr.bf16.mxu0 %v931
      %995 = vmatpush1.bf16.msra.mxu0 %v930
      %996 = vmatprep.mubr.bf16.mxu0 %v476
      %997 = vmatmul.mubr.bf16.gmra.mrb[0].mxu0 %v475
      %v998 = vpop.f32.mrb[0].mxu0
      %v999 = vadd.f32 0.0, %v998
      %v1000 = vpop.f32.mrb[0].mxu0
      %v1001 = vadd.f32 0.0, %v1000
      %v1002 = vpop.f32.mrb[0].mxu0
      %v1003 = vadd.f32 0.0, %v1002
      %v1004 = vpop.f32.mrb[0].mxu0
      %v1005 = vadd.f32 0.0, %v1004
      %1006 = vdwg.mxu0
      %v1007 = vpack.c.bf16 %v1003, %v999
      %v1008 = vpack.c.bf16 %v1005, %v1001
      %s1009 = scalar_lea.vmem %s5, 8
      %v1010 = vld [vmem:[%s1009] sm:$0xf]
      %v1011 = vld [vmem:[%s1009 + $0x4] sm:$0xf]
      %v1014 = vunpack.c.l.b16 %v1010
      %v1015 = vunpack.c.l.b16 %v1011
      %v1016 = vpack.c.b16 %v1015, %v1014
      %vm1017 = vcmask 130048
      %v1019 = vsel %vm1017, %v1016, 0
      %1021 = vmatprep.subr.bf16.mxu0 %v1008
      %1022 = vmatpush1.bf16.msra.mxu0 %v1007
      %1023 = vmatprep.subr.bf16.mxu0 0
      %1024 = vmatpush1.bf16.msra.mxu0 0
      %1025 = vmatprep.subr.bf16.mxu0 0
      %1026 = vmatpush1.bf16.msra.mxu0 0
      %1027 = vmatprep.subr.bf16.mxu0 0
      %1028 = vmatpush1.bf16.msra.mxu0 0
      %1029 = vmatprep.subr.bf16.mxu0 0
      %1030 = vmatpush1.bf16.msra.mxu0 0
      %1031 = vmatprep.subr.bf16.mxu0 0
      %1032 = vmatpush1.bf16.msra.mxu0 0
      %1033 = vmatprep.subr.bf16.mxu0 0
      %1034 = vmatpush1.bf16.msra.mxu0 0
      %1035 = vmatprep.subr.bf16.mxu0 0
      %1036 = vmatpush1.bf16.msra.mxu0 0
      %1037 = vmatprep.subr.bf16.mxu0 0
      %1038 = vmatpush1.bf16.msra.mxu0 0
      %1039 = vmatprep.subr.bf16.mxu0 0
      %1040 = vmatpush1.bf16.msra.mxu0 0
      %1041 = vmatprep.subr.bf16.mxu0 0
      %1042 = vmatpush1.bf16.msra.mxu0 0
      %1043 = vmatprep.subr.bf16.mxu0 0
      %1044 = vmatpush1.bf16.msra.mxu0 0
      %1045 = vmatprep.subr.bf16.mxu0 0
      %1046 = vmatpush1.bf16.msra.mxu0 0
      %1047 = vmatprep.subr.bf16.mxu0 0
      %1048 = vmatpush1.bf16.msra.mxu0 0
      %1049 = vmatprep.subr.bf16.mxu0 0
      %1050 = vmatpush1.bf16.msra.mxu0 0
      %1051 = vmatprep.subr.bf16.mxu0 0
      %1052 = vmatpush1.bf16.msra.mxu0 0
      %1053 = vmatprep.mubr.bf16.mxu0 0
      %1054 = vmatmul.mubr.bf16.gmra.mrb[0].mxu0 %v1019
      %v1055 = vpop.f32.mrb[0].mxu0
      %v1056 = vadd.f32 0.0, %v1055
      %v1057 = vpop.f32.mrb[0].mxu0
      %v1058 = vadd.f32 0.0, %v1057
      %v1059 = vpop.f32.mrb[0].mxu0
      %v1060 = vadd.f32 0.0, %v1059
      %v1061 = vpop.f32.mrb[0].mxu0
      %v1062 = vadd.f32 0.0, %v1061
      %1063 = vdwg.mxu0
      %v1066 = vunpack.c.l.b16 %v714
      %v1067 = vunpack.c.l.b16 %v715
      %v1068 = vpack.c.b16 %v1067, %v1066
      %v1070 = vsel %vm1017, %v1068, 0
      %1072 = vmatprep.subr.bf16.mxu0 %v713
      %1073 = vmatpush1.bf16.msra.mxu0 %v712
      %1074 = vmatprep.subr.bf16.mxu0 0
      %1075 = vmatpush1.bf16.msra.mxu0 0
      %1076 = vmatprep.subr.bf16.mxu0 0
      %1077 = vmatpush1.bf16.msra.mxu0 0
      %1078 = vmatprep.subr.bf16.mxu0 0
      %1079 = vmatpush1.bf16.msra.mxu0 0
      %1080 = vmatprep.subr.bf16.mxu0 0
      %1081 = vmatpush1.bf16.msra.mxu0 0
      %1082 = vmatprep.subr.bf16.mxu0 0
      %1083 = vmatpush1.bf16.msra.mxu0 0
      %1084 = vmatprep.subr.bf16.mxu0 0
      %1085 = vmatpush1.bf16.msra.mxu0 0
      %1086 = vmatprep.subr.bf16.mxu0 0
      %1087 = vmatpush1.bf16.msra.mxu0 0
      %1088 = vmatprep.subr.bf16.mxu0 0
      %1089 = vmatpush1.bf16.msra.mxu0 0
      %1090 = vmatprep.subr.bf16.mxu0 0
      %1091 = vmatpush1.bf16.msra.mxu0 0
      %1092 = vmatprep.subr.bf16.mxu0 0
      %1093 = vmatpush1.bf16.msra.mxu0 0
      %1094 = vmatprep.subr.bf16.mxu0 0
      %1095 = vmatpush1.bf16.msra.mxu0 0
      %1096 = vmatprep.subr.bf16.mxu0 0
      %1097 = vmatpush1.bf16.msra.mxu0 0
      %1098 = vmatprep.subr.bf16.mxu0 0
      %1099 = vmatpush1.bf16.msra.mxu0 0
      %1100 = vmatprep.subr.bf16.mxu0 0
      %1101 = vmatpush1.bf16.msra.mxu0 0
      %1102 = vmatprep.subr.bf16.mxu0 0
      %1103 = vmatpush1.bf16.msra.mxu0 0
      %1104 = vmatprep.mubr.bf16.mxu0 0
      %1105 = vmatmul.mubr.bf16.gmra.mrb[0].mxu0 %v1070
      %v1106 = vpop.f32.mrb[0].mxu0
      %v1107 = vadd.f32 %v1056, %v1106
      %v1108 = vpop.f32.mrb[0].mxu0
      %v1109 = vadd.f32 %v1058, %v1108
      %v1110 = vpop.f32.mrb[0].mxu0
      %v1111 = vadd.f32 %v1060, %v1110
      %v1112 = vpop.f32.mrb[0].mxu0
      %v1113 = vadd.f32 %v1062, %v1112
      %1114 = vdwg.mxu0
      %s1115 = scalar_lea.vmem %s2, 2
      %v1116 = vld [vmem:[%s1115] sm:$0x3]
      %v1118 = vlaneseq
      %v1119 = vshrl.u32 %v1118, 7
      %v1120 = vsub.s32 0, %v1119
      %v1121 = vrot.slane %v1116, %v1120
      %v1122 = vlaneseq
      %v1123 = vshrl.u32 %v1122, 7
      %v1124 = vsub.s32 1, %v1123
      %v1125 = vrot.slane %v1116, %v1124
      %1128 = vmatprep.subr.bf16.mxu0 %v901
      %1129 = vmatpush1.bf16.msra.mxu0 %v900
      %1130 = vmatprep.subr.bf16.mxu0 %v903
      %1131 = vmatpush1.bf16.msra.mxu0 %v902
      %1132 = vmatprep.subr.bf16.mxu0 %v905
      %1133 = vmatpush1.bf16.msra.mxu0 %v904
      %1134 = vmatprep.subr.bf16.mxu0 %v907
      %1135 = vmatpush1.bf16.msra.mxu0 %v906
      %1136 = vmatprep.subr.bf16.mxu0 %v909
      %1137 = vmatpush1.bf16.msra.mxu0 %v908
      %1138 = vmatprep.subr.bf16.mxu0 %v911
      %1139 = vmatpush1.bf16.msra.mxu0 %v910
      %1140 = vmatprep.subr.bf16.mxu0 %v913
      %1141 = vmatpush1.bf16.msra.mxu0 %v912
      %1142 = vmatprep.subr.bf16.mxu0 %v915
      %1143 = vmatpush1.bf16.msra.mxu0 %v914
      %1144 = vmatprep.subr.bf16.mxu0 %v917
      %1145 = vmatpush1.bf16.msra.mxu0 %v916
      %1146 = vmatprep.subr.bf16.mxu0 %v919
      %1147 = vmatpush1.bf16.msra.mxu0 %v918
      %1148 = vmatprep.subr.bf16.mxu0 %v921
      %1149 = vmatpush1.bf16.msra.mxu0 %v920
      %1150 = vmatprep.subr.bf16.mxu0 %v923
      %1151 = vmatpush1.bf16.msra.mxu0 %v922
      %1152 = vmatprep.subr.bf16.mxu0 %v925
      %1153 = vmatpush1.bf16.msra.mxu0 %v924
      %1154 = vmatprep.subr.bf16.mxu0 %v927
      %1155 = vmatpush1.bf16.msra.mxu0 %v926
      %1156 = vmatprep.subr.bf16.mxu0 %v929
      %1157 = vmatpush1.bf16.msra.mxu0 %v928
      %1158 = vmatprep.subr.bf16.mxu0 %v931
      %1159 = vmatpush1.bf16.msra.mxu0 %v930
      %1160 = vmatprep.mubr.bf16.mxu0 %v416
      %1161 = vmatmul.mubr.bf16.gmra.mrb[0].mxu0 %v415
      %v1162 = vpop.f32.mrb[0].mxu0
      %v1163 = vadd.f32 %v1121, %v1162
      %v1164 = vpop.f32.mrb[0].mxu0
      %v1165 = vadd.f32 %v1125, %v1164
      %v1166 = vpop.f32.mrb[0].mxu0
      %v1167 = vpop.f32.mrb[0].mxu0
      %1168 = vdwg.mxu0
      %v1169 = vmax.f32 %v765, %v1163
      %v1170 = vmax.f32 %v767, %v1165
      %s1171 = scalar_lea.vmem %s1, 512
      %v1172 = vld [vmem:[%s1171] sm:$0xff]
      %v1173 = vld [vmem:[%s1171 + $0x8] sm:$0xff]
      %v1174 = vld [vmem:[%s1171 + $0x10] sm:$0xff]
      %v1175 = vld [vmem:[%s1171 + $0x18] sm:$0xff]
      %v1176 = vld [vmem:[%s1171 + $0x20] sm:$0xff]
      %v1177 = vld [vmem:[%s1171 + $0x28] sm:$0xff]
      %v1178 = vld [vmem:[%s1171 + $0x30] sm:$0xff]
      %v1179 = vld [vmem:[%s1171 + $0x38] sm:$0xff]
      %v1180 = vld [vmem:[%s1171 + $0x40] sm:$0xff]
      %v1181 = vld [vmem:[%s1171 + $0x48] sm:$0xff]
      %v1182 = vld [vmem:[%s1171 + $0x50] sm:$0xff]
      %v1183 = vld [vmem:[%s1171 + $0x58] sm:$0xff]
      %v1184 = vld [vmem:[%s1171 + $0x60] sm:$0xff]
      %v1185 = vld [vmem:[%s1171 + $0x68] sm:$0xff]
      %v1186 = vld [vmem:[%s1171 + $0x70] sm:$0xff]
      %v1187 = vld [vmem:[%s1171 + $0x78] sm:$0xff]
      %v1188 = vld [vmem:[%s1171 + $0x80] sm:$0xff]
      %v1189 = vld [vmem:[%s1171 + $0x88] sm:$0xff]
      %v1190 = vld [vmem:[%s1171 + $0x90] sm:$0xff]
      %v1191 = vld [vmem:[%s1171 + $0x98] sm:$0xff]
      %v1192 = vld [vmem:[%s1171 + $0xa0] sm:$0xff]
      %v1193 = vld [vmem:[%s1171 + $0xa8] sm:$0xff]
      %v1194 = vld [vmem:[%s1171 + $0xb0] sm:$0xff]
      %v1195 = vld [vmem:[%s1171 + $0xb8] sm:$0xff]
      %v1196 = vld [vmem:[%s1171 + $0xc0] sm:$0xff]
      %v1197 = vld [vmem:[%s1171 + $0xc8] sm:$0xff]
      %v1198 = vld [vmem:[%s1171 + $0xd0] sm:$0xff]
      %v1199 = vld [vmem:[%s1171 + $0xd8] sm:$0xff]
      %v1200 = vld [vmem:[%s1171 + $0xe0] sm:$0xff]
      %v1201 = vld [vmem:[%s1171 + $0xe8] sm:$0xff]
      %v1202 = vld [vmem:[%s1171 + $0xf0] sm:$0xff]
      %v1203 = vld [vmem:[%s1171 + $0xf8] sm:$0xff]
      %v1236 = vunpack.c.l.b16 %v1172
      %v1237 = vunpack.c.h.b16 %v1172
      %v1238 = vunpack.c.l.b16 %v1173
      %v1239 = vunpack.c.h.b16 %v1173
      %v1240 = vunpack.c.l.b16 %v1174
      %v1241 = vunpack.c.h.b16 %v1174
      %v1242 = vunpack.c.l.b16 %v1175
      %v1243 = vunpack.c.h.b16 %v1175
      %v1244 = vunpack.c.l.b16 %v1176
      %v1245 = vunpack.c.h.b16 %v1176
      %v1246 = vunpack.c.l.b16 %v1177
      %v1247 = vunpack.c.h.b16 %v1177
      %v1248 = vunpack.c.l.b16 %v1178
      %v1249 = vunpack.c.h.b16 %v1178
      %v1250 = vunpack.c.l.b16 %v1179
      %v1251 = vunpack.c.h.b16 %v1179
      %v1252 = vunpack.c.l.b16 %v1180
      %v1253 = vunpack.c.h.b16 %v1180
      %v1254 = vunpack.c.l.b16 %v1181
      %v1255 = vunpack.c.h.b16 %v1181
      %v1256 = vunpack.c.l.b16 %v1182
      %v1257 = vunpack.c.h.b16 %v1182
      %v1258 = vunpack.c.l.b16 %v1183
      %v1259 = vunpack.c.h.b16 %v1183
      %v1260 = vunpack.c.l.b16 %v1184
      %v1261 = vunpack.c.h.b16 %v1184
      %v1262 = vunpack.c.l.b16 %v1185
      %v1263 = vunpack.c.h.b16 %v1185
      %v1264 = vunpack.c.l.b16 %v1186
      %v1265 = vunpack.c.h.b16 %v1186
      %v1266 = vunpack.c.l.b16 %v1187
      %v1267 = vunpack.c.h.b16 %v1187
      %v1268 = vunpack.c.l.b16 %v1188
      %v1269 = vunpack.c.h.b16 %v1188
      %v1270 = vunpack.c.l.b16 %v1189
      %v1271 = vunpack.c.h.b16 %v1189
      %v1272 = vunpack.c.l.b16 %v1190
      %v1273 = vunpack.c.h.b16 %v1190
      %v1274 = vunpack.c.l.b16 %v1191
      %v1275 = vunpack.c.h.b16 %v1191
      %v1276 = vunpack.c.l.b16 %v1192
      %v1277 = vunpack.c.h.b16 %v1192
      %v1278 = vunpack.c.l.b16 %v1193
      %v1279 = vunpack.c.h.b16 %v1193
      %v1280 = vunpack.c.l.b16 %v1194
      %v1281 = vunpack.c.h.b16 %v1194
      %v1282 = vunpack.c.l.b16 %v1195
      %v1283 = vunpack.c.h.b16 %v1195
      %v1284 = vunpack.c.l.b16 %v1196
      %v1285 = vunpack.c.h.b16 %v1196
      %v1286 = vunpack.c.l.b16 %v1197
      %v1287 = vunpack.c.h.b16 %v1197
      %v1288 = vunpack.c.l.b16 %v1198
      %v1289 = vunpack.c.h.b16 %v1198
      %v1290 = vunpack.c.l.b16 %v1199
      %v1291 = vunpack.c.h.b16 %v1199
      %v1292 = vunpack.c.l.b16 %v1200
      %v1293 = vunpack.c.h.b16 %v1200
      %v1294 = vunpack.c.l.b16 %v1201
      %v1295 = vunpack.c.h.b16 %v1201
      %v1296 = vunpack.c.l.b16 %v1202
      %v1297 = vunpack.c.h.b16 %v1202
      %v1298 = vunpack.c.l.b16 %v1203
      %v1299 = vunpack.c.h.b16 %v1203
      %v1300 = vpack.c.b16 %v1238, %v1236
      %v1301 = vpack.c.b16 %v1239, %v1237
      %v1302 = vpack.c.b16 %v1242, %v1240
      %v1303 = vpack.c.b16 %v1243, %v1241
      %v1304 = vpack.c.b16 %v1246, %v1244
      %v1305 = vpack.c.b16 %v1247, %v1245
      %v1306 = vpack.c.b16 %v1250, %v1248
      %v1307 = vpack.c.b16 %v1251, %v1249
      %v1308 = vpack.c.b16 %v1254, %v1252
      %v1309 = vpack.c.b16 %v1255, %v1253
      %v1310 = vpack.c.b16 %v1258, %v1256
      %v1311 = vpack.c.b16 %v1259, %v1257
      %v1312 = vpack.c.b16 %v1262, %v1260
      %v1313 = vpack.c.b16 %v1263, %v1261
      %v1314 = vpack.c.b16 %v1266, %v1264
      %v1315 = vpack.c.b16 %v1267, %v1265
      %v1316 = vpack.c.b16 %v1270, %v1268
      %v1317 = vpack.c.b16 %v1271, %v1269
      %v1318 = vpack.c.b16 %v1274, %v1272
      %v1319 = vpack.c.b16 %v1275, %v1273
      %v1320 = vpack.c.b16 %v1278, %v1276
      %v1321 = vpack.c.b16 %v1279, %v1277
      %v1322 = vpack.c.b16 %v1282, %v1280
      %v1323 = vpack.c.b16 %v1283, %v1281
      %v1324 = vpack.c.b16 %v1286, %v1284
      %v1325 = vpack.c.b16 %v1287, %v1285
      %v1326 = vpack.c.b16 %v1290, %v1288
      %v1327 = vpack.c.b16 %v1291, %v1289
      %v1328 = vpack.c.b16 %v1294, %v1292
      %v1329 = vpack.c.b16 %v1295, %v1293
      %v1330 = vpack.c.b16 %v1298, %v1296
      %v1331 = vpack.c.b16 %v1299, %v1297
      %1364 = vmatprep.subr.bf16.mxu0 %v1301
      %1365 = vmatpush1.bf16.msra.mxu0 %v1300
      %1366 = vmatprep.subr.bf16.mxu0 %v1303
      %1367 = vmatpush1.bf16.msra.mxu0 %v1302
      %1368 = vmatprep.subr.bf16.mxu0 %v1305
      %1369 = vmatpush1.bf16.msra.mxu0 %v1304
      %1370 = vmatprep.subr.bf16.mxu0 %v1307
      %1371 = vmatpush1.bf16.msra.mxu0 %v1306
      %1372 = vmatprep.subr.bf16.mxu0 %v1309
      %1373 = vmatpush1.bf16.msra.mxu0 %v1308
      %1374 = vmatprep.subr.bf16.mxu0 %v1311
      %1375 = vmatpush1.bf16.msra.mxu0 %v1310
      %1376 = vmatprep.subr.bf16.mxu0 %v1313
      %1377 = vmatpush1.bf16.msra.mxu0 %v1312
      %1378 = vmatprep.subr.bf16.mxu0 %v1315
      %1379 = vmatpush1.bf16.msra.mxu0 %v1314
      %1380 = vmatprep.subr.bf16.mxu0 %v1317
      %1381 = vmatpush1.bf16.msra.mxu0 %v1316
      %1382 = vmatprep.subr.bf16.mxu0 %v1319
      %1383 = vmatpush1.bf16.msra.mxu0 %v1318
      %1384 = vmatprep.subr.bf16.mxu0 %v1321
      %1385 = vmatpush1.bf16.msra.mxu0 %v1320
      %1386 = vmatprep.subr.bf16.mxu0 %v1323
      %1387 = vmatpush1.bf16.msra.mxu0 %v1322
      %1388 = vmatprep.subr.bf16.mxu0 %v1325
      %1389 = vmatpush1.bf16.msra.mxu0 %v1324
      %1390 = vmatprep.subr.bf16.mxu0 %v1327
      %1391 = vmatpush1.bf16.msra.mxu0 %v1326
      %1392 = vmatprep.subr.bf16.mxu0 %v1329
      %1393 = vmatpush1.bf16.msra.mxu0 %v1328
      %1394 = vmatprep.subr.bf16.mxu0 %v1331
      %1395 = vmatpush1.bf16.msra.mxu0 %v1330
      %1396 = vmatprep.mubr.bf16.mxu0 %v476
      %1397 = vmatmul.mubr.bf16.gmra.mrb[0].mxu0 %v475
      %v1398 = vpop.f32.mrb[0].mxu0
      %v1399 = vadd.f32 0.0, %v1398
      %v1400 = vpop.f32.mrb[0].mxu0
      %v1401 = vadd.f32 0.0, %v1400
      %v1402 = vpop.f32.mrb[0].mxu0
      %v1403 = vadd.f32 0.0, %v1402
      %v1404 = vpop.f32.mrb[0].mxu0
      %v1405 = vadd.f32 0.0, %v1404
      %1406 = vdwg.mxu0
      %v1407 = vpack.c.bf16 %v1403, %v1399
      %v1408 = vpack.c.bf16 %v1405, %v1401
      %s1409 = scalar_lea.vmem %s5, 16
      %v1410 = vld [vmem:[%s1409] sm:$0xf]
      %v1411 = vld [vmem:[%s1409 + $0x4] sm:$0xf]
      %v1414 = vunpack.c.l.b16 %v1410
      %v1415 = vunpack.c.l.b16 %v1411
      %v1416 = vpack.c.b16 %v1415, %v1414
      %v1418 = vsel %vm1017, %v1416, 0
      %1420 = vmatprep.subr.bf16.mxu0 %v1408
      %1421 = vmatpush1.bf16.msra.mxu0 %v1407
      %1422 = vmatprep.subr.bf16.mxu0 0
      %1423 = vmatpush1.bf16.msra.mxu0 0
      %1424 = vmatprep.subr.bf16.mxu0 0
      %1425 = vmatpush1.bf16.msra.mxu0 0
      %1426 = vmatprep.subr.bf16.mxu0 0
      %1427 = vmatpush1.bf16.msra.mxu0 0
      %1428 = vmatprep.subr.bf16.mxu0 0
      %1429 = vmatpush1.bf16.msra.mxu0 0
      %1430 = vmatprep.subr.bf16.mxu0 0
      %1431 = vmatpush1.bf16.msra.mxu0 0
      %1432 = vmatprep.subr.bf16.mxu0 0
      %1433 = vmatpush1.bf16.msra.mxu0 0
      %1434 = vmatprep.subr.bf16.mxu0 0
      %1435 = vmatpush1.bf16.msra.mxu0 0
      %1436 = vmatprep.subr.bf16.mxu0 0
      %1437 = vmatpush1.bf16.msra.mxu0 0
      %1438 = vmatprep.subr.bf16.mxu0 0
      %1439 = vmatpush1.bf16.msra.mxu0 0
      %1440 = vmatprep.subr.bf16.mxu0 0
      %1441 = vmatpush1.bf16.msra.mxu0 0
      %1442 = vmatprep.subr.bf16.mxu0 0
      %1443 = vmatpush1.bf16.msra.mxu0 0
      %1444 = vmatprep.subr.bf16.mxu0 0
      %1445 = vmatpush1.bf16.msra.mxu0 0
      %1446 = vmatprep.subr.bf16.mxu0 0
      %1447 = vmatpush1.bf16.msra.mxu0 0
      %1448 = vmatprep.subr.bf16.mxu0 0
      %1449 = vmatpush1.bf16.msra.mxu0 0
      %1450 = vmatprep.subr.bf16.mxu0 0
      %1451 = vmatpush1.bf16.msra.mxu0 0
      %1452 = vmatprep.mubr.bf16.mxu0 0
      %1453 = vmatmul.mubr.bf16.gmra.mrb[0].mxu0 %v1418
      %v1454 = vpop.f32.mrb[0].mxu0
      %v1455 = vadd.f32 0.0, %v1454
      %v1456 = vpop.f32.mrb[0].mxu0
      %v1457 = vadd.f32 0.0, %v1456
      %v1458 = vpop.f32.mrb[0].mxu0
      %v1459 = vadd.f32 0.0, %v1458
      %v1460 = vpop.f32.mrb[0].mxu0
      %v1461 = vadd.f32 0.0, %v1460
      %1462 = vdwg.mxu0
      %v1463 = vadd.f32 %v1107, %v1455
      %v1464 = vadd.f32 %v1109, %v1457
      %v1465 = vadd.f32 %v1111, %v1459
      %v1466 = vadd.f32 %v1113, %v1461
      %s1467 = scalar_lea.vmem %s2, 4
      %v1468 = vld [vmem:[%s1467] sm:$0x3]
      %v1470 = vlaneseq
      %v1471 = vshrl.u32 %v1470, 7
      %v1472 = vsub.s32 0, %v1471
      %v1473 = vrot.slane %v1468, %v1472
      %v1474 = vlaneseq
      %v1475 = vshrl.u32 %v1474, 7
      %v1476 = vsub.s32 1, %v1475
      %v1477 = vrot.slane %v1468, %v1476
      %1480 = vmatprep.subr.bf16.mxu0 %v1301
      %1481 = vmatpush1.bf16.msra.mxu0 %v1300
      %1482 = vmatprep.subr.bf16.mxu0 %v1303
      %1483 = vmatpush1.bf16.msra.mxu0 %v1302
      %1484 = vmatprep.subr.bf16.mxu0 %v1305
      %1485 = vmatpush1.bf16.msra.mxu0 %v1304
      %1486 = vmatprep.subr.bf16.mxu0 %v1307
      %1487 = vmatpush1.bf16.msra.mxu0 %v1306
      %1488 = vmatprep.subr.bf16.mxu0 %v1309
      %1489 = vmatpush1.bf16.msra.mxu0 %v1308
      %1490 = vmatprep.subr.bf16.mxu0 %v1311
      %1491 = vmatpush1.bf16.msra.mxu0 %v1310
      %1492 = vmatprep.subr.bf16.mxu0 %v1313
      %1493 = vmatpush1.bf16.msra.mxu0 %v1312
      %1494 = vmatprep.subr.bf16.mxu0 %v1315
      %1495 = vmatpush1.bf16.msra.mxu0 %v1314
      %1496 = vmatprep.subr.bf16.mxu0 %v1317
      %1497 = vmatpush1.bf16.msra.mxu0 %v1316
      %1498 = vmatprep.subr.bf16.mxu0 %v1319
      %1499 = vmatpush1.bf16.msra.mxu0 %v1318
      %1500 = vmatprep.subr.bf16.mxu0 %v1321
      %1501 = vmatpush1.bf16.msra.mxu0 %v1320
      %1502 = vmatprep.subr.bf16.mxu0 %v1323
      %1503 = vmatpush1.bf16.msra.mxu0 %v1322
      %1504 = vmatprep.subr.bf16.mxu0 %v1325
      %1505 = vmatpush1.bf16.msra.mxu0 %v1324
      %1506 = vmatprep.subr.bf16.mxu0 %v1327
      %1507 = vmatpush1.bf16.msra.mxu0 %v1326
      %1508 = vmatprep.subr.bf16.mxu0 %v1329
      %1509 = vmatpush1.bf16.msra.mxu0 %v1328
      %1510 = vmatprep.subr.bf16.mxu0 %v1331
      %1511 = vmatpush1.bf16.msra.mxu0 %v1330
      %1512 = vmatprep.mubr.bf16.mxu0 %v416
      %1513 = vmatmul.mubr.bf16.gmra.mrb[0].mxu0 %v415
      %v1514 = vpop.f32.mrb[0].mxu0
      %v1515 = vadd.f32 %v1473, %v1514
      %v1516 = vpop.f32.mrb[0].mxu0
      %v1517 = vadd.f32 %v1477, %v1516
      %v1518 = vpop.f32.mrb[0].mxu0
      %v1519 = vpop.f32.mrb[0].mxu0
      %1520 = vdwg.mxu0
      %v1521 = vmax.f32 %v1169, %v1515
      %v1522 = vmax.f32 %v1170, %v1517
      %s1523 = scalar_lea.vmem %s1, 768
      %v1524 = vld [vmem:[%s1523] sm:$0xff]
      %v1525 = vld [vmem:[%s1523 + $0x8] sm:$0xff]
      %v1526 = vld [vmem:[%s1523 + $0x10] sm:$0xff]
      %v1527 = vld [vmem:[%s1523 + $0x18] sm:$0xff]
      %v1528 = vld [vmem:[%s1523 + $0x20] sm:$0xff]
      %v1529 = vld [vmem:[%s1523 + $0x28] sm:$0xff]
      %v1530 = vld [vmem:[%s1523 + $0x30] sm:$0xff]
      %v1531 = vld [vmem:[%s1523 + $0x38] sm:$0xff]
      %v1532 = vld [vmem:[%s1523 + $0x40] sm:$0xff]
      %v1533 = vld [vmem:[%s1523 + $0x48] sm:$0xff]
      %v1534 = vld [vmem:[%s1523 + $0x50] sm:$0xff]
      %v1535 = vld [vmem:[%s1523 + $0x58] sm:$0xff]
      %v1536 = vld [vmem:[%s1523 + $0x60] sm:$0xff]
      %v1537 = vld [vmem:[%s1523 + $0x68] sm:$0xff]
      %v1538 = vld [vmem:[%s1523 + $0x70] sm:$0xff]
      %v1539 = vld [vmem:[%s1523 + $0x78] sm:$0xff]
      %v1540 = vld [vmem:[%s1523 + $0x80] sm:$0xff]
      %v1541 = vld [vmem:[%s1523 + $0x88] sm:$0xff]
      %v1542 = vld [vmem:[%s1523 + $0x90] sm:$0xff]
      %v1543 = vld [vmem:[%s1523 + $0x98] sm:$0xff]
      %v1544 = vld [vmem:[%s1523 + $0xa0] sm:$0xff]
      %v1545 = vld [vmem:[%s1523 + $0xa8] sm:$0xff]
      %v1546 = vld [vmem:[%s1523 + $0xb0] sm:$0xff]
      %v1547 = vld [vmem:[%s1523 + $0xb8] sm:$0xff]
      %v1548 = vld [vmem:[%s1523 + $0xc0] sm:$0xff]
      %v1549 = vld [vmem:[%s1523 + $0xc8] sm:$0xff]
      %v1550 = vld [vmem:[%s1523 + $0xd0] sm:$0xff]
      %v1551 = vld [vmem:[%s1523 + $0xd8] sm:$0xff]
      %v1552 = vld [vmem:[%s1523 + $0xe0] sm:$0xff]
      %v1553 = vld [vmem:[%s1523 + $0xe8] sm:$0xff]
      %v1554 = vld [vmem:[%s1523 + $0xf0] sm:$0xff]
      %v1555 = vld [vmem:[%s1523 + $0xf8] sm:$0xff]
      %v1588 = vunpack.c.l.b16 %v1524
      %v1589 = vunpack.c.h.b16 %v1524
      %v1590 = vunpack.c.l.b16 %v1525
      %v1591 = vunpack.c.h.b16 %v1525
      %v1592 = vunpack.c.l.b16 %v1526
      %v1593 = vunpack.c.h.b16 %v1526
      %v1594 = vunpack.c.l.b16 %v1527
      %v1595 = vunpack.c.h.b16 %v1527
      %v1596 = vunpack.c.l.b16 %v1528
      %v1597 = vunpack.c.h.b16 %v1528
      %v1598 = vunpack.c.l.b16 %v1529
      %v1599 = vunpack.c.h.b16 %v1529
      %v1600 = vunpack.c.l.b16 %v1530
      %v1601 = vunpack.c.h.b16 %v1530
      %v1602 = vunpack.c.l.b16 %v1531
      %v1603 = vunpack.c.h.b16 %v1531
      %v1604 = vunpack.c.l.b16 %v1532
      %v1605 = vunpack.c.h.b16 %v1532
      %v1606 = vunpack.c.l.b16 %v1533
      %v1607 = vunpack.c.h.b16 %v1533
      %v1608 = vunpack.c.l.b16 %v1534
      %v1609 = vunpack.c.h.b16 %v1534
      %v1610 = vunpack.c.l.b16 %v1535
      %v1611 = vunpack.c.h.b16 %v1535
      %v1612 = vunpack.c.l.b16 %v1536
      %v1613 = vunpack.c.h.b16 %v1536
      %v1614 = vunpack.c.l.b16 %v1537
      %v1615 = vunpack.c.h.b16 %v1537
      %v1616 = vunpack.c.l.b16 %v1538
      %v1617 = vunpack.c.h.b16 %v1538
      %v1618 = vunpack.c.l.b16 %v1539
      %v1619 = vunpack.c.h.b16 %v1539
      %v1620 = vunpack.c.l.b16 %v1540
      %v1621 = vunpack.c.h.b16 %v1540
      %v1622 = vunpack.c.l.b16 %v1541
      %v1623 = vunpack.c.h.b16 %v1541
      %v1624 = vunpack.c.l.b16 %v1542
      %v1625 = vunpack.c.h.b16 %v1542
      %v1626 = vunpack.c.l.b16 %v1543
      %v1627 = vunpack.c.h.b16 %v1543
      %v1628 = vunpack.c.l.b16 %v1544
      %v1629 = vunpack.c.h.b16 %v1544
      %v1630 = vunpack.c.l.b16 %v1545
      %v1631 = vunpack.c.h.b16 %v1545
      %v1632 = vunpack.c.l.b16 %v1546
      %v1633 = vunpack.c.h.b16 %v1546
      %v1634 = vunpack.c.l.b16 %v1547
      %v1635 = vunpack.c.h.b16 %v1547
      %v1636 = vunpack.c.l.b16 %v1548
      %v1637 = vunpack.c.h.b16 %v1548
      %v1638 = vunpack.c.l.b16 %v1549
      %v1639 = vunpack.c.h.b16 %v1549
      %v1640 = vunpack.c.l.b16 %v1550
      %v1641 = vunpack.c.h.b16 %v1550
      %v1642 = vunpack.c.l.b16 %v1551
      %v1643 = vunpack.c.h.b16 %v1551
      %v1644 = vunpack.c.l.b16 %v1552
      %v1645 = vunpack.c.h.b16 %v1552
      %v1646 = vunpack.c.l.b16 %v1553
      %v1647 = vunpack.c.h.b16 %v1553
      %v1648 = vunpack.c.l.b16 %v1554
      %v1649 = vunpack.c.h.b16 %v1554
      %v1650 = vunpack.c.l.b16 %v1555
      %v1651 = vunpack.c.h.b16 %v1555
      %v1652 = vpack.c.b16 %v1590, %v1588
      %v1653 = vpack.c.b16 %v1591, %v1589
      %v1654 = vpack.c.b16 %v1594, %v1592
      %v1655 = vpack.c.b16 %v1595, %v1593
      %v1656 = vpack.c.b16 %v1598, %v1596
      %v1657 = vpack.c.b16 %v1599, %v1597
      %v1658 = vpack.c.b16 %v1602, %v1600
      %v1659 = vpack.c.b16 %v1603, %v1601
      %v1660 = vpack.c.b16 %v1606, %v1604
      %v1661 = vpack.c.b16 %v1607, %v1605
      %v1662 = vpack.c.b16 %v1610, %v1608
      %v1663 = vpack.c.b16 %v1611, %v1609
      %v1664 = vpack.c.b16 %v1614, %v1612
      %v1665 = vpack.c.b16 %v1615, %v1613
      %v1666 = vpack.c.b16 %v1618, %v1616
      %v1667 = vpack.c.b16 %v1619, %v1617
      %v1668 = vpack.c.b16 %v1622, %v1620
      %v1669 = vpack.c.b16 %v1623, %v1621
      %v1670 = vpack.c.b16 %v1626, %v1624
      %v1671 = vpack.c.b16 %v1627, %v1625
      %v1672 = vpack.c.b16 %v1630, %v1628
      %v1673 = vpack.c.b16 %v1631, %v1629
      %v1674 = vpack.c.b16 %v1634, %v1632
      %v1675 = vpack.c.b16 %v1635, %v1633
      %v1676 = vpack.c.b16 %v1638, %v1636
      %v1677 = vpack.c.b16 %v1639, %v1637
      %v1678 = vpack.c.b16 %v1642, %v1640
      %v1679 = vpack.c.b16 %v1643, %v1641
      %v1680 = vpack.c.b16 %v1646, %v1644
      %v1681 = vpack.c.b16 %v1647, %v1645
      %v1682 = vpack.c.b16 %v1650, %v1648
      %v1683 = vpack.c.b16 %v1651, %v1649
      %1716 = vmatprep.subr.bf16.mxu0 %v1653
      %1717 = vmatpush1.bf16.msra.mxu0 %v1652
      %1718 = vmatprep.subr.bf16.mxu0 %v1655
      %1719 = vmatpush1.bf16.msra.mxu0 %v1654
      %1720 = vmatprep.subr.bf16.mxu0 %v1657
      %1721 = vmatpush1.bf16.msra.mxu0 %v1656
      %1722 = vmatprep.subr.bf16.mxu0 %v1659
      %1723 = vmatpush1.bf16.msra.mxu0 %v1658
      %1724 = vmatprep.subr.bf16.mxu0 %v1661
      %1725 = vmatpush1.bf16.msra.mxu0 %v1660
      %1726 = vmatprep.subr.bf16.mxu0 %v1663
      %1727 = vmatpush1.bf16.msra.mxu0 %v1662
      %1728 = vmatprep.subr.bf16.mxu0 %v1665
      %1729 = vmatpush1.bf16.msra.mxu0 %v1664
      %1730 = vmatprep.subr.bf16.mxu0 %v1667
      %1731 = vmatpush1.bf16.msra.mxu0 %v1666
      %1732 = vmatprep.subr.bf16.mxu0 %v1669
      %1733 = vmatpush1.bf16.msra.mxu0 %v1668
      %1734 = vmatprep.subr.bf16.mxu0 %v1671
      %1735 = vmatpush1.bf16.msra.mxu0 %v1670
      %1736 = vmatprep.subr.bf16.mxu0 %v1673
      %1737 = vmatpush1.bf16.msra.mxu0 %v1672
      %1738 = vmatprep.subr.bf16.mxu0 %v1675
      %1739 = vmatpush1.bf16.msra.mxu0 %v1674
      %1740 = vmatprep.subr.bf16.mxu0 %v1677
      %1741 = vmatpush1.bf16.msra.mxu0 %v1676
      %1742 = vmatprep.subr.bf16.mxu0 %v1679
      %1743 = vmatpush1.bf16.msra.mxu0 %v1678
      %1744 = vmatprep.subr.bf16.mxu0 %v1681
      %1745 = vmatpush1.bf16.msra.mxu0 %v1680
      %1746 = vmatprep.subr.bf16.mxu0 %v1683
      %1747 = vmatpush1.bf16.msra.mxu0 %v1682
      %1748 = vmatprep.mubr.bf16.mxu0 %v476
      %1749 = vmatmul.mubr.bf16.gmra.mrb[0].mxu0 %v475
      %v1750 = vpop.f32.mrb[0].mxu0
      %v1751 = vadd.f32 0.0, %v1750
      %v1752 = vpop.f32.mrb[0].mxu0
      %v1753 = vadd.f32 0.0, %v1752
      %v1754 = vpop.f32.mrb[0].mxu0
      %v1755 = vadd.f32 0.0, %v1754
      %v1756 = vpop.f32.mrb[0].mxu0
      %v1757 = vadd.f32 0.0, %v1756
      %1758 = vdwg.mxu0
      %v1759 = vpack.c.bf16 %v1755, %v1751
      %v1760 = vpack.c.bf16 %v1757, %v1753
      %s1761 = scalar_lea.vmem %s5, 24
      %v1762 = vld [vmem:[%s1761] sm:$0xf]
      %v1763 = vld [vmem:[%s1761 + $0x4] sm:$0xf]
      %v1766 = vunpack.c.l.b16 %v1762
      %v1767 = vunpack.c.l.b16 %v1763
      %v1768 = vpack.c.b16 %v1767, %v1766
      %v1770 = vsel %vm1017, %v1768, 0
      %1772 = vmatprep.subr.bf16.mxu0 %v1760
      %1773 = vmatpush1.bf16.msra.mxu0 %v1759
      %1774 = vmatprep.subr.bf16.mxu0 0
      %1775 = vmatpush1.bf16.msra.mxu0 0
      %1776 = vmatprep.subr.bf16.mxu0 0
      %1777 = vmatpush1.bf16.msra.mxu0 0
      %1778 = vmatprep.subr.bf16.mxu0 0
      %1779 = vmatpush1.bf16.msra.mxu0 0
      %1780 = vmatprep.subr.bf16.mxu0 0
      %1781 = vmatpush1.bf16.msra.mxu0 0
      %1782 = vmatprep.subr.bf16.mxu0 0
      %1783 = vmatpush1.bf16.msra.mxu0 0
      %1784 = vmatprep.subr.bf16.mxu0 0
      %1785 = vmatpush1.bf16.msra.mxu0 0
      %1786 = vmatprep.subr.bf16.mxu0 0
      %1787 = vmatpush1.bf16.msra.mxu0 0
      %1788 = vmatprep.subr.bf16.mxu0 0
      %1789 = vmatpush1.bf16.msra.mxu0 0
      %1790 = vmatprep.subr.bf16.mxu0 0
      %1791 = vmatpush1.bf16.msra.mxu0 0
      %1792 = vmatprep.subr.bf16.mxu0 0
      %1793 = vmatpush1.bf16.msra.mxu0 0
      %1794 = vmatprep.subr.bf16.mxu0 0
      %1795 = vmatpush1.bf16.msra.mxu0 0
      %1796 = vmatprep.subr.bf16.mxu0 0
      %1797 = vmatpush1.bf16.msra.mxu0 0
      %1798 = vmatprep.subr.bf16.mxu0 0
      %1799 = vmatpush1.bf16.msra.mxu0 0
      %1800 = vmatprep.subr.bf16.mxu0 0
      %1801 = vmatpush1.bf16.msra.mxu0 0
      %1802 = vmatprep.subr.bf16.mxu0 0
      %1803 = vmatpush1.bf16.msra.mxu0 0
      %1804 = vmatprep.mubr.bf16.mxu0 0
      %1805 = vmatmul.mubr.bf16.gmra.mrb[0].mxu0 %v1770
      %v1806 = vpop.f32.mrb[0].mxu0
      %v1807 = vadd.f32 0.0, %v1806
      %v1808 = vpop.f32.mrb[0].mxu0
      %v1809 = vadd.f32 0.0, %v1808
      %v1810 = vpop.f32.mrb[0].mxu0
      %v1811 = vadd.f32 0.0, %v1810
      %v1812 = vpop.f32.mrb[0].mxu0
      %v1813 = vadd.f32 0.0, %v1812
      %1814 = vdwg.mxu0
      %v1815 = vadd.f32 %v1463, %v1807
      %v1816 = vadd.f32 %v1464, %v1809
      %v1817 = vadd.f32 %v1465, %v1811
      %v1818 = vadd.f32 %v1466, %v1813
      %s1819 = scalar_lea.vmem %s2, 6
      %v1820 = vld [vmem:[%s1819] sm:$0x3]
      %v1822 = vlaneseq
      %v1823 = vshrl.u32 %v1822, 7
      %v1824 = vsub.s32 0, %v1823
      %v1825 = vrot.slane %v1820, %v1824
      %v1826 = vlaneseq
      %v1827 = vshrl.u32 %v1826, 7
      %v1828 = vsub.s32 1, %v1827
      %v1829 = vrot.slane %v1820, %v1828
      %1832 = vmatprep.subr.bf16.mxu0 %v1653
      %1833 = vmatpush1.bf16.msra.mxu0 %v1652
      %1834 = vmatprep.subr.bf16.mxu0 %v1655
      %1835 = vmatpush1.bf16.msra.mxu0 %v1654
      %1836 = vmatprep.subr.bf16.mxu0 %v1657
      %1837 = vmatpush1.bf16.msra.mxu0 %v1656
      %1838 = vmatprep.subr.bf16.mxu0 %v1659
      %1839 = vmatpush1.bf16.msra.mxu0 %v1658
      %1840 = vmatprep.subr.bf16.mxu0 %v1661
      %1841 = vmatpush1.bf16.msra.mxu0 %v1660
      %1842 = vmatprep.subr.bf16.mxu0 %v1663
      %1843 = vmatpush1.bf16.msra.mxu0 %v1662
      %1844 = vmatprep.subr.bf16.mxu0 %v1665
      %1845 = vmatpush1.bf16.msra.mxu0 %v1664
      %1846 = vmatprep.subr.bf16.mxu0 %v1667
      %1847 = vmatpush1.bf16.msra.mxu0 %v1666
      %1848 = vmatprep.subr.bf16.mxu0 %v1669
      %1849 = vmatpush1.bf16.msra.mxu0 %v1668
      %1850 = vmatprep.subr.bf16.mxu0 %v1671
      %1851 = vmatpush1.bf16.msra.mxu0 %v1670
      %1852 = vmatprep.subr.bf16.mxu0 %v1673
      %1853 = vmatpush1.bf16.msra.mxu0 %v1672
      %1854 = vmatprep.subr.bf16.mxu0 %v1675
      %1855 = vmatpush1.bf16.msra.mxu0 %v1674
      %1856 = vmatprep.subr.bf16.mxu0 %v1677
      %1857 = vmatpush1.bf16.msra.mxu0 %v1676
      %1858 = vmatprep.subr.bf16.mxu0 %v1679
      %1859 = vmatpush1.bf16.msra.mxu0 %v1678
      %1860 = vmatprep.subr.bf16.mxu0 %v1681
      %1861 = vmatpush1.bf16.msra.mxu0 %v1680
      %1862 = vmatprep.subr.bf16.mxu0 %v1683
      %1863 = vmatpush1.bf16.msra.mxu0 %v1682
      %1864 = vmatprep.mubr.bf16.mxu0 %v416
      %1865 = vmatmul.mubr.bf16.gmra.mrb[0].mxu0 %v415
      %v1866 = vpop.f32.mrb[0].mxu0
      %v1867 = vadd.f32 %v1825, %v1866
      %v1868 = vpop.f32.mrb[0].mxu0
      %v1869 = vadd.f32 %v1829, %v1868
      %v1870 = vpop.f32.mrb[0].mxu0
      %v1871 = vpop.f32.mrb[0].mxu0
      %1872 = vdwg.mxu0
      %v1873 = vmax.f32 %v1521, %v1867
      %v1874 = vmax.f32 %v1522, %v1869
      %s1875 = scalar_lea.vmem %s1, 1024
      %v1876 = vld [vmem:[%s1875] sm:$0xff]
      %v1877 = vld [vmem:[%s1875 + $0x8] sm:$0xff]
      %v1878 = vld [vmem:[%s1875 + $0x10] sm:$0xff]
      %v1879 = vld [vmem:[%s1875 + $0x18] sm:$0xff]
      %v1880 = vld [vmem:[%s1875 + $0x20] sm:$0xff]
      %v1881 = vld [vmem:[%s1875 + $0x28] sm:$0xff]
      %v1882 = vld [vmem:[%s1875 + $0x30] sm:$0xff]
      %v1883 = vld [vmem:[%s1875 + $0x38] sm:$0xff]
      %v1884 = vld [vmem:[%s1875 + $0x40] sm:$0xff]
      %v1885 = vld [vmem:[%s1875 + $0x48] sm:$0xff]
      %v1886 = vld [vmem:[%s1875 + $0x50] sm:$0xff]
      %v1887 = vld [vmem:[%s1875 + $0x58] sm:$0xff]
      %v1888 = vld [vmem:[%s1875 + $0x60] sm:$0xff]
      %v1889 = vld [vmem:[%s1875 + $0x68] sm:$0xff]
      %v1890 = vld [vmem:[%s1875 + $0x70] sm:$0xff]
      %v1891 = vld [vmem:[%s1875 + $0x78] sm:$0xff]
      %v1892 = vld [vmem:[%s1875 + $0x80] sm:$0xff]
      %v1893 = vld [vmem:[%s1875 + $0x88] sm:$0xff]
      %v1894 = vld [vmem:[%s1875 + $0x90] sm:$0xff]
      %v1895 = vld [vmem:[%s1875 + $0x98] sm:$0xff]
      %v1896 = vld [vmem:[%s1875 + $0xa0] sm:$0xff]
      %v1897 = vld [vmem:[%s1875 + $0xa8] sm:$0xff]
      %v1898 = vld [vmem:[%s1875 + $0xb0] sm:$0xff]
      %v1899 = vld [vmem:[%s1875 + $0xb8] sm:$0xff]
      %v1900 = vld [vmem:[%s1875 + $0xc0] sm:$0xff]
      %v1901 = vld [vmem:[%s1875 + $0xc8] sm:$0xff]
      %v1902 = vld [vmem:[%s1875 + $0xd0] sm:$0xff]
      %v1903 = vld [vmem:[%s1875 + $0xd8] sm:$0xff]
      %v1904 = vld [vmem:[%s1875 + $0xe0] sm:$0xff]
      %v1905 = vld [vmem:[%s1875 + $0xe8] sm:$0xff]
      %v1906 = vld [vmem:[%s1875 + $0xf0] sm:$0xff]
      %v1907 = vld [vmem:[%s1875 + $0xf8] sm:$0xff]
      %v1940 = vunpack.c.l.b16 %v1876
      %v1941 = vunpack.c.h.b16 %v1876
      %v1942 = vunpack.c.l.b16 %v1877
      %v1943 = vunpack.c.h.b16 %v1877
      %v1944 = vunpack.c.l.b16 %v1878
      %v1945 = vunpack.c.h.b16 %v1878
      %v1946 = vunpack.c.l.b16 %v1879
      %v1947 = vunpack.c.h.b16 %v1879
      %v1948 = vunpack.c.l.b16 %v1880
      %v1949 = vunpack.c.h.b16 %v1880
      %v1950 = vunpack.c.l.b16 %v1881
      %v1951 = vunpack.c.h.b16 %v1881
      %v1952 = vunpack.c.l.b16 %v1882
      %v1953 = vunpack.c.h.b16 %v1882
      %v1954 = vunpack.c.l.b16 %v1883
      %v1955 = vunpack.c.h.b16 %v1883
      %v1956 = vunpack.c.l.b16 %v1884
      %v1957 = vunpack.c.h.b16 %v1884
      %v1958 = vunpack.c.l.b16 %v1885
      %v1959 = vunpack.c.h.b16 %v1885
      %v1960 = vunpack.c.l.b16 %v1886
      %v1961 = vunpack.c.h.b16 %v1886
      %v1962 = vunpack.c.l.b16 %v1887
      %v1963 = vunpack.c.h.b16 %v1887
      %v1964 = vunpack.c.l.b16 %v1888
      %v1965 = vunpack.c.h.b16 %v1888
      %v1966 = vunpack.c.l.b16 %v1889
      %v1967 = vunpack.c.h.b16 %v1889
      %v1968 = vunpack.c.l.b16 %v1890
      %v1969 = vunpack.c.h.b16 %v1890
      %v1970 = vunpack.c.l.b16 %v1891
      %v1971 = vunpack.c.h.b16 %v1891
      %v1972 = vunpack.c.l.b16 %v1892
      %v1973 = vunpack.c.h.b16 %v1892
      %v1974 = vunpack.c.l.b16 %v1893
      %v1975 = vunpack.c.h.b16 %v1893
      %v1976 = vunpack.c.l.b16 %v1894
      %v1977 = vunpack.c.h.b16 %v1894
      %v1978 = vunpack.c.l.b16 %v1895
      %v1979 = vunpack.c.h.b16 %v1895
      %v1980 = vunpack.c.l.b16 %v1896
      %v1981 = vunpack.c.h.b16 %v1896
      %v1982 = vunpack.c.l.b16 %v1897
      %v1983 = vunpack.c.h.b16 %v1897
      %v1984 = vunpack.c.l.b16 %v1898
      %v1985 = vunpack.c.h.b16 %v1898
      %v1986 = vunpack.c.l.b16 %v1899
      %v1987 = vunpack.c.h.b16 %v1899
      %v1988 = vunpack.c.l.b16 %v1900
      %v1989 = vunpack.c.h.b16 %v1900
      %v1990 = vunpack.c.l.b16 %v1901
      %v1991 = vunpack.c.h.b16 %v1901
      %v1992 = vunpack.c.l.b16 %v1902
      %v1993 = vunpack.c.h.b16 %v1902
      %v1994 = vunpack.c.l.b16 %v1903
      %v1995 = vunpack.c.h.b16 %v1903
      %v1996 = vunpack.c.l.b16 %v1904
      %v1997 = vunpack.c.h.b16 %v1904
      %v1998 = vunpack.c.l.b16 %v1905
      %v1999 = vunpack.c.h.b16 %v1905
      %v2000 = vunpack.c.l.b16 %v1906
      %v2001 = vunpack.c.h.b16 %v1906
      %v2002 = vunpack.c.l.b16 %v1907
      %v2003 = vunpack.c.h.b16 %v1907
      %v2004 = vpack.c.b16 %v1942, %v1940
      %v2005 = vpack.c.b16 %v1943, %v1941
      %v2006 = vpack.c.b16 %v1946, %v1944
      %v2007 = vpack.c.b16 %v1947, %v1945
      %v2008 = vpack.c.b16 %v1950, %v1948
      %v2009 = vpack.c.b16 %v1951, %v1949
      %v2010 = vpack.c.b16 %v1954, %v1952
      %v2011 = vpack.c.b16 %v1955, %v1953
      %v2012 = vpack.c.b16 %v1958, %v1956
      %v2013 = vpack.c.b16 %v1959, %v1957
      %v2014 = vpack.c.b16 %v1962, %v1960
      %v2015 = vpack.c.b16 %v1963, %v1961
      %v2016 = vpack.c.b16 %v1966, %v1964
      %v2017 = vpack.c.b16 %v1967, %v1965
      %v2018 = vpack.c.b16 %v1970, %v1968
      %v2019 = vpack.c.b16 %v1971, %v1969
      %v2020 = vpack.c.b16 %v1974, %v1972
      %v2021 = vpack.c.b16 %v1975, %v1973
      %v2022 = vpack.c.b16 %v1978, %v1976
      %v2023 = vpack.c.b16 %v1979, %v1977
      %v2024 = vpack.c.b16 %v1982, %v1980
      %v2025 = vpack.c.b16 %v1983, %v1981
      %v2026 = vpack.c.b16 %v1986, %v1984
      %v2027 = vpack.c.b16 %v1987, %v1985
      %v2028 = vpack.c.b16 %v1990, %v1988
      %v2029 = vpack.c.b16 %v1991, %v1989
      %v2030 = vpack.c.b16 %v1994, %v1992
      %v2031 = vpack.c.b16 %v1995, %v1993
      %v2032 = vpack.c.b16 %v1998, %v1996
      %v2033 = vpack.c.b16 %v1999, %v1997
      %v2034 = vpack.c.b16 %v2002, %v2000
      %v2035 = vpack.c.b16 %v2003, %v2001
      %2068 = vmatprep.subr.bf16.mxu0 %v2005
      %2069 = vmatpush1.bf16.msra.mxu0 %v2004
      %2070 = vmatprep.subr.bf16.mxu0 %v2007
      %2071 = vmatpush1.bf16.msra.mxu0 %v2006
      %2072 = vmatprep.subr.bf16.mxu0 %v2009
      %2073 = vmatpush1.bf16.msra.mxu0 %v2008
      %2074 = vmatprep.subr.bf16.mxu0 %v2011
      %2075 = vmatpush1.bf16.msra.mxu0 %v2010
      %2076 = vmatprep.subr.bf16.mxu0 %v2013
      %2077 = vmatpush1.bf16.msra.mxu0 %v2012
      %2078 = vmatprep.subr.bf16.mxu0 %v2015
      %2079 = vmatpush1.bf16.msra.mxu0 %v2014
      %2080 = vmatprep.subr.bf16.mxu0 %v2017
      %2081 = vmatpush1.bf16.msra.mxu0 %v2016
      %2082 = vmatprep.subr.bf16.mxu0 %v2019
      %2083 = vmatpush1.bf16.msra.mxu0 %v2018
      %2084 = vmatprep.subr.bf16.mxu0 %v2021
      %2085 = vmatpush1.bf16.msra.mxu0 %v2020
      %2086 = vmatprep.subr.bf16.mxu0 %v2023
      %2087 = vmatpush1.bf16.msra.mxu0 %v2022
      %2088 = vmatprep.subr.bf16.mxu0 %v2025
      %2089 = vmatpush1.bf16.msra.mxu0 %v2024
      %2090 = vmatprep.subr.bf16.mxu0 %v2027
      %2091 = vmatpush1.bf16.msra.mxu0 %v2026
      %2092 = vmatprep.subr.bf16.mxu0 %v2029
      %2093 = vmatpush1.bf16.msra.mxu0 %v2028
      %2094 = vmatprep.subr.bf16.mxu0 %v2031
      %2095 = vmatpush1.bf16.msra.mxu0 %v2030
      %2096 = vmatprep.subr.bf16.mxu0 %v2033
      %2097 = vmatpush1.bf16.msra.mxu0 %v2032
      %2098 = vmatprep.subr.bf16.mxu0 %v2035
      %2099 = vmatpush1.bf16.msra.mxu0 %v2034
      %2100 = vmatprep.mubr.bf16.mxu0 %v476
      %2101 = vmatmul.mubr.bf16.gmra.mrb[0].mxu0 %v475
      %v2102 = vpop.f32.mrb[0].mxu0
      %v2103 = vadd.f32 0.0, %v2102
      %v2104 = vpop.f32.mrb[0].mxu0
      %v2105 = vadd.f32 0.0, %v2104
      %v2106 = vpop.f32.mrb[0].mxu0
      %v2107 = vadd.f32 0.0, %v2106
      %v2108 = vpop.f32.mrb[0].mxu0
      %v2109 = vadd.f32 0.0, %v2108
      %2110 = vdwg.mxu0
      %v2111 = vpack.c.bf16 %v2107, %v2103
      %v2112 = vpack.c.bf16 %v2109, %v2105
      %s2113 = scalar_lea.vmem %s5, 32
      %v2114 = vld [vmem:[%s2113] sm:$0xf]
      %v2115 = vld [vmem:[%s2113 + $0x4] sm:$0xf]
      %v2118 = vunpack.c.l.b16 %v2114
      %v2119 = vunpack.c.l.b16 %v2115
      %v2120 = vpack.c.b16 %v2119, %v2118
      %v2122 = vsel %vm1017, %v2120, 0
      %2124 = vmatprep.subr.bf16.mxu0 %v2112
      %2125 = vmatpush1.bf16.msra.mxu0 %v2111
      %2126 = vmatprep.subr.bf16.mxu0 0
      %2127 = vmatpush1.bf16.msra.mxu0 0
      %2128 = vmatprep.subr.bf16.mxu0 0
      %2129 = vmatpush1.bf16.msra.mxu0 0
      %2130 = vmatprep.subr.bf16.mxu0 0
      %2131 = vmatpush1.bf16.msra.mxu0 0
      %2132 = vmatprep.subr.bf16.mxu0 0
      %2133 = vmatpush1.bf16.msra.mxu0 0
      %2134 = vmatprep.subr.bf16.mxu0 0
      %2135 = vmatpush1.bf16.msra.mxu0 0
      %2136 = vmatprep.subr.bf16.mxu0 0
      %2137 = vmatpush1.bf16.msra.mxu0 0
      %2138 = vmatprep.subr.bf16.mxu0 0
      %2139 = vmatpush1.bf16.msra.mxu0 0
      %2140 = vmatprep.subr.bf16.mxu0 0
      %2141 = vmatpush1.bf16.msra.mxu0 0
      %2142 = vmatprep.subr.bf16.mxu0 0
      %2143 = vmatpush1.bf16.msra.mxu0 0
      %2144 = vmatprep.subr.bf16.mxu0 0
      %2145 = vmatpush1.bf16.msra.mxu0 0
      %2146 = vmatprep.subr.bf16.mxu0 0
      %2147 = vmatpush1.bf16.msra.mxu0 0
      %2148 = vmatprep.subr.bf16.mxu0 0
      %2149 = vmatpush1.bf16.msra.mxu0 0
      %2150 = vmatprep.subr.bf16.mxu0 0
      %2151 = vmatpush1.bf16.msra.mxu0 0
      %2152 = vmatprep.subr.bf16.mxu0 0
      %2153 = vmatpush1.bf16.msra.mxu0 0
      %2154 = vmatprep.subr.bf16.mxu0 0
      %2155 = vmatpush1.bf16.msra.mxu0 0
      %2156 = vmatprep.mubr.bf16.mxu0 0
      %2157 = vmatmul.mubr.bf16.gmra.mrb[0].mxu0 %v2122
      %v2158 = vpop.f32.mrb[0].mxu0
      %v2159 = vadd.f32 0.0, %v2158
      %v2160 = vpop.f32.mrb[0].mxu0
      %v2161 = vadd.f32 0.0, %v2160
      %v2162 = vpop.f32.mrb[0].mxu0
      %v2163 = vadd.f32 0.0, %v2162
      %v2164 = vpop.f32.mrb[0].mxu0
      %v2165 = vadd.f32 0.0, %v2164
      %2166 = vdwg.mxu0
      %v2167 = vadd.f32 %v1815, %v2159
      %v2168 = vadd.f32 %v1816, %v2161
      %v2169 = vadd.f32 %v1817, %v2163
      %v2170 = vadd.f32 %v1818, %v2165
      %s2171 = scalar_lea.vmem %s2, 8
      %v2172 = vld [vmem:[%s2171] sm:$0x3]
      %v2174 = vlaneseq
      %v2175 = vshrl.u32 %v2174, 7
      %v2176 = vsub.s32 0, %v2175
      %v2177 = vrot.slane %v2172, %v2176
      %v2178 = vlaneseq
      %v2179 = vshrl.u32 %v2178, 7
      %v2180 = vsub.s32 1, %v2179
      %v2181 = vrot.slane %v2172, %v2180
      %2184 = vmatprep.subr.bf16.mxu0 %v2005
      %2185 = vmatpush1.bf16.msra.mxu0 %v2004
      %2186 = vmatprep.subr.bf16.mxu0 %v2007
      %2187 = vmatpush1.bf16.msra.mxu0 %v2006
      %2188 = vmatprep.subr.bf16.mxu0 %v2009
      %2189 = vmatpush1.bf16.msra.mxu0 %v2008
      %2190 = vmatprep.subr.bf16.mxu0 %v2011
      %2191 = vmatpush1.bf16.msra.mxu0 %v2010
      %2192 = vmatprep.subr.bf16.mxu0 %v2013
      %2193 = vmatpush1.bf16.msra.mxu0 %v2012
      %2194 = vmatprep.subr.bf16.mxu0 %v2015
      %2195 = vmatpush1.bf16.msra.mxu0 %v2014
      %2196 = vmatprep.subr.bf16.mxu0 %v2017
      %2197 = vmatpush1.bf16.msra.mxu0 %v2016
      %2198 = vmatprep.subr.bf16.mxu0 %v2019
      %2199 = vmatpush1.bf16.msra.mxu0 %v2018
      %2200 = vmatprep.subr.bf16.mxu0 %v2021
      %2201 = vmatpush1.bf16.msra.mxu0 %v2020
      %2202 = vmatprep.subr.bf16.mxu0 %v2023
      %2203 = vmatpush1.bf16.msra.mxu0 %v2022
      %2204 = vmatprep.subr.bf16.mxu0 %v2025
      %2205 = vmatpush1.bf16.msra.mxu0 %v2024
      %2206 = vmatprep.subr.bf16.mxu0 %v2027
      %2207 = vmatpush1.bf16.msra.mxu0 %v2026
      %2208 = vmatprep.subr.bf16.mxu0 %v2029
      %2209 = vmatpush1.bf16.msra.mxu0 %v2028
      %2210 = vmatprep.subr.bf16.mxu0 %v2031
      %2211 = vmatpush1.bf16.msra.mxu0 %v2030
      %2212 = vmatprep.subr.bf16.mxu0 %v2033
      %2213 = vmatpush1.bf16.msra.mxu0 %v2032
      %2214 = vmatprep.subr.bf16.mxu0 %v2035
      %2215 = vmatpush1.bf16.msra.mxu0 %v2034
      %2216 = vmatprep.mubr.bf16.mxu0 %v416
      %2217 = vmatmul.mubr.bf16.gmra.mrb[0].mxu0 %v415
      %v2218 = vpop.f32.mrb[0].mxu0
      %v2219 = vadd.f32 %v2177, %v2218
      %v2220 = vpop.f32.mrb[0].mxu0
      %v2221 = vadd.f32 %v2181, %v2220
      %v2222 = vpop.f32.mrb[0].mxu0
      %v2223 = vpop.f32.mrb[0].mxu0
      %2224 = vdwg.mxu0
      %v2225 = vmax.f32 %v1873, %v2219
      %v2226 = vmax.f32 %v1874, %v2221
      %s2227 = scalar_lea.vmem %s1, 1280
      %v2228 = vld [vmem:[%s2227] sm:$0xff]
      %v2229 = vld [vmem:[%s2227 + $0x8] sm:$0xff]
      %v2230 = vld [vmem:[%s2227 + $0x10] sm:$0xff]
      %v2231 = vld [vmem:[%s2227 + $0x18] sm:$0xff]
      %v2232 = vld [vmem:[%s2227 + $0x20] sm:$0xff]
      %v2233 = vld [vmem:[%s2227 + $0x28] sm:$0xff]
      %v2234 = vld [vmem:[%s2227 + $0x30] sm:$0xff]
      %v2235 = vld [vmem:[%s2227 + $0x38] sm:$0xff]
      %v2236 = vld [vmem:[%s2227 + $0x40] sm:$0xff]
      %v2237 = vld [vmem:[%s2227 + $0x48] sm:$0xff]
      %v2238 = vld [vmem:[%s2227 + $0x50] sm:$0xff]
      %v2239 = vld [vmem:[%s2227 + $0x58] sm:$0xff]
      %v2240 = vld [vmem:[%s2227 + $0x60] sm:$0xff]
      %v2241 = vld [vmem:[%s2227 + $0x68] sm:$0xff]
      %v2242 = vld [vmem:[%s2227 + $0x70] sm:$0xff]
      %v2243 = vld [vmem:[%s2227 + $0x78] sm:$0xff]
      %v2244 = vld [vmem:[%s2227 + $0x80] sm:$0xff]
      %v2245 = vld [vmem:[%s2227 + $0x88] sm:$0xff]
      %v2246 = vld [vmem:[%s2227 + $0x90] sm:$0xff]
      %v2247 = vld [vmem:[%s2227 + $0x98] sm:$0xff]
      %v2248 = vld [vmem:[%s2227 + $0xa0] sm:$0xff]
      %v2249 = vld [vmem:[%s2227 + $0xa8] sm:$0xff]
      %v2250 = vld [vmem:[%s2227 + $0xb0] sm:$0xff]
      %v2251 = vld [vmem:[%s2227 + $0xb8] sm:$0xff]
      %v2252 = vld [vmem:[%s2227 + $0xc0] sm:$0xff]
      %v2253 = vld [vmem:[%s2227 + $0xc8] sm:$0xff]
      %v2254 = vld [vmem:[%s2227 + $0xd0] sm:$0xff]
      %v2255 = vld [vmem:[%s2227 + $0xd8] sm:$0xff]
      %v2256 = vld [vmem:[%s2227 + $0xe0] sm:$0xff]
      %v2257 = vld [vmem:[%s2227 + $0xe8] sm:$0xff]
      %v2258 = vld [vmem:[%s2227 + $0xf0] sm:$0xff]
      %v2259 = vld [vmem:[%s2227 + $0xf8] sm:$0xff]
      %v2292 = vunpack.c.l.b16 %v2228
      %v2293 = vunpack.c.h.b16 %v2228
      %v2294 = vunpack.c.l.b16 %v2229
      %v2295 = vunpack.c.h.b16 %v2229
      %v2296 = vunpack.c.l.b16 %v2230
      %v2297 = vunpack.c.h.b16 %v2230
      %v2298 = vunpack.c.l.b16 %v2231
      %v2299 = vunpack.c.h.b16 %v2231
      %v2300 = vunpack.c.l.b16 %v2232
      %v2301 = vunpack.c.h.b16 %v2232
      %v2302 = vunpack.c.l.b16 %v2233
      %v2303 = vunpack.c.h.b16 %v2233
      %v2304 = vunpack.c.l.b16 %v2234
      %v2305 = vunpack.c.h.b16 %v2234
      %v2306 = vunpack.c.l.b16 %v2235
      %v2307 = vunpack.c.h.b16 %v2235
      %v2308 = vunpack.c.l.b16 %v2236
      %v2309 = vunpack.c.h.b16 %v2236
      %v2310 = vunpack.c.l.b16 %v2237
      %v2311 = vunpack.c.h.b16 %v2237
      %v2312 = vunpack.c.l.b16 %v2238
      %v2313 = vunpack.c.h.b16 %v2238
      %v2314 = vunpack.c.l.b16 %v2239
      %v2315 = vunpack.c.h.b16 %v2239
      %v2316 = vunpack.c.l.b16 %v2240
      %v2317 = vunpack.c.h.b16 %v2240
      %v2318 = vunpack.c.l.b16 %v2241
      %v2319 = vunpack.c.h.b16 %v2241
      %v2320 = vunpack.c.l.b16 %v2242
      %v2321 = vunpack.c.h.b16 %v2242
      %v2322 = vunpack.c.l.b16 %v2243
      %v2323 = vunpack.c.h.b16 %v2243
      %v2324 = vunpack.c.l.b16 %v2244
      %v2325 = vunpack.c.h.b16 %v2244
      %v2326 = vunpack.c.l.b16 %v2245
      %v2327 = vunpack.c.h.b16 %v2245
      %v2328 = vunpack.c.l.b16 %v2246
      %v2329 = vunpack.c.h.b16 %v2246
      %v2330 = vunpack.c.l.b16 %v2247
      %v2331 = vunpack.c.h.b16 %v2247
      %v2332 = vunpack.c.l.b16 %v2248
      %v2333 = vunpack.c.h.b16 %v2248
      %v2334 = vunpack.c.l.b16 %v2249
      %v2335 = vunpack.c.h.b16 %v2249
      %v2336 = vunpack.c.l.b16 %v2250
      %v2337 = vunpack.c.h.b16 %v2250
      %v2338 = vunpack.c.l.b16 %v2251
      %v2339 = vunpack.c.h.b16 %v2251
      %v2340 = vunpack.c.l.b16 %v2252
      %v2341 = vunpack.c.h.b16 %v2252
      %v2342 = vunpack.c.l.b16 %v2253
      %v2343 = vunpack.c.h.b16 %v2253
      %v2344 = vunpack.c.l.b16 %v2254
      %v2345 = vunpack.c.h.b16 %v2254
      %v2346 = vunpack.c.l.b16 %v2255
      %v2347 = vunpack.c.h.b16 %v2255
      %v2348 = vunpack.c.l.b16 %v2256
      %v2349 = vunpack.c.h.b16 %v2256
      %v2350 = vunpack.c.l.b16 %v2257
      %v2351 = vunpack.c.h.b16 %v2257
      %v2352 = vunpack.c.l.b16 %v2258
      %v2353 = vunpack.c.h.b16 %v2258
      %v2354 = vunpack.c.l.b16 %v2259
      %v2355 = vunpack.c.h.b16 %v2259
      %v2356 = vpack.c.b16 %v2294, %v2292
      %v2357 = vpack.c.b16 %v2295, %v2293
      %v2358 = vpack.c.b16 %v2298, %v2296
      %v2359 = vpack.c.b16 %v2299, %v2297
      %v2360 = vpack.c.b16 %v2302, %v2300
      %v2361 = vpack.c.b16 %v2303, %v2301
      %v2362 = vpack.c.b16 %v2306, %v2304
      %v2363 = vpack.c.b16 %v2307, %v2305
      %v2364 = vpack.c.b16 %v2310, %v2308
      %v2365 = vpack.c.b16 %v2311, %v2309
      %v2366 = vpack.c.b16 %v2314, %v2312
      %v2367 = vpack.c.b16 %v2315, %v2313
      %v2368 = vpack.c.b16 %v2318, %v2316
      %v2369 = vpack.c.b16 %v2319, %v2317
      %v2370 = vpack.c.b16 %v2322, %v2320
      %v2371 = vpack.c.b16 %v2323, %v2321
      %v2372 = vpack.c.b16 %v2326, %v2324
      %v2373 = vpack.c.b16 %v2327, %v2325
      %v2374 = vpack.c.b16 %v2330, %v2328
      %v2375 = vpack.c.b16 %v2331, %v2329
      %v2376 = vpack.c.b16 %v2334, %v2332
      %v2377 = vpack.c.b16 %v2335, %v2333
      %v2378 = vpack.c.b16 %v2338, %v2336
      %v2379 = vpack.c.b16 %v2339, %v2337
      %v2380 = vpack.c.b16 %v2342, %v2340
      %v2381 = vpack.c.b16 %v2343, %v2341
      %v2382 = vpack.c.b16 %v2346, %v2344
      %v2383 = vpack.c.b16 %v2347, %v2345
      %v2384 = vpack.c.b16 %v2350, %v2348
      %v2385 = vpack.c.b16 %v2351, %v2349
      %v2386 = vpack.c.b16 %v2354, %v2352
      %v2387 = vpack.c.b16 %v2355, %v2353
      %2420 = vmatprep.subr.bf16.mxu0 %v2357
      %2421 = vmatpush1.bf16.msra.mxu0 %v2356
      %2422 = vmatprep.subr.bf16.mxu0 %v2359
      %2423 = vmatpush1.bf16.msra.mxu0 %v2358
      %2424 = vmatprep.subr.bf16.mxu0 %v2361
      %2425 = vmatpush1.bf16.msra.mxu0 %v2360
      %2426 = vmatprep.subr.bf16.mxu0 %v2363
      %2427 = vmatpush1.bf16.msra.mxu0 %v2362
      %2428 = vmatprep.subr.bf16.mxu0 %v2365
      %2429 = vmatpush1.bf16.msra.mxu0 %v2364
      %2430 = vmatprep.subr.bf16.mxu0 %v2367
      %2431 = vmatpush1.bf16.msra.mxu0 %v2366
      %2432 = vmatprep.subr.bf16.mxu0 %v2369
      %2433 = vmatpush1.bf16.msra.mxu0 %v2368
      %2434 = vmatprep.subr.bf16.mxu0 %v2371
      %2435 = vmatpush1.bf16.msra.mxu0 %v2370
      %2436 = vmatprep.subr.bf16.mxu0 %v2373
      %2437 = vmatpush1.bf16.msra.mxu0 %v2372
      %2438 = vmatprep.subr.bf16.mxu0 %v2375
      %2439 = vmatpush1.bf16.msra.mxu0 %v2374
      %2440 = vmatprep.subr.bf16.mxu0 %v2377
      %2441 = vmatpush1.bf16.msra.mxu0 %v2376
      %2442 = vmatprep.subr.bf16.mxu0 %v2379
      %2443 = vmatpush1.bf16.msra.mxu0 %v2378
      %2444 = vmatprep.subr.bf16.mxu0 %v2381
      %2445 = vmatpush1.bf16.msra.mxu0 %v2380
      %2446 = vmatprep.subr.bf16.mxu0 %v2383
      %2447 = vmatpush1.bf16.msra.mxu0 %v2382
      %2448 = vmatprep.subr.bf16.mxu0 %v2385
      %2449 = vmatpush1.bf16.msra.mxu0 %v2384
      %2450 = vmatprep.subr.bf16.mxu0 %v2387
      %2451 = vmatpush1.bf16.msra.mxu0 %v2386
      %2452 = vmatprep.mubr.bf16.mxu0 %v476
      %2453 = vmatmul.mubr.bf16.gmra.mrb[0].mxu0 %v475
      %v2454 = vpop.f32.mrb[0].mxu0
      %v2455 = vadd.f32 0.0, %v2454
      %v2456 = vpop.f32.mrb[0].mxu0
      %v2457 = vadd.f32 0.0, %v2456
      %v2458 = vpop.f32.mrb[0].mxu0
      %v2459 = vadd.f32 0.0, %v2458
      %v2460 = vpop.f32.mrb[0].mxu0
      %v2461 = vadd.f32 0.0, %v2460
      %2462 = vdwg.mxu0
      %v2463 = vpack.c.bf16 %v2459, %v2455
      %v2464 = vpack.c.bf16 %v2461, %v2457
      %s2465 = scalar_lea.vmem %s5, 40
      %v2466 = vld [vmem:[%s2465] sm:$0xf]
      %v2467 = vld [vmem:[%s2465 + $0x4] sm:$0xf]
      %v2470 = vunpack.c.l.b16 %v2466
      %v2471 = vunpack.c.l.b16 %v2467
      %v2472 = vpack.c.b16 %v2471, %v2470
      %v2474 = vsel %vm1017, %v2472, 0
      %2476 = vmatprep.subr.bf16.mxu0 %v2464
      %2477 = vmatpush1.bf16.msra.mxu0 %v2463
      %2478 = vmatprep.subr.bf16.mxu0 0
      %2479 = vmatpush1.bf16.msra.mxu0 0
      %2480 = vmatprep.subr.bf16.mxu0 0
      %2481 = vmatpush1.bf16.msra.mxu0 0
      %2482 = vmatprep.subr.bf16.mxu0 0
      %2483 = vmatpush1.bf16.msra.mxu0 0
      %2484 = vmatprep.subr.bf16.mxu0 0
      %2485 = vmatpush1.bf16.msra.mxu0 0
      %2486 = vmatprep.subr.bf16.mxu0 0
      %2487 = vmatpush1.bf16.msra.mxu0 0
      %2488 = vmatprep.subr.bf16.mxu0 0
      %2489 = vmatpush1.bf16.msra.mxu0 0
      %2490 = vmatprep.subr.bf16.mxu0 0
      %2491 = vmatpush1.bf16.msra.mxu0 0
      %2492 = vmatprep.subr.bf16.mxu0 0
      %2493 = vmatpush1.bf16.msra.mxu0 0
      %2494 = vmatprep.subr.bf16.mxu0 0
      %2495 = vmatpush1.bf16.msra.mxu0 0
      %2496 = vmatprep.subr.bf16.mxu0 0
      %2497 = vmatpush1.bf16.msra.mxu0 0
      %2498 = vmatprep.subr.bf16.mxu0 0
      %2499 = vmatpush1.bf16.msra.mxu0 0
      %2500 = vmatprep.subr.bf16.mxu0 0
      %2501 = vmatpush1.bf16.msra.mxu0 0
      %2502 = vmatprep.subr.bf16.mxu0 0
      %2503 = vmatpush1.bf16.msra.mxu0 0
      %2504 = vmatprep.subr.bf16.mxu0 0
      %2505 = vmatpush1.bf16.msra.mxu0 0
      %2506 = vmatprep.subr.bf16.mxu0 0
      %2507 = vmatpush1.bf16.msra.mxu0 0
      %2508 = vmatprep.mubr.bf16.mxu0 0
      %2509 = vmatmul.mubr.bf16.gmra.mrb[0].mxu0 %v2474
      %v2510 = vpop.f32.mrb[0].mxu0
      %v2511 = vadd.f32 0.0, %v2510
      %v2512 = vpop.f32.mrb[0].mxu0
      %v2513 = vadd.f32 0.0, %v2512
      %v2514 = vpop.f32.mrb[0].mxu0
      %v2515 = vadd.f32 0.0, %v2514
      %v2516 = vpop.f32.mrb[0].mxu0
      %v2517 = vadd.f32 0.0, %v2516
      %2518 = vdwg.mxu0
      %v2519 = vadd.f32 %v2167, %v2511
      %v2520 = vadd.f32 %v2168, %v2513
      %v2521 = vadd.f32 %v2169, %v2515
      %v2522 = vadd.f32 %v2170, %v2517
      %s2523 = scalar_lea.vmem %s2, 10
      %v2524 = vld [vmem:[%s2523] sm:$0x3]
      %v2526 = vlaneseq
      %v2527 = vshrl.u32 %v2526, 7
      %v2528 = vsub.s32 0, %v2527
      %v2529 = vrot.slane %v2524, %v2528
      %v2530 = vlaneseq
      %v2531 = vshrl.u32 %v2530, 7
      %v2532 = vsub.s32 1, %v2531
      %v2533 = vrot.slane %v2524, %v2532
      %2536 = vmatprep.subr.bf16.mxu0 %v2357
      %2537 = vmatpush1.bf16.msra.mxu0 %v2356
      %2538 = vmatprep.subr.bf16.mxu0 %v2359
      %2539 = vmatpush1.bf16.msra.mxu0 %v2358
      %2540 = vmatprep.subr.bf16.mxu0 %v2361
      %2541 = vmatpush1.bf16.msra.mxu0 %v2360
      %2542 = vmatprep.subr.bf16.mxu0 %v2363
      %2543 = vmatpush1.bf16.msra.mxu0 %v2362
      %2544 = vmatprep.subr.bf16.mxu0 %v2365
      %2545 = vmatpush1.bf16.msra.mxu0 %v2364
      %2546 = vmatprep.subr.bf16.mxu0 %v2367
      %2547 = vmatpush1.bf16.msra.mxu0 %v2366
      %2548 = vmatprep.subr.bf16.mxu0 %v2369
      %2549 = vmatpush1.bf16.msra.mxu0 %v2368
      %2550 = vmatprep.subr.bf16.mxu0 %v2371
      %2551 = vmatpush1.bf16.msra.mxu0 %v2370
      %2552 = vmatprep.subr.bf16.mxu0 %v2373
      %2553 = vmatpush1.bf16.msra.mxu0 %v2372
      %2554 = vmatprep.subr.bf16.mxu0 %v2375
      %2555 = vmatpush1.bf16.msra.mxu0 %v2374
      %2556 = vmatprep.subr.bf16.mxu0 %v2377
      %2557 = vmatpush1.bf16.msra.mxu0 %v2376
      %2558 = vmatprep.subr.bf16.mxu0 %v2379
      %2559 = vmatpush1.bf16.msra.mxu0 %v2378
      %2560 = vmatprep.subr.bf16.mxu0 %v2381
      %2561 = vmatpush1.bf16.msra.mxu0 %v2380
      %2562 = vmatprep.subr.bf16.mxu0 %v2383
      %2563 = vmatpush1.bf16.msra.mxu0 %v2382
      %2564 = vmatprep.subr.bf16.mxu0 %v2385
      %2565 = vmatpush1.bf16.msra.mxu0 %v2384
      %2566 = vmatprep.subr.bf16.mxu0 %v2387
      %2567 = vmatpush1.bf16.msra.mxu0 %v2386
      %2568 = vmatprep.mubr.bf16.mxu0 %v416
      %2569 = vmatmul.mubr.bf16.gmra.mrb[0].mxu0 %v415
      %v2570 = vpop.f32.mrb[0].mxu0
      %v2571 = vadd.f32 %v2529, %v2570
      %v2572 = vpop.f32.mrb[0].mxu0
      %v2573 = vadd.f32 %v2533, %v2572
      %v2574 = vpop.f32.mrb[0].mxu0
      %v2575 = vpop.f32.mrb[0].mxu0
      %2576 = vdwg.mxu0
      %v2577 = vmax.f32 %v2225, %v2571
      %v2578 = vmax.f32 %v2226, %v2573
      %s2579 = scalar_lea.vmem %s1, 1536
      %v2580 = vld [vmem:[%s2579] sm:$0xff]
      %v2581 = vld [vmem:[%s2579 + $0x8] sm:$0xff]
      %v2582 = vld [vmem:[%s2579 + $0x10] sm:$0xff]
      %v2583 = vld [vmem:[%s2579 + $0x18] sm:$0xff]
      %v2584 = vld [vmem:[%s2579 + $0x20] sm:$0xff]
      %v2585 = vld [vmem:[%s2579 + $0x28] sm:$0xff]
      %v2586 = vld [vmem:[%s2579 + $0x30] sm:$0xff]
      %v2587 = vld [vmem:[%s2579 + $0x38] sm:$0xff]
      %v2588 = vld [vmem:[%s2579 + $0x40] sm:$0xff]
      %v2589 = vld [vmem:[%s2579 + $0x48] sm:$0xff]
      %v2590 = vld [vmem:[%s2579 + $0x50] sm:$0xff]
      %v2591 = vld [vmem:[%s2579 + $0x58] sm:$0xff]
      %v2592 = vld [vmem:[%s2579 + $0x60] sm:$0xff]
      %v2593 = vld [vmem:[%s2579 + $0x68] sm:$0xff]
      %v2594 = vld [vmem:[%s2579 + $0x70] sm:$0xff]
      %v2595 = vld [vmem:[%s2579 + $0x78] sm:$0xff]
      %v2596 = vld [vmem:[%s2579 + $0x80] sm:$0xff]
      %v2597 = vld [vmem:[%s2579 + $0x88] sm:$0xff]
      %v2598 = vld [vmem:[%s2579 + $0x90] sm:$0xff]
      %v2599 = vld [vmem:[%s2579 + $0x98] sm:$0xff]
      %v2600 = vld [vmem:[%s2579 + $0xa0] sm:$0xff]
      %v2601 = vld [vmem:[%s2579 + $0xa8] sm:$0xff]
      %v2602 = vld [vmem:[%s2579 + $0xb0] sm:$0xff]
      %v2603 = vld [vmem:[%s2579 + $0xb8] sm:$0xff]
      %v2604 = vld [vmem:[%s2579 + $0xc0] sm:$0xff]
      %v2605 = vld [vmem:[%s2579 + $0xc8] sm:$0xff]
      %v2606 = vld [vmem:[%s2579 + $0xd0] sm:$0xff]
      %v2607 = vld [vmem:[%s2579 + $0xd8] sm:$0xff]
      %v2608 = vld [vmem:[%s2579 + $0xe0] sm:$0xff]
      %v2609 = vld [vmem:[%s2579 + $0xe8] sm:$0xff]
      %v2610 = vld [vmem:[%s2579 + $0xf0] sm:$0xff]
      %v2611 = vld [vmem:[%s2579 + $0xf8] sm:$0xff]
      %v2644 = vunpack.c.l.b16 %v2580
      %v2645 = vunpack.c.h.b16 %v2580
      %v2646 = vunpack.c.l.b16 %v2581
      %v2647 = vunpack.c.h.b16 %v2581
      %v2648 = vunpack.c.l.b16 %v2582
      %v2649 = vunpack.c.h.b16 %v2582
      %v2650 = vunpack.c.l.b16 %v2583
      %v2651 = vunpack.c.h.b16 %v2583
      %v2652 = vunpack.c.l.b16 %v2584
      %v2653 = vunpack.c.h.b16 %v2584
      %v2654 = vunpack.c.l.b16 %v2585
      %v2655 = vunpack.c.h.b16 %v2585
      %v2656 = vunpack.c.l.b16 %v2586
      %v2657 = vunpack.c.h.b16 %v2586
      %v2658 = vunpack.c.l.b16 %v2587
      %v2659 = vunpack.c.h.b16 %v2587
      %v2660 = vunpack.c.l.b16 %v2588
      %v2661 = vunpack.c.h.b16 %v2588
      %v2662 = vunpack.c.l.b16 %v2589
      %v2663 = vunpack.c.h.b16 %v2589
      %v2664 = vunpack.c.l.b16 %v2590
      %v2665 = vunpack.c.h.b16 %v2590
      %v2666 = vunpack.c.l.b16 %v2591
      %v2667 = vunpack.c.h.b16 %v2591
      %v2668 = vunpack.c.l.b16 %v2592
      %v2669 = vunpack.c.h.b16 %v2592
      %v2670 = vunpack.c.l.b16 %v2593
      %v2671 = vunpack.c.h.b16 %v2593
      %v2672 = vunpack.c.l.b16 %v2594
      %v2673 = vunpack.c.h.b16 %v2594
      %v2674 = vunpack.c.l.b16 %v2595
      %v2675 = vunpack.c.h.b16 %v2595
      %v2676 = vunpack.c.l.b16 %v2596
      %v2677 = vunpack.c.h.b16 %v2596
      %v2678 = vunpack.c.l.b16 %v2597
      %v2679 = vunpack.c.h.b16 %v2597
      %v2680 = vunpack.c.l.b16 %v2598
      %v2681 = vunpack.c.h.b16 %v2598
      %v2682 = vunpack.c.l.b16 %v2599
      %v2683 = vunpack.c.h.b16 %v2599
      %v2684 = vunpack.c.l.b16 %v2600
      %v2685 = vunpack.c.h.b16 %v2600
      %v2686 = vunpack.c.l.b16 %v2601
      %v2687 = vunpack.c.h.b16 %v2601
      %v2688 = vunpack.c.l.b16 %v2602
      %v2689 = vunpack.c.h.b16 %v2602
      %v2690 = vunpack.c.l.b16 %v2603
      %v2691 = vunpack.c.h.b16 %v2603
      %v2692 = vunpack.c.l.b16 %v2604
      %v2693 = vunpack.c.h.b16 %v2604
      %v2694 = vunpack.c.l.b16 %v2605
      %v2695 = vunpack.c.h.b16 %v2605
      %v2696 = vunpack.c.l.b16 %v2606
      %v2697 = vunpack.c.h.b16 %v2606
      %v2698 = vunpack.c.l.b16 %v2607
      %v2699 = vunpack.c.h.b16 %v2607
      %v2700 = vunpack.c.l.b16 %v2608
      %v2701 = vunpack.c.h.b16 %v2608
      %v2702 = vunpack.c.l.b16 %v2609
      %v2703 = vunpack.c.h.b16 %v2609
      %v2704 = vunpack.c.l.b16 %v2610
      %v2705 = vunpack.c.h.b16 %v2610
      %v2706 = vunpack.c.l.b16 %v2611
      %v2707 = vunpack.c.h.b16 %v2611
      %v2708 = vpack.c.b16 %v2646, %v2644
      %v2709 = vpack.c.b16 %v2647, %v2645
      %v2710 = vpack.c.b16 %v2650, %v2648
      %v2711 = vpack.c.b16 %v2651, %v2649
      %v2712 = vpack.c.b16 %v2654, %v2652
      %v2713 = vpack.c.b16 %v2655, %v2653
      %v2714 = vpack.c.b16 %v2658, %v2656
      %v2715 = vpack.c.b16 %v2659, %v2657
      %v2716 = vpack.c.b16 %v2662, %v2660
      %v2717 = vpack.c.b16 %v2663, %v2661
      %v2718 = vpack.c.b16 %v2666, %v2664
      %v2719 = vpack.c.b16 %v2667, %v2665
      %v2720 = vpack.c.b16 %v2670, %v2668
      %v2721 = vpack.c.b16 %v2671, %v2669
      %v2722 = vpack.c.b16 %v2674, %v2672
      %v2723 = vpack.c.b16 %v2675, %v2673
      %v2724 = vpack.c.b16 %v2678, %v2676
      %v2725 = vpack.c.b16 %v2679, %v2677
      %v2726 = vpack.c.b16 %v2682, %v2680
      %v2727 = vpack.c.b16 %v2683, %v2681
      %v2728 = vpack.c.b16 %v2686, %v2684
      %v2729 = vpack.c.b16 %v2687, %v2685
      %v2730 = vpack.c.b16 %v2690, %v2688
      %v2731 = vpack.c.b16 %v2691, %v2689
      %v2732 = vpack.c.b16 %v2694, %v2692
      %v2733 = vpack.c.b16 %v2695, %v2693
      %v2734 = vpack.c.b16 %v2698, %v2696
      %v2735 = vpack.c.b16 %v2699, %v2697
      %v2736 = vpack.c.b16 %v2702, %v2700
      %v2737 = vpack.c.b16 %v2703, %v2701
      %v2738 = vpack.c.b16 %v2706, %v2704
      %v2739 = vpack.c.b16 %v2707, %v2705
      %2772 = vmatprep.subr.bf16.mxu0 %v2709
      %2773 = vmatpush1.bf16.msra.mxu0 %v2708
      %2774 = vmatprep.subr.bf16.mxu0 %v2711
      %2775 = vmatpush1.bf16.msra.mxu0 %v2710
      %2776 = vmatprep.subr.bf16.mxu0 %v2713
      %2777 = vmatpush1.bf16.msra.mxu0 %v2712
      %2778 = vmatprep.subr.bf16.mxu0 %v2715
      %2779 = vmatpush1.bf16.msra.mxu0 %v2714
      %2780 = vmatprep.subr.bf16.mxu0 %v2717
      %2781 = vmatpush1.bf16.msra.mxu0 %v2716
      %2782 = vmatprep.subr.bf16.mxu0 %v2719
      %2783 = vmatpush1.bf16.msra.mxu0 %v2718
      %2784 = vmatprep.subr.bf16.mxu0 %v2721
      %2785 = vmatpush1.bf16.msra.mxu0 %v2720
      %2786 = vmatprep.subr.bf16.mxu0 %v2723
      %2787 = vmatpush1.bf16.msra.mxu0 %v2722
      %2788 = vmatprep.subr.bf16.mxu0 %v2725
      %2789 = vmatpush1.bf16.msra.mxu0 %v2724
      %2790 = vmatprep.subr.bf16.mxu0 %v2727
      %2791 = vmatpush1.bf16.msra.mxu0 %v2726
      %2792 = vmatprep.subr.bf16.mxu0 %v2729
      %2793 = vmatpush1.bf16.msra.mxu0 %v2728
      %2794 = vmatprep.subr.bf16.mxu0 %v2731
      %2795 = vmatpush1.bf16.msra.mxu0 %v2730
      %2796 = vmatprep.subr.bf16.mxu0 %v2733
      %2797 = vmatpush1.bf16.msra.mxu0 %v2732
      %2798 = vmatprep.subr.bf16.mxu0 %v2735
      %2799 = vmatpush1.bf16.msra.mxu0 %v2734
      %2800 = vmatprep.subr.bf16.mxu0 %v2737
      %2801 = vmatpush1.bf16.msra.mxu0 %v2736
      %2802 = vmatprep.subr.bf16.mxu0 %v2739
      %2803 = vmatpush1.bf16.msra.mxu0 %v2738
      %2804 = vmatprep.mubr.bf16.mxu0 %v476
      %2805 = vmatmul.mubr.bf16.gmra.mrb[0].mxu0 %v475
      %v2806 = vpop.f32.mrb[0].mxu0
      %v2807 = vadd.f32 0.0, %v2806
      %v2808 = vpop.f32.mrb[0].mxu0
      %v2809 = vadd.f32 0.0, %v2808
      %v2810 = vpop.f32.mrb[0].mxu0
      %v2811 = vadd.f32 0.0, %v2810
      %v2812 = vpop.f32.mrb[0].mxu0
      %v2813 = vadd.f32 0.0, %v2812
      %2814 = vdwg.mxu0
      %v2815 = vpack.c.bf16 %v2811, %v2807
      %v2816 = vpack.c.bf16 %v2813, %v2809
      %s2817 = scalar_lea.vmem %s5, 48
      %v2818 = vld [vmem:[%s2817] sm:$0xf]
      %v2819 = vld [vmem:[%s2817 + $0x4] sm:$0xf]
      %v2822 = vunpack.c.l.b16 %v2818
      %v2823 = vunpack.c.l.b16 %v2819
      %v2824 = vpack.c.b16 %v2823, %v2822
      %v2826 = vsel %vm1017, %v2824, 0
      %2828 = vmatprep.subr.bf16.mxu0 %v2816
      %2829 = vmatpush1.bf16.msra.mxu0 %v2815
      %2830 = vmatprep.subr.bf16.mxu0 0
      %2831 = vmatpush1.bf16.msra.mxu0 0
      %2832 = vmatprep.subr.bf16.mxu0 0
      %2833 = vmatpush1.bf16.msra.mxu0 0
      %2834 = vmatprep.subr.bf16.mxu0 0
      %2835 = vmatpush1.bf16.msra.mxu0 0
      %2836 = vmatprep.subr.bf16.mxu0 0
      %2837 = vmatpush1.bf16.msra.mxu0 0
      %2838 = vmatprep.subr.bf16.mxu0 0
      %2839 = vmatpush1.bf16.msra.mxu0 0
      %2840 = vmatprep.subr.bf16.mxu0 0
      %2841 = vmatpush1.bf16.msra.mxu0 0
      %2842 = vmatprep.subr.bf16.mxu0 0
      %2843 = vmatpush1.bf16.msra.mxu0 0
      %2844 = vmatprep.subr.bf16.mxu0 0
      %2845 = vmatpush1.bf16.msra.mxu0 0
      %2846 = vmatprep.subr.bf16.mxu0 0
      %2847 = vmatpush1.bf16.msra.mxu0 0
      %2848 = vmatprep.subr.bf16.mxu0 0
      %2849 = vmatpush1.bf16.msra.mxu0 0
      %2850 = vmatprep.subr.bf16.mxu0 0
      %2851 = vmatpush1.bf16.msra.mxu0 0
      %2852 = vmatprep.subr.bf16.mxu0 0
      %2853 = vmatpush1.bf16.msra.mxu0 0
      %2854 = vmatprep.subr.bf16.mxu0 0
      %2855 = vmatpush1.bf16.msra.mxu0 0
      %2856 = vmatprep.subr.bf16.mxu0 0
      %2857 = vmatpush1.bf16.msra.mxu0 0
      %2858 = vmatprep.subr.bf16.mxu0 0
      %2859 = vmatpush1.bf16.msra.mxu0 0
      %2860 = vmatprep.mubr.bf16.mxu0 0
      %2861 = vmatmul.mubr.bf16.gmra.mrb[0].mxu0 %v2826
      %v2862 = vpop.f32.mrb[0].mxu0
      %v2863 = vadd.f32 0.0, %v2862
      %v2864 = vpop.f32.mrb[0].mxu0
      %v2865 = vadd.f32 0.0, %v2864
      %v2866 = vpop.f32.mrb[0].mxu0
      %v2867 = vadd.f32 0.0, %v2866
      %v2868 = vpop.f32.mrb[0].mxu0
      %v2869 = vadd.f32 0.0, %v2868
      %2870 = vdwg.mxu0
      %v2871 = vadd.f32 %v2519, %v2863
      %v2872 = vadd.f32 %v2520, %v2865
      %v2873 = vadd.f32 %v2521, %v2867
      %v2874 = vadd.f32 %v2522, %v2869
      %s2875 = scalar_lea.vmem %s2, 12
      %v2876 = vld [vmem:[%s2875] sm:$0x3]
      %v2878 = vlaneseq
      %v2879 = vshrl.u32 %v2878, 7
      %v2880 = vsub.s32 0, %v2879
      %v2881 = vrot.slane %v2876, %v2880
      %v2882 = vlaneseq
      %v2883 = vshrl.u32 %v2882, 7
      %v2884 = vsub.s32 1, %v2883
      %v2885 = vrot.slane %v2876, %v2884
      %2888 = vmatprep.subr.bf16.mxu0 %v2709
      %2889 = vmatpush1.bf16.msra.mxu0 %v2708
      %2890 = vmatprep.subr.bf16.mxu0 %v2711
      %2891 = vmatpush1.bf16.msra.mxu0 %v2710
      %2892 = vmatprep.subr.bf16.mxu0 %v2713
      %2893 = vmatpush1.bf16.msra.mxu0 %v2712
      %2894 = vmatprep.subr.bf16.mxu0 %v2715
      %2895 = vmatpush1.bf16.msra.mxu0 %v2714
      %2896 = vmatprep.subr.bf16.mxu0 %v2717
      %2897 = vmatpush1.bf16.msra.mxu0 %v2716
      %2898 = vmatprep.subr.bf16.mxu0 %v2719
      %2899 = vmatpush1.bf16.msra.mxu0 %v2718
      %2900 = vmatprep.subr.bf16.mxu0 %v2721
      %2901 = vmatpush1.bf16.msra.mxu0 %v2720
      %2902 = vmatprep.subr.bf16.mxu0 %v2723
      %2903 = vmatpush1.bf16.msra.mxu0 %v2722
      %2904 = vmatprep.subr.bf16.mxu0 %v2725
      %2905 = vmatpush1.bf16.msra.mxu0 %v2724
      %2906 = vmatprep.subr.bf16.mxu0 %v2727
      %2907 = vmatpush1.bf16.msra.mxu0 %v2726
      %2908 = vmatprep.subr.bf16.mxu0 %v2729
      %2909 = vmatpush1.bf16.msra.mxu0 %v2728
      %2910 = vmatprep.subr.bf16.mxu0 %v2731
      %2911 = vmatpush1.bf16.msra.mxu0 %v2730
      %2912 = vmatprep.subr.bf16.mxu0 %v2733
      %2913 = vmatpush1.bf16.msra.mxu0 %v2732
      %2914 = vmatprep.subr.bf16.mxu0 %v2735
      %2915 = vmatpush1.bf16.msra.mxu0 %v2734
      %2916 = vmatprep.subr.bf16.mxu0 %v2737
      %2917 = vmatpush1.bf16.msra.mxu0 %v2736
      %2918 = vmatprep.subr.bf16.mxu0 %v2739
      %2919 = vmatpush1.bf16.msra.mxu0 %v2738
      %2920 = vmatprep.mubr.bf16.mxu0 %v416
      %2921 = vmatmul.mubr.bf16.gmra.mrb[0].mxu0 %v415
      %v2922 = vpop.f32.mrb[0].mxu0
      %v2923 = vadd.f32 %v2881, %v2922
      %v2924 = vpop.f32.mrb[0].mxu0
      %v2925 = vadd.f32 %v2885, %v2924
      %v2926 = vpop.f32.mrb[0].mxu0
      %v2927 = vpop.f32.mrb[0].mxu0
      %2928 = vdwg.mxu0
      %v2929 = vmax.f32 %v2577, %v2923
      %v2930 = vmax.f32 %v2578, %v2925
      %s2931 = scalar_lea.vmem %s1, 1792
      %v2932 = vld [vmem:[%s2931] sm:$0xff]
      %v2933 = vld [vmem:[%s2931 + $0x8] sm:$0xff]
      %v2934 = vld [vmem:[%s2931 + $0x10] sm:$0xff]
      %v2935 = vld [vmem:[%s2931 + $0x18] sm:$0xff]
      %v2936 = vld [vmem:[%s2931 + $0x20] sm:$0xff]
      %v2937 = vld [vmem:[%s2931 + $0x28] sm:$0xff]
      %v2938 = vld [vmem:[%s2931 + $0x30] sm:$0xff]
      %v2939 = vld [vmem:[%s2931 + $0x38] sm:$0xff]
      %v2940 = vld [vmem:[%s2931 + $0x40] sm:$0xff]
      %v2941 = vld [vmem:[%s2931 + $0x48] sm:$0xff]
      %v2942 = vld [vmem:[%s2931 + $0x50] sm:$0xff]
      %v2943 = vld [vmem:[%s2931 + $0x58] sm:$0xff]
      %v2944 = vld [vmem:[%s2931 + $0x60] sm:$0xff]
      %v2945 = vld [vmem:[%s2931 + $0x68] sm:$0xff]
      %v2946 = vld [vmem:[%s2931 + $0x70] sm:$0xff]
      %v2947 = vld [vmem:[%s2931 + $0x78] sm:$0xff]
      %v2948 = vld [vmem:[%s2931 + $0x80] sm:$0xff]
      %v2949 = vld [vmem:[%s2931 + $0x88] sm:$0xff]
      %v2950 = vld [vmem:[%s2931 + $0x90] sm:$0xff]
      %v2951 = vld [vmem:[%s2931 + $0x98] sm:$0xff]
      %v2952 = vld [vmem:[%s2931 + $0xa0] sm:$0xff]
      %v2953 = vld [vmem:[%s2931 + $0xa8] sm:$0xff]
      %v2954 = vld [vmem:[%s2931 + $0xb0] sm:$0xff]
      %v2955 = vld [vmem:[%s2931 + $0xb8] sm:$0xff]
      %v2956 = vld [vmem:[%s2931 + $0xc0] sm:$0xff]
      %v2957 = vld [vmem:[%s2931 + $0xc8] sm:$0xff]
      %v2958 = vld [vmem:[%s2931 + $0xd0] sm:$0xff]
      %v2959 = vld [vmem:[%s2931 + $0xd8] sm:$0xff]
      %v2960 = vld [vmem:[%s2931 + $0xe0] sm:$0xff]
      %v2961 = vld [vmem:[%s2931 + $0xe8] sm:$0xff]
      %v2962 = vld [vmem:[%s2931 + $0xf0] sm:$0xff]
      %v2963 = vld [vmem:[%s2931 + $0xf8] sm:$0xff]
      %v2996 = vunpack.c.l.b16 %v2932
      %v2997 = vunpack.c.h.b16 %v2932
      %v2998 = vunpack.c.l.b16 %v2933
      %v2999 = vunpack.c.h.b16 %v2933
      %v3000 = vunpack.c.l.b16 %v2934
      %v3001 = vunpack.c.h.b16 %v2934
      %v3002 = vunpack.c.l.b16 %v2935
      %v3003 = vunpack.c.h.b16 %v2935
      %v3004 = vunpack.c.l.b16 %v2936
      %v3005 = vunpack.c.h.b16 %v2936
      %v3006 = vunpack.c.l.b16 %v2937
      %v3007 = vunpack.c.h.b16 %v2937
      %v3008 = vunpack.c.l.b16 %v2938
      %v3009 = vunpack.c.h.b16 %v2938
      %v3010 = vunpack.c.l.b16 %v2939
      %v3011 = vunpack.c.h.b16 %v2939
      %v3012 = vunpack.c.l.b16 %v2940
      %v3013 = vunpack.c.h.b16 %v2940
      %v3014 = vunpack.c.l.b16 %v2941
      %v3015 = vunpack.c.h.b16 %v2941
      %v3016 = vunpack.c.l.b16 %v2942
      %v3017 = vunpack.c.h.b16 %v2942
      %v3018 = vunpack.c.l.b16 %v2943
      %v3019 = vunpack.c.h.b16 %v2943
      %v3020 = vunpack.c.l.b16 %v2944
      %v3021 = vunpack.c.h.b16 %v2944
      %v3022 = vunpack.c.l.b16 %v2945
      %v3023 = vunpack.c.h.b16 %v2945
      %v3024 = vunpack.c.l.b16 %v2946
      %v3025 = vunpack.c.h.b16 %v2946
      %v3026 = vunpack.c.l.b16 %v2947
      %v3027 = vunpack.c.h.b16 %v2947
      %v3028 = vunpack.c.l.b16 %v2948
      %v3029 = vunpack.c.h.b16 %v2948
      %v3030 = vunpack.c.l.b16 %v2949
      %v3031 = vunpack.c.h.b16 %v2949
      %v3032 = vunpack.c.l.b16 %v2950
      %v3033 = vunpack.c.h.b16 %v2950
      %v3034 = vunpack.c.l.b16 %v2951
      %v3035 = vunpack.c.h.b16 %v2951
      %v3036 = vunpack.c.l.b16 %v2952
      %v3037 = vunpack.c.h.b16 %v2952
      %v3038 = vunpack.c.l.b16 %v2953
      %v3039 = vunpack.c.h.b16 %v2953
      %v3040 = vunpack.c.l.b16 %v2954
      %v3041 = vunpack.c.h.b16 %v2954
      %v3042 = vunpack.c.l.b16 %v2955
      %v3043 = vunpack.c.h.b16 %v2955
      %v3044 = vunpack.c.l.b16 %v2956
      %v3045 = vunpack.c.h.b16 %v2956
      %v3046 = vunpack.c.l.b16 %v2957
      %v3047 = vunpack.c.h.b16 %v2957
      %v3048 = vunpack.c.l.b16 %v2958
      %v3049 = vunpack.c.h.b16 %v2958
      %v3050 = vunpack.c.l.b16 %v2959
      %v3051 = vunpack.c.h.b16 %v2959
      %v3052 = vunpack.c.l.b16 %v2960
      %v3053 = vunpack.c.h.b16 %v2960
      %v3054 = vunpack.c.l.b16 %v2961
      %v3055 = vunpack.c.h.b16 %v2961
      %v3056 = vunpack.c.l.b16 %v2962
      %v3057 = vunpack.c.h.b16 %v2962
      %v3058 = vunpack.c.l.b16 %v2963
      %v3059 = vunpack.c.h.b16 %v2963
      %v3060 = vpack.c.b16 %v2998, %v2996
      %v3061 = vpack.c.b16 %v2999, %v2997
      %v3062 = vpack.c.b16 %v3002, %v3000
      %v3063 = vpack.c.b16 %v3003, %v3001
      %v3064 = vpack.c.b16 %v3006, %v3004
      %v3065 = vpack.c.b16 %v3007, %v3005
      %v3066 = vpack.c.b16 %v3010, %v3008
      %v3067 = vpack.c.b16 %v3011, %v3009
      %v3068 = vpack.c.b16 %v3014, %v3012
      %v3069 = vpack.c.b16 %v3015, %v3013
      %v3070 = vpack.c.b16 %v3018, %v3016
      %v3071 = vpack.c.b16 %v3019, %v3017
      %v3072 = vpack.c.b16 %v3022, %v3020
      %v3073 = vpack.c.b16 %v3023, %v3021
      %v3074 = vpack.c.b16 %v3026, %v3024
      %v3075 = vpack.c.b16 %v3027, %v3025
      %v3076 = vpack.c.b16 %v3030, %v3028
      %v3077 = vpack.c.b16 %v3031, %v3029
      %v3078 = vpack.c.b16 %v3034, %v3032
      %v3079 = vpack.c.b16 %v3035, %v3033
      %v3080 = vpack.c.b16 %v3038, %v3036
      %v3081 = vpack.c.b16 %v3039, %v3037
      %v3082 = vpack.c.b16 %v3042, %v3040
      %v3083 = vpack.c.b16 %v3043, %v3041
      %v3084 = vpack.c.b16 %v3046, %v3044
      %v3085 = vpack.c.b16 %v3047, %v3045
      %v3086 = vpack.c.b16 %v3050, %v3048
      %v3087 = vpack.c.b16 %v3051, %v3049
      %v3088 = vpack.c.b16 %v3054, %v3052
      %v3089 = vpack.c.b16 %v3055, %v3053
      %v3090 = vpack.c.b16 %v3058, %v3056
      %v3091 = vpack.c.b16 %v3059, %v3057
      %3124 = vmatprep.subr.bf16.mxu0 %v3061
      %3125 = vmatpush1.bf16.msra.mxu0 %v3060
      %3126 = vmatprep.subr.bf16.mxu0 %v3063
      %3127 = vmatpush1.bf16.msra.mxu0 %v3062
      %3128 = vmatprep.subr.bf16.mxu0 %v3065
      %3129 = vmatpush1.bf16.msra.mxu0 %v3064
      %3130 = vmatprep.subr.bf16.mxu0 %v3067
      %3131 = vmatpush1.bf16.msra.mxu0 %v3066
      %3132 = vmatprep.subr.bf16.mxu0 %v3069
      %3133 = vmatpush1.bf16.msra.mxu0 %v3068
      %3134 = vmatprep.subr.bf16.mxu0 %v3071
      %3135 = vmatpush1.bf16.msra.mxu0 %v3070
      %3136 = vmatprep.subr.bf16.mxu0 %v3073
      %3137 = vmatpush1.bf16.msra.mxu0 %v3072
      %3138 = vmatprep.subr.bf16.mxu0 %v3075
      %3139 = vmatpush1.bf16.msra.mxu0 %v3074
      %3140 = vmatprep.subr.bf16.mxu0 %v3077
      %3141 = vmatpush1.bf16.msra.mxu0 %v3076
      %3142 = vmatprep.subr.bf16.mxu0 %v3079
      %3143 = vmatpush1.bf16.msra.mxu0 %v3078
      %3144 = vmatprep.subr.bf16.mxu0 %v3081
      %3145 = vmatpush1.bf16.msra.mxu0 %v3080
      %3146 = vmatprep.subr.bf16.mxu0 %v3083
      %3147 = vmatpush1.bf16.msra.mxu0 %v3082
      %3148 = vmatprep.subr.bf16.mxu0 %v3085
      %3149 = vmatpush1.bf16.msra.mxu0 %v3084
      %3150 = vmatprep.subr.bf16.mxu0 %v3087
      %3151 = vmatpush1.bf16.msra.mxu0 %v3086
      %3152 = vmatprep.subr.bf16.mxu0 %v3089
      %3153 = vmatpush1.bf16.msra.mxu0 %v3088
      %3154 = vmatprep.subr.bf16.mxu0 %v3091
      %3155 = vmatpush1.bf16.msra.mxu0 %v3090
      %3156 = vmatprep.mubr.bf16.mxu0 %v476
      %3157 = vmatmul.mubr.bf16.gmra.mrb[0].mxu0 %v475
      %v3158 = vpop.f32.mrb[0].mxu0
      %v3159 = vadd.f32 0.0, %v3158
      %v3160 = vpop.f32.mrb[0].mxu0
      %v3161 = vadd.f32 0.0, %v3160
      %v3162 = vpop.f32.mrb[0].mxu0
      %v3163 = vadd.f32 0.0, %v3162
      %v3164 = vpop.f32.mrb[0].mxu0
      %v3165 = vadd.f32 0.0, %v3164
      %3166 = vdwg.mxu0
      %v3167 = vpack.c.bf16 %v3163, %v3159
      %v3168 = vpack.c.bf16 %v3165, %v3161
      %s3169 = scalar_lea.vmem %s5, 56
      %v3170 = vld [vmem:[%s3169] sm:$0xf]
      %v3171 = vld [vmem:[%s3169 + $0x4] sm:$0xf]
      %v3174 = vunpack.c.l.b16 %v3170
      %v3175 = vunpack.c.l.b16 %v3171
      %v3176 = vpack.c.b16 %v3175, %v3174
      %v3178 = vsel %vm1017, %v3176, 0
      %3180 = vmatprep.subr.bf16.mxu0 %v3168
      %3181 = vmatpush1.bf16.msra.mxu0 %v3167
      %3182 = vmatprep.subr.bf16.mxu0 0
      %3183 = vmatpush1.bf16.msra.mxu0 0
      %3184 = vmatprep.subr.bf16.mxu0 0
      %3185 = vmatpush1.bf16.msra.mxu0 0
      %3186 = vmatprep.subr.bf16.mxu0 0
      %3187 = vmatpush1.bf16.msra.mxu0 0
      %3188 = vmatprep.subr.bf16.mxu0 0
      %3189 = vmatpush1.bf16.msra.mxu0 0
      %3190 = vmatprep.subr.bf16.mxu0 0
      %3191 = vmatpush1.bf16.msra.mxu0 0
      %3192 = vmatprep.subr.bf16.mxu0 0
      %3193 = vmatpush1.bf16.msra.mxu0 0
      %3194 = vmatprep.subr.bf16.mxu0 0
      %3195 = vmatpush1.bf16.msra.mxu0 0
      %3196 = vmatprep.subr.bf16.mxu0 0
      %3197 = vmatpush1.bf16.msra.mxu0 0
      %3198 = vmatprep.subr.bf16.mxu0 0
      %3199 = vmatpush1.bf16.msra.mxu0 0
      %3200 = vmatprep.subr.bf16.mxu0 0
      %3201 = vmatpush1.bf16.msra.mxu0 0
      %3202 = vmatprep.subr.bf16.mxu0 0
      %3203 = vmatpush1.bf16.msra.mxu0 0
      %3204 = vmatprep.subr.bf16.mxu0 0
      %3205 = vmatpush1.bf16.msra.mxu0 0
      %3206 = vmatprep.subr.bf16.mxu0 0
      %3207 = vmatpush1.bf16.msra.mxu0 0
      %3208 = vmatprep.subr.bf16.mxu0 0
      %3209 = vmatpush1.bf16.msra.mxu0 0
      %3210 = vmatprep.subr.bf16.mxu0 0
      %3211 = vmatpush1.bf16.msra.mxu0 0
      %3212 = vmatprep.mubr.bf16.mxu0 0
      %3213 = vmatmul.mubr.bf16.gmra.mrb[0].mxu0 %v3178
      %v3214 = vpop.f32.mrb[0].mxu0
      %v3215 = vadd.f32 0.0, %v3214
      %v3216 = vpop.f32.mrb[0].mxu0
      %v3217 = vadd.f32 0.0, %v3216
      %v3218 = vpop.f32.mrb[0].mxu0
      %v3219 = vadd.f32 0.0, %v3218
      %v3220 = vpop.f32.mrb[0].mxu0
      %v3221 = vadd.f32 0.0, %v3220
      %3222 = vdwg.mxu0
      %v3223 = vadd.f32 %v2871, %v3215
      %v3224 = vadd.f32 %v2872, %v3217
      %v3225 = vadd.f32 %v2873, %v3219
      %v3226 = vadd.f32 %v2874, %v3221
      %s3227 = scalar_lea.vmem %s2, 14
      %v3228 = vld [vmem:[%s3227] sm:$0x3]
      %v3230 = vlaneseq
      %v3231 = vshrl.u32 %v3230, 7
      %v3232 = vsub.s32 0, %v3231
      %v3233 = vrot.slane %v3228, %v3232
      %v3234 = vlaneseq
      %v3235 = vshrl.u32 %v3234, 7
      %v3236 = vsub.s32 1, %v3235
      %v3237 = vrot.slane %v3228, %v3236
      %3240 = vmatprep.subr.bf16.mxu0 %v3061
      %3241 = vmatpush1.bf16.msra.mxu0 %v3060
      %3242 = vmatprep.subr.bf16.mxu0 %v3063
      %3243 = vmatpush1.bf16.msra.mxu0 %v3062
      %3244 = vmatprep.subr.bf16.mxu0 %v3065
      %3245 = vmatpush1.bf16.msra.mxu0 %v3064
      %3246 = vmatprep.subr.bf16.mxu0 %v3067
      %3247 = vmatpush1.bf16.msra.mxu0 %v3066
      %3248 = vmatprep.subr.bf16.mxu0 %v3069
      %3249 = vmatpush1.bf16.msra.mxu0 %v3068
      %3250 = vmatprep.subr.bf16.mxu0 %v3071
      %3251 = vmatpush1.bf16.msra.mxu0 %v3070
      %3252 = vmatprep.subr.bf16.mxu0 %v3073
      %3253 = vmatpush1.bf16.msra.mxu0 %v3072
      %3254 = vmatprep.subr.bf16.mxu0 %v3075
      %3255 = vmatpush1.bf16.msra.mxu0 %v3074
      %3256 = vmatprep.subr.bf16.mxu0 %v3077
      %3257 = vmatpush1.bf16.msra.mxu0 %v3076
      %3258 = vmatprep.subr.bf16.mxu0 %v3079
      %3259 = vmatpush1.bf16.msra.mxu0 %v3078
      %3260 = vmatprep.subr.bf16.mxu0 %v3081
      %3261 = vmatpush1.bf16.msra.mxu0 %v3080
      %3262 = vmatprep.subr.bf16.mxu0 %v3083
      %3263 = vmatpush1.bf16.msra.mxu0 %v3082
      %3264 = vmatprep.subr.bf16.mxu0 %v3085
      %3265 = vmatpush1.bf16.msra.mxu0 %v3084
      %3266 = vmatprep.subr.bf16.mxu0 %v3087
      %3267 = vmatpush1.bf16.msra.mxu0 %v3086
      %3268 = vmatprep.subr.bf16.mxu0 %v3089
      %3269 = vmatpush1.bf16.msra.mxu0 %v3088
      %3270 = vmatprep.subr.bf16.mxu0 %v3091
      %3271 = vmatpush1.bf16.msra.mxu0 %v3090
      %3272 = vmatprep.mubr.bf16.mxu0 %v416
      %3273 = vmatmul.mubr.bf16.gmra.mrb[0].mxu0 %v415
      %v3274 = vpop.f32.mrb[0].mxu0
      %v3275 = vadd.f32 %v3233, %v3274
      %v3276 = vpop.f32.mrb[0].mxu0
      %v3277 = vadd.f32 %v3237, %v3276
      %v3278 = vpop.f32.mrb[0].mxu0
      %v3279 = vpop.f32.mrb[0].mxu0
      %3280 = vdwg.mxu0
      %v3281 = vmax.f32 %v2929, %v3275
      %v3282 = vmax.f32 %v2930, %v3277
      %s3283 = scalar_lea.vmem %s1, 2048
      %v3284 = vld [vmem:[%s3283] sm:$0xff]
      %v3285 = vld [vmem:[%s3283 + $0x8] sm:$0xff]
      %v3286 = vld [vmem:[%s3283 + $0x10] sm:$0xff]
      %v3287 = vld [vmem:[%s3283 + $0x18] sm:$0xff]
      %v3288 = vld [vmem:[%s3283 + $0x20] sm:$0xff]
      %v3289 = vld [vmem:[%s3283 + $0x28] sm:$0xff]
      %v3290 = vld [vmem:[%s3283 + $0x30] sm:$0xff]
      %v3291 = vld [vmem:[%s3283 + $0x38] sm:$0xff]
      %v3292 = vld [vmem:[%s3283 + $0x40] sm:$0xff]
      %v3293 = vld [vmem:[%s3283 + $0x48] sm:$0xff]
      %v3294 = vld [vmem:[%s3283 + $0x50] sm:$0xff]
      %v3295 = vld [vmem:[%s3283 + $0x58] sm:$0xff]
      %v3296 = vld [vmem:[%s3283 + $0x60] sm:$0xff]
      %v3297 = vld [vmem:[%s3283 + $0x68] sm:$0xff]
      %v3298 = vld [vmem:[%s3283 + $0x70] sm:$0xff]
      %v3299 = vld [vmem:[%s3283 + $0x78] sm:$0xff]
      %v3300 = vld [vmem:[%s3283 + $0x80] sm:$0xff]
      %v3301 = vld [vmem:[%s3283 + $0x88] sm:$0xff]
      %v3302 = vld [vmem:[%s3283 + $0x90] sm:$0xff]
      %v3303 = vld [vmem:[%s3283 + $0x98] sm:$0xff]
      %v3304 = vld [vmem:[%s3283 + $0xa0] sm:$0xff]
      %v3305 = vld [vmem:[%s3283 + $0xa8] sm:$0xff]
      %v3306 = vld [vmem:[%s3283 + $0xb0] sm:$0xff]
      %v3307 = vld [vmem:[%s3283 + $0xb8] sm:$0xff]
      %v3308 = vld [vmem:[%s3283 + $0xc0] sm:$0xff]
      %v3309 = vld [vmem:[%s3283 + $0xc8] sm:$0xff]
      %v3310 = vld [vmem:[%s3283 + $0xd0] sm:$0xff]
      %v3311 = vld [vmem:[%s3283 + $0xd8] sm:$0xff]
      %v3312 = vld [vmem:[%s3283 + $0xe0] sm:$0xff]
      %v3313 = vld [vmem:[%s3283 + $0xe8] sm:$0xff]
      %v3314 = vld [vmem:[%s3283 + $0xf0] sm:$0xff]
      %v3315 = vld [vmem:[%s3283 + $0xf8] sm:$0xff]
      %v3348 = vunpack.c.l.b16 %v3284
      %v3349 = vunpack.c.h.b16 %v3284
      %v3350 = vunpack.c.l.b16 %v3285
      %v3351 = vunpack.c.h.b16 %v3285
      %v3352 = vunpack.c.l.b16 %v3286
      %v3353 = vunpack.c.h.b16 %v3286
      %v3354 = vunpack.c.l.b16 %v3287
      %v3355 = vunpack.c.h.b16 %v3287
      %v3356 = vunpack.c.l.b16 %v3288
      %v3357 = vunpack.c.h.b16 %v3288
      %v3358 = vunpack.c.l.b16 %v3289
      %v3359 = vunpack.c.h.b16 %v3289
      %v3360 = vunpack.c.l.b16 %v3290
      %v3361 = vunpack.c.h.b16 %v3290
      %v3362 = vunpack.c.l.b16 %v3291
      %v3363 = vunpack.c.h.b16 %v3291
      %v3364 = vunpack.c.l.b16 %v3292
      %v3365 = vunpack.c.h.b16 %v3292
      %v3366 = vunpack.c.l.b16 %v3293
      %v3367 = vunpack.c.h.b16 %v3293
      %v3368 = vunpack.c.l.b16 %v3294
      %v3369 = vunpack.c.h.b16 %v3294
      %v3370 = vunpack.c.l.b16 %v3295
      %v3371 = vunpack.c.h.b16 %v3295
      %v3372 = vunpack.c.l.b16 %v3296
      %v3373 = vunpack.c.h.b16 %v3296
      %v3374 = vunpack.c.l.b16 %v3297
      %v3375 = vunpack.c.h.b16 %v3297
      %v3376 = vunpack.c.l.b16 %v3298
      %v3377 = vunpack.c.h.b16 %v3298
      %v3378 = vunpack.c.l.b16 %v3299
      %v3379 = vunpack.c.h.b16 %v3299
      %v3380 = vunpack.c.l.b16 %v3300
      %v3381 = vunpack.c.h.b16 %v3300
      %v3382 = vunpack.c.l.b16 %v3301
      %v3383 = vunpack.c.h.b16 %v3301
      %v3384 = vunpack.c.l.b16 %v3302
      %v3385 = vunpack.c.h.b16 %v3302
      %v3386 = vunpack.c.l.b16 %v3303
      %v3387 = vunpack.c.h.b16 %v3303
      %v3388 = vunpack.c.l.b16 %v3304
      %v3389 = vunpack.c.h.b16 %v3304
      %v3390 = vunpack.c.l.b16 %v3305
      %v3391 = vunpack.c.h.b16 %v3305
      %v3392 = vunpack.c.l.b16 %v3306
      %v3393 = vunpack.c.h.b16 %v3306
      %v3394 = vunpack.c.l.b16 %v3307
      %v3395 = vunpack.c.h.b16 %v3307
      %v3396 = vunpack.c.l.b16 %v3308
      %v3397 = vunpack.c.h.b16 %v3308
      %v3398 = vunpack.c.l.b16 %v3309
      %v3399 = vunpack.c.h.b16 %v3309
      %v3400 = vunpack.c.l.b16 %v3310
      %v3401 = vunpack.c.h.b16 %v3310
      %v3402 = vunpack.c.l.b16 %v3311
      %v3403 = vunpack.c.h.b16 %v3311
      %v3404 = vunpack.c.l.b16 %v3312
      %v3405 = vunpack.c.h.b16 %v3312
      %v3406 = vunpack.c.l.b16 %v3313
      %v3407 = vunpack.c.h.b16 %v3313
      %v3408 = vunpack.c.l.b16 %v3314
      %v3409 = vunpack.c.h.b16 %v3314
      %v3410 = vunpack.c.l.b16 %v3315
      %v3411 = vunpack.c.h.b16 %v3315
      %v3412 = vpack.c.b16 %v3350, %v3348
      %v3413 = vpack.c.b16 %v3351, %v3349
      %v3414 = vpack.c.b16 %v3354, %v3352
      %v3415 = vpack.c.b16 %v3355, %v3353
      %v3416 = vpack.c.b16 %v3358, %v3356
      %v3417 = vpack.c.b16 %v3359, %v3357
      %v3418 = vpack.c.b16 %v3362, %v3360
      %v3419 = vpack.c.b16 %v3363, %v3361
      %v3420 = vpack.c.b16 %v3366, %v3364
      %v3421 = vpack.c.b16 %v3367, %v3365
      %v3422 = vpack.c.b16 %v3370, %v3368
      %v3423 = vpack.c.b16 %v3371, %v3369
      %v3424 = vpack.c.b16 %v3374, %v3372
      %v3425 = vpack.c.b16 %v3375, %v3373
      %v3426 = vpack.c.b16 %v3378, %v3376
      %v3427 = vpack.c.b16 %v3379, %v3377
      %v3428 = vpack.c.b16 %v3382, %v3380
      %v3429 = vpack.c.b16 %v3383, %v3381
      %v3430 = vpack.c.b16 %v3386, %v3384
      %v3431 = vpack.c.b16 %v3387, %v3385
      %v3432 = vpack.c.b16 %v3390, %v3388
      %v3433 = vpack.c.b16 %v3391, %v3389
      %v3434 = vpack.c.b16 %v3394, %v3392
      %v3435 = vpack.c.b16 %v3395, %v3393
      %v3436 = vpack.c.b16 %v3398, %v3396
      %v3437 = vpack.c.b16 %v3399, %v3397
      %v3438 = vpack.c.b16 %v3402, %v3400
      %v3439 = vpack.c.b16 %v3403, %v3401
      %v3440 = vpack.c.b16 %v3406, %v3404
      %v3441 = vpack.c.b16 %v3407, %v3405
      %v3442 = vpack.c.b16 %v3410, %v3408
      %v3443 = vpack.c.b16 %v3411, %v3409
      %3476 = vmatprep.subr.bf16.mxu0 %v3413
      %3477 = vmatpush1.bf16.msra.mxu0 %v3412
      %3478 = vmatprep.subr.bf16.mxu0 %v3415
      %3479 = vmatpush1.bf16.msra.mxu0 %v3414
      %3480 = vmatprep.subr.bf16.mxu0 %v3417
      %3481 = vmatpush1.bf16.msra.mxu0 %v3416
      %3482 = vmatprep.subr.bf16.mxu0 %v3419
      %3483 = vmatpush1.bf16.msra.mxu0 %v3418
      %3484 = vmatprep.subr.bf16.mxu0 %v3421
      %3485 = vmatpush1.bf16.msra.mxu0 %v3420
      %3486 = vmatprep.subr.bf16.mxu0 %v3423
      %3487 = vmatpush1.bf16.msra.mxu0 %v3422
      %3488 = vmatprep.subr.bf16.mxu0 %v3425
      %3489 = vmatpush1.bf16.msra.mxu0 %v3424
      %3490 = vmatprep.subr.bf16.mxu0 %v3427
      %3491 = vmatpush1.bf16.msra.mxu0 %v3426
      %3492 = vmatprep.subr.bf16.mxu0 %v3429
      %3493 = vmatpush1.bf16.msra.mxu0 %v3428
      %3494 = vmatprep.subr.bf16.mxu0 %v3431
      %3495 = vmatpush1.bf16.msra.mxu0 %v3430
      %3496 = vmatprep.subr.bf16.mxu0 %v3433
      %3497 = vmatpush1.bf16.msra.mxu0 %v3432
      %3498 = vmatprep.subr.bf16.mxu0 %v3435
      %3499 = vmatpush1.bf16.msra.mxu0 %v3434
      %3500 = vmatprep.subr.bf16.mxu0 %v3437
      %3501 = vmatpush1.bf16.msra.mxu0 %v3436
      %3502 = vmatprep.subr.bf16.mxu0 %v3439
      %3503 = vmatpush1.bf16.msra.mxu0 %v3438
      %3504 = vmatprep.subr.bf16.mxu0 %v3441
      %3505 = vmatpush1.bf16.msra.mxu0 %v3440
      %3506 = vmatprep.subr.bf16.mxu0 %v3443
      %3507 = vmatpush1.bf16.msra.mxu0 %v3442
      %3508 = vmatprep.mubr.bf16.mxu0 %v476
      %3509 = vmatmul.mubr.bf16.gmra.mrb[0].mxu0 %v475
      %v3510 = vpop.f32.mrb[0].mxu0
      %v3511 = vadd.f32 0.0, %v3510
      %v3512 = vpop.f32.mrb[0].mxu0
      %v3513 = vadd.f32 0.0, %v3512
      %v3514 = vpop.f32.mrb[0].mxu0
      %v3515 = vadd.f32 0.0, %v3514
      %v3516 = vpop.f32.mrb[0].mxu0
      %v3517 = vadd.f32 0.0, %v3516
      %3518 = vdwg.mxu0
      %v3519 = vpack.c.bf16 %v3515, %v3511
      %v3520 = vpack.c.bf16 %v3517, %v3513
      %s3521 = scalar_lea.vmem %s5, 64
      %v3522 = vld [vmem:[%s3521] sm:$0xf]
      %v3523 = vld [vmem:[%s3521 + $0x4] sm:$0xf]
      %v3526 = vunpack.c.l.b16 %v3522
      %v3527 = vunpack.c.l.b16 %v3523
      %v3528 = vpack.c.b16 %v3527, %v3526
      %v3530 = vsel %vm1017, %v3528, 0
      %3532 = vmatprep.subr.bf16.mxu0 %v3520
      %3533 = vmatpush1.bf16.msra.mxu0 %v3519
      %3534 = vmatprep.subr.bf16.mxu0 0
      %3535 = vmatpush1.bf16.msra.mxu0 0
      %3536 = vmatprep.subr.bf16.mxu0 0
      %3537 = vmatpush1.bf16.msra.mxu0 0
      %3538 = vmatprep.subr.bf16.mxu0 0
      %3539 = vmatpush1.bf16.msra.mxu0 0
      %3540 = vmatprep.subr.bf16.mxu0 0
      %3541 = vmatpush1.bf16.msra.mxu0 0
      %3542 = vmatprep.subr.bf16.mxu0 0
      %3543 = vmatpush1.bf16.msra.mxu0 0
      %3544 = vmatprep.subr.bf16.mxu0 0
      %3545 = vmatpush1.bf16.msra.mxu0 0
      %3546 = vmatprep.subr.bf16.mxu0 0
      %3547 = vmatpush1.bf16.msra.mxu0 0
      %3548 = vmatprep.subr.bf16.mxu0 0
      %3549 = vmatpush1.bf16.msra.mxu0 0
      %3550 = vmatprep.subr.bf16.mxu0 0
      %3551 = vmatpush1.bf16.msra.mxu0 0
      %3552 = vmatprep.subr.bf16.mxu0 0
      %3553 = vmatpush1.bf16.msra.mxu0 0
      %3554 = vmatprep.subr.bf16.mxu0 0
      %3555 = vmatpush1.bf16.msra.mxu0 0
      %3556 = vmatprep.subr.bf16.mxu0 0
      %3557 = vmatpush1.bf16.msra.mxu0 0
      %3558 = vmatprep.subr.bf16.mxu0 0
      %3559 = vmatpush1.bf16.msra.mxu0 0
      %3560 = vmatprep.subr.bf16.mxu0 0
      %3561 = vmatpush1.bf16.msra.mxu0 0
      %3562 = vmatprep.subr.bf16.mxu0 0
      %3563 = vmatpush1.bf16.msra.mxu0 0
      %3564 = vmatprep.mubr.bf16.mxu0 0
      %3565 = vmatmul.mubr.bf16.gmra.mrb[0].mxu0 %v3530
      %v3566 = vpop.f32.mrb[0].mxu0
      %v3567 = vadd.f32 0.0, %v3566
      %v3568 = vpop.f32.mrb[0].mxu0
      %v3569 = vadd.f32 0.0, %v3568
      %v3570 = vpop.f32.mrb[0].mxu0
      %v3571 = vadd.f32 0.0, %v3570
      %v3572 = vpop.f32.mrb[0].mxu0
      %v3573 = vadd.f32 0.0, %v3572
      %3574 = vdwg.mxu0
      %v3575 = vadd.f32 %v3223, %v3567
      %v3576 = vadd.f32 %v3224, %v3569
      %v3577 = vadd.f32 %v3225, %v3571
      %v3578 = vadd.f32 %v3226, %v3573
      %s3579 = scalar_lea.vmem %s2, 16
      %v3580 = vld [vmem:[%s3579] sm:$0x3]
      %v3582 = vlaneseq
      %v3583 = vshrl.u32 %v3582, 7
      %v3584 = vsub.s32 0, %v3583
      %v3585 = vrot.slane %v3580, %v3584
      %v3586 = vlaneseq
      %v3587 = vshrl.u32 %v3586, 7
      %v3588 = vsub.s32 1, %v3587
      %v3589 = vrot.slane %v3580, %v3588
      %3592 = vmatprep.subr.bf16.mxu0 %v3413
      %3593 = vmatpush1.bf16.msra.mxu0 %v3412
      %3594 = vmatprep.subr.bf16.mxu0 %v3415
      %3595 = vmatpush1.bf16.msra.mxu0 %v3414
      %3596 = vmatprep.subr.bf16.mxu0 %v3417
      %3597 = vmatpush1.bf16.msra.mxu0 %v3416
      %3598 = vmatprep.subr.bf16.mxu0 %v3419
      %3599 = vmatpush1.bf16.msra.mxu0 %v3418
      %3600 = vmatprep.subr.bf16.mxu0 %v3421
      %3601 = vmatpush1.bf16.msra.mxu0 %v3420
      %3602 = vmatprep.subr.bf16.mxu0 %v3423
      %3603 = vmatpush1.bf16.msra.mxu0 %v3422
      %3604 = vmatprep.subr.bf16.mxu0 %v3425
      %3605 = vmatpush1.bf16.msra.mxu0 %v3424
      %3606 = vmatprep.subr.bf16.mxu0 %v3427
      %3607 = vmatpush1.bf16.msra.mxu0 %v3426
      %3608 = vmatprep.subr.bf16.mxu0 %v3429
      %3609 = vmatpush1.bf16.msra.mxu0 %v3428
      %3610 = vmatprep.subr.bf16.mxu0 %v3431
      %3611 = vmatpush1.bf16.msra.mxu0 %v3430
      %3612 = vmatprep.subr.bf16.mxu0 %v3433
      %3613 = vmatpush1.bf16.msra.mxu0 %v3432
      %3614 = vmatprep.subr.bf16.mxu0 %v3435
      %3615 = vmatpush1.bf16.msra.mxu0 %v3434
      %3616 = vmatprep.subr.bf16.mxu0 %v3437
      %3617 = vmatpush1.bf16.msra.mxu0 %v3436
      %3618 = vmatprep.subr.bf16.mxu0 %v3439
      %3619 = vmatpush1.bf16.msra.mxu0 %v3438
      %3620 = vmatprep.subr.bf16.mxu0 %v3441
      %3621 = vmatpush1.bf16.msra.mxu0 %v3440
      %3622 = vmatprep.subr.bf16.mxu0 %v3443
      %3623 = vmatpush1.bf16.msra.mxu0 %v3442
      %3624 = vmatprep.mubr.bf16.mxu0 %v416
      %3625 = vmatmul.mubr.bf16.gmra.mrb[0].mxu0 %v415
      %v3626 = vpop.f32.mrb[0].mxu0
      %v3627 = vadd.f32 %v3585, %v3626
      %v3628 = vpop.f32.mrb[0].mxu0
      %v3629 = vadd.f32 %v3589, %v3628
      %v3630 = vpop.f32.mrb[0].mxu0
      %v3631 = vpop.f32.mrb[0].mxu0
      %3632 = vdwg.mxu0
      %v3633 = vmax.f32 %v3281, %v3627
      %v3634 = vmax.f32 %v3282, %v3629
      %v3635 = vld [vmem:[%s6] sm:$0xff]
      %v3636 = vld [vmem:[%s6 + $0x8] sm:$0xff]
      %3638 = vset.pattern.permute.xlu0 0
      %3639 = vperm.xlu0 %3638, %v3635
      %v3640 = vpop.permute.xlu0 %3639
      %3643 = vset.pattern.permute.xlu0 0
      %3644 = vperm.xlu0 %3643, %v3636
      %v3645 = vpop.permute.xlu0 %3644
      %v3647 = vadd.f32 %v3575, %v3640
      %v3648 = vadd.f32 %v3576, %v3640
      %v3649 = vadd.f32 %v3577, %v3645
      %v3650 = vadd.f32 %v3578, %v3645
      %v3651 = vmax.f32 %v3647, 0.0
      %v3652 = vmax.f32 %v3648, 0.0
      %v3653 = vmax.f32 %v3649, 0.0
      %v3654 = vmax.f32 %v3650, 0.0
      %v3655 = vpack.c.bf16 %v3653, %v3653
      %v3656 = vpack.c.bf16 %v3654, %v3654
      %3657 = vmatprep.subr.bf16.mxu0 %v606
      %3658 = vmatpush1.bf16.msra.mxu0 %v605
      %3659 = vmatprep.subr.bf16.mxu0 %v608
      %3660 = vmatpush1.bf16.msra.mxu0 %v607
      %3661 = vmatprep.subr.bf16.mxu0 %v610
      %3662 = vmatpush1.bf16.msra.mxu0 %v609
      %3663 = vmatprep.subr.bf16.mxu0 %v612
      %3664 = vmatpush1.bf16.msra.mxu0 %v611
      %3665 = vmatprep.subr.bf16.mxu0 %v614
      %3666 = vmatpush1.bf16.msra.mxu0 %v613
      %3667 = vmatprep.subr.bf16.mxu0 %v616
      %3668 = vmatpush1.bf16.msra.mxu0 %v615
      %3669 = vmatprep.subr.bf16.mxu0 %v618
      %3670 = vmatpush1.bf16.msra.mxu0 %v617
      %3671 = vmatprep.subr.bf16.mxu0 %v620
      %3672 = vmatpush1.bf16.msra.mxu0 %v619
      %3673 = vmatprep.subr.bf16.mxu0 %v622
      %3674 = vmatpush1.bf16.msra.mxu0 %v621
      %3675 = vmatprep.subr.bf16.mxu0 %v624
      %3676 = vmatpush1.bf16.msra.mxu0 %v623
      %3677 = vmatprep.subr.bf16.mxu0 %v626
      %3678 = vmatpush1.bf16.msra.mxu0 %v625
      %3679 = vmatprep.subr.bf16.mxu0 %v628
      %3680 = vmatpush1.bf16.msra.mxu0 %v627
      %3681 = vmatprep.subr.bf16.mxu0 %v630
      %3682 = vmatpush1.bf16.msra.mxu0 %v629
      %3683 = vmatprep.subr.bf16.mxu0 %v632
      %3684 = vmatpush1.bf16.msra.mxu0 %v631
      %3685 = vmatprep.subr.bf16.mxu0 %v634
      %3686 = vmatpush1.bf16.msra.mxu0 %v633
      %3687 = vmatprep.subr.bf16.mxu0 %v636
      %3688 = vmatpush1.bf16.msra.mxu0 %v635
      %3689 = vmatprep.mubr.bf16.mxu0 %v3656
      %3690 = vmatmul.mubr.bf16.gmra.mrb[0].mxu0 %v3655
      %v3691 = vpop.f32.mrb[0].mxu0
      %v3692 = vadd.f32 0.0, %v3691
      %v3693 = vpop.f32.mrb[0].mxu0
      %v3694 = vadd.f32 0.0, %v3693
      %v3695 = vpop.f32.mrb[0].mxu0
      %v3696 = vpop.f32.mrb[0].mxu0
      %3697 = vdwg.mxu0
      %v3698 = vpack.c.bf16 %v3692, %v3692
      %v3699 = vpack.c.bf16 %v3694, %v3694
      %v3700 = vld [vmem:[%s7] sm:$0xf]
      %3701 = vmatprep.subr.bf16.mxu0 %v901
      %3702 = vmatpush1.bf16.msra.mxu0 %v900
      %3703 = vmatprep.subr.bf16.mxu0 %v903
      %3704 = vmatpush1.bf16.msra.mxu0 %v902
      %3705 = vmatprep.subr.bf16.mxu0 %v905
      %3706 = vmatpush1.bf16.msra.mxu0 %v904
      %3707 = vmatprep.subr.bf16.mxu0 %v907
      %3708 = vmatpush1.bf16.msra.mxu0 %v906
      %3709 = vmatprep.subr.bf16.mxu0 %v909
      %3710 = vmatpush1.bf16.msra.mxu0 %v908
      %3711 = vmatprep.subr.bf16.mxu0 %v911
      %3712 = vmatpush1.bf16.msra.mxu0 %v910
      %3713 = vmatprep.subr.bf16.mxu0 %v913
      %3714 = vmatpush1.bf16.msra.mxu0 %v912
      %3715 = vmatprep.subr.bf16.mxu0 %v915
      %3716 = vmatpush1.bf16.msra.mxu0 %v914
      %3717 = vmatprep.subr.bf16.mxu0 %v917
      %3718 = vmatpush1.bf16.msra.mxu0 %v916
      %3719 = vmatprep.subr.bf16.mxu0 %v919
      %3720 = vmatpush1.bf16.msra.mxu0 %v918
      %3721 = vmatprep.subr.bf16.mxu0 %v921
      %3722 = vmatpush1.bf16.msra.mxu0 %v920
      %3723 = vmatprep.subr.bf16.mxu0 %v923
      %3724 = vmatpush1.bf16.msra.mxu0 %v922
      %3725 = vmatprep.subr.bf16.mxu0 %v925
      %3726 = vmatpush1.bf16.msra.mxu0 %v924
      %3727 = vmatprep.subr.bf16.mxu0 %v927
      %3728 = vmatpush1.bf16.msra.mxu0 %v926
      %3729 = vmatprep.subr.bf16.mxu0 %v929
      %3730 = vmatpush1.bf16.msra.mxu0 %v928
      %3731 = vmatprep.subr.bf16.mxu0 %v931
      %3732 = vmatpush1.bf16.msra.mxu0 %v930
      %3733 = vmatprep.mubr.bf16.mxu0 %v3656
      %3734 = vmatmul.mubr.bf16.gmra.mrb[0].mxu0 %v3655
      %v3735 = vpop.f32.mrb[0].mxu0
      %v3736 = vadd.f32 0.0, %v3735
      %v3737 = vpop.f32.mrb[0].mxu0
      %v3738 = vadd.f32 0.0, %v3737
      %v3739 = vpop.f32.mrb[0].mxu0
      %v3740 = vpop.f32.mrb[0].mxu0
      %3741 = vdwg.mxu0
      %v3742 = vpack.c.bf16 %v3736, %v3736
      %v3743 = vpack.c.bf16 %v3738, %v3738
      %s3744 = scalar_lea.vmem %s7, 4
      %v3745 = vld [vmem:[%s3744] sm:$0xf]
      %vm3746 = vcmask 64512
      %v3748 = vsel %vm3746, %v3745, 0
      %vm3750 = vcmask 1043456
      %v3752 = vsel %vm3750, %v3742, 0
      %v3755 = vsel %vm3750, %v3743, 0
      %3757 = vmatprep.subr.bf16.mxu0 %v3755
      %3758 = vmatpush1.bf16.msra.mxu0 %v3752
      %3759 = vmatprep.subr.bf16.mxu0 0
      %3760 = vmatpush1.bf16.msra.mxu0 0
      %3761 = vmatprep.subr.bf16.mxu0 0
      %3762 = vmatpush1.bf16.msra.mxu0 0
      %3763 = vmatprep.subr.bf16.mxu0 0
      %3764 = vmatpush1.bf16.msra.mxu0 0
      %3765 = vmatprep.subr.bf16.mxu0 0
      %3766 = vmatpush1.bf16.msra.mxu0 0
      %3767 = vmatprep.subr.bf16.mxu0 0
      %3768 = vmatpush1.bf16.msra.mxu0 0
      %3769 = vmatprep.subr.bf16.mxu0 0
      %3770 = vmatpush1.bf16.msra.mxu0 0
      %3771 = vmatprep.subr.bf16.mxu0 0
      %3772 = vmatpush1.bf16.msra.mxu0 0
      %3773 = vmatprep.subr.bf16.mxu0 0
      %3774 = vmatpush1.bf16.msra.mxu0 0
      %3775 = vmatprep.subr.bf16.mxu0 0
      %3776 = vmatpush1.bf16.msra.mxu0 0
      %3777 = vmatprep.subr.bf16.mxu0 0
      %3778 = vmatpush1.bf16.msra.mxu0 0
      %3779 = vmatprep.subr.bf16.mxu0 0
      %3780 = vmatpush1.bf16.msra.mxu0 0
      %3781 = vmatprep.subr.bf16.mxu0 0
      %3782 = vmatpush1.bf16.msra.mxu0 0
      %3783 = vmatprep.subr.bf16.mxu0 0
      %3784 = vmatpush1.bf16.msra.mxu0 0
      %3785 = vmatprep.subr.bf16.mxu0 0
      %3786 = vmatpush1.bf16.msra.mxu0 0
      %3787 = vmatprep.subr.bf16.mxu0 0
      %3788 = vmatpush1.bf16.msra.mxu0 0
      %3789 = vmatprep.mubr.bf16.mxu0 0
      %3790 = vmatmul.mubr.bf16.gmra.mrb[0].mxu0 %v3748
      %v3791 = vpop.f32.mrb[0].mxu0
      %v3792 = vadd.f32 0.0, %v3791
      %v3793 = vpop.f32.mrb[0].mxu0
      %v3794 = vadd.f32 0.0, %v3793
      %v3795 = vpop.f32.mrb[0].mxu0
      %v3796 = vpop.f32.mrb[0].mxu0
      %3797 = vdwg.mxu0
      %v3799 = vsel %vm3746, %v3700, 0
      %v3802 = vsel %vm3750, %v3698, 0
      %v3805 = vsel %vm3750, %v3699, 0
      %3807 = vmatprep.subr.bf16.mxu0 %v3805
      %3808 = vmatpush1.bf16.msra.mxu0 %v3802
      %3809 = vmatprep.subr.bf16.mxu0 0
      %3810 = vmatpush1.bf16.msra.mxu0 0
      %3811 = vmatprep.subr.bf16.mxu0 0
      %3812 = vmatpush1.bf16.msra.mxu0 0
      %3813 = vmatprep.subr.bf16.mxu0 0
      %3814 = vmatpush1.bf16.msra.mxu0 0
      %3815 = vmatprep.subr.bf16.mxu0 0
      %3816 = vmatpush1.bf16.msra.mxu0 0
      %3817 = vmatprep.subr.bf16.mxu0 0
      %3818 = vmatpush1.bf16.msra.mxu0 0
      %3819 = vmatprep.subr.bf16.mxu0 0
      %3820 = vmatpush1.bf16.msra.mxu0 0
      %3821 = vmatprep.subr.bf16.mxu0 0
      %3822 = vmatpush1.bf16.msra.mxu0 0
      %3823 = vmatprep.subr.bf16.mxu0 0
      %3824 = vmatpush1.bf16.msra.mxu0 0
      %3825 = vmatprep.subr.bf16.mxu0 0
      %3826 = vmatpush1.bf16.msra.mxu0 0
      %3827 = vmatprep.subr.bf16.mxu0 0
      %3828 = vmatpush1.bf16.msra.mxu0 0
      %3829 = vmatprep.subr.bf16.mxu0 0
      %3830 = vmatpush1.bf16.msra.mxu0 0
      %3831 = vmatprep.subr.bf16.mxu0 0
      %3832 = vmatpush1.bf16.msra.mxu0 0
      %3833 = vmatprep.subr.bf16.mxu0 0
      %3834 = vmatpush1.bf16.msra.mxu0 0
      %3835 = vmatprep.subr.bf16.mxu0 0
      %3836 = vmatpush1.bf16.msra.mxu0 0
      %3837 = vmatprep.subr.bf16.mxu0 0
      %3838 = vmatpush1.bf16.msra.mxu0 0
      %3839 = vmatprep.mubr.bf16.mxu0 0
      %3840 = vmatmul.mubr.bf16.gmra.mrb[0].mxu0 %v3799
      %v3841 = vpop.f32.mrb[0].mxu0
      %v3842 = vadd.f32 %v3792, %v3841
      %v3843 = vpop.f32.mrb[0].mxu0
      %v3844 = vadd.f32 %v3794, %v3843
      %v3845 = vpop.f32.mrb[0].mxu0
      %v3846 = vpop.f32.mrb[0].mxu0
      %3847 = vdwg.mxu0
      %3848 = vmatprep.subr.bf16.mxu0 %v1301
      %3849 = vmatpush1.bf16.msra.mxu0 %v1300
      %3850 = vmatprep.subr.bf16.mxu0 %v1303
      %3851 = vmatpush1.bf16.msra.mxu0 %v1302
      %3852 = vmatprep.subr.bf16.mxu0 %v1305
      %3853 = vmatpush1.bf16.msra.mxu0 %v1304
      %3854 = vmatprep.subr.bf16.mxu0 %v1307
      %3855 = vmatpush1.bf16.msra.mxu0 %v1306
      %3856 = vmatprep.subr.bf16.mxu0 %v1309
      %3857 = vmatpush1.bf16.msra.mxu0 %v1308
      %3858 = vmatprep.subr.bf16.mxu0 %v1311
      %3859 = vmatpush1.bf16.msra.mxu0 %v1310
      %3860 = vmatprep.subr.bf16.mxu0 %v1313
      %3861 = vmatpush1.bf16.msra.mxu0 %v1312
      %3862 = vmatprep.subr.bf16.mxu0 %v1315
      %3863 = vmatpush1.bf16.msra.mxu0 %v1314
      %3864 = vmatprep.subr.bf16.mxu0 %v1317
      %3865 = vmatpush1.bf16.msra.mxu0 %v1316
      %3866 = vmatprep.subr.bf16.mxu0 %v1319
      %3867 = vmatpush1.bf16.msra.mxu0 %v1318
      %3868 = vmatprep.subr.bf16.mxu0 %v1321
      %3869 = vmatpush1.bf16.msra.mxu0 %v1320
      %3870 = vmatprep.subr.bf16.mxu0 %v1323
      %3871 = vmatpush1.bf16.msra.mxu0 %v1322
      %3872 = vmatprep.subr.bf16.mxu0 %v1325
      %3873 = vmatpush1.bf16.msra.mxu0 %v1324
      %3874 = vmatprep.subr.bf16.mxu0 %v1327
      %3875 = vmatpush1.bf16.msra.mxu0 %v1326
      %3876 = vmatprep.subr.bf16.mxu0 %v1329
      %3877 = vmatpush1.bf16.msra.mxu0 %v1328
      %3878 = vmatprep.subr.bf16.mxu0 %v1331
      %3879 = vmatpush1.bf16.msra.mxu0 %v1330
      %3880 = vmatprep.mubr.bf16.mxu0 %v3656
      %3881 = vmatmul.mubr.bf16.gmra.mrb[0].mxu0 %v3655
      %v3882 = vpop.f32.mrb[0].mxu0
      %v3883 = vadd.f32 0.0, %v3882
      %v3884 = vpop.f32.mrb[0].mxu0
      %v3885 = vadd.f32 0.0, %v3884
      %v3886 = vpop.f32.mrb[0].mxu0
      %v3887 = vpop.f32.mrb[0].mxu0
      %3888 = vdwg.mxu0
      %v3889 = vpack.c.bf16 %v3883, %v3883
      %v3890 = vpack.c.bf16 %v3885, %v3885
      %s3891 = scalar_lea.vmem %s7, 8
      %v3892 = vld [vmem:[%s3891] sm:$0xf]
      %v3894 = vsel %vm3746, %v3892, 0
      %v3897 = vsel %vm3750, %v3889, 0
      %v3900 = vsel %vm3750, %v3890, 0
      %3902 = vmatprep.subr.bf16.mxu0 %v3900
      %3903 = vmatpush1.bf16.msra.mxu0 %v3897
      %3904 = vmatprep.subr.bf16.mxu0 0
      %3905 = vmatpush1.bf16.msra.mxu0 0
      %3906 = vmatprep.subr.bf16.mxu0 0
      %3907 = vmatpush1.bf16.msra.mxu0 0
      %3908 = vmatprep.subr.bf16.mxu0 0
      %3909 = vmatpush1.bf16.msra.mxu0 0
      %3910 = vmatprep.subr.bf16.mxu0 0
      %3911 = vmatpush1.bf16.msra.mxu0 0
      %3912 = vmatprep.subr.bf16.mxu0 0
      %3913 = vmatpush1.bf16.msra.mxu0 0
      %3914 = vmatprep.subr.bf16.mxu0 0
      %3915 = vmatpush1.bf16.msra.mxu0 0
      %3916 = vmatprep.subr.bf16.mxu0 0
      %3917 = vmatpush1.bf16.msra.mxu0 0
      %3918 = vmatprep.subr.bf16.mxu0 0
      %3919 = vmatpush1.bf16.msra.mxu0 0
      %3920 = vmatprep.subr.bf16.mxu0 0
      %3921 = vmatpush1.bf16.msra.mxu0 0
      %3922 = vmatprep.subr.bf16.mxu0 0
      %3923 = vmatpush1.bf16.msra.mxu0 0
      %3924 = vmatprep.subr.bf16.mxu0 0
      %3925 = vmatpush1.bf16.msra.mxu0 0
      %3926 = vmatprep.subr.bf16.mxu0 0
      %3927 = vmatpush1.bf16.msra.mxu0 0
      %3928 = vmatprep.subr.bf16.mxu0 0
      %3929 = vmatpush1.bf16.msra.mxu0 0
      %3930 = vmatprep.subr.bf16.mxu0 0
      %3931 = vmatpush1.bf16.msra.mxu0 0
      %3932 = vmatprep.subr.bf16.mxu0 0
      %3933 = vmatpush1.bf16.msra.mxu0 0
      %3934 = vmatprep.mubr.bf16.mxu0 0
      %3935 = vmatmul.mubr.bf16.gmra.mrb[0].mxu0 %v3894
      %v3936 = vpop.f32.mrb[0].mxu0
      %v3937 = vadd.f32 0.0, %v3936
      %v3938 = vpop.f32.mrb[0].mxu0
      %v3939 = vadd.f32 0.0, %v3938
      %v3940 = vpop.f32.mrb[0].mxu0
      %v3941 = vpop.f32.mrb[0].mxu0
      %3942 = vdwg.mxu0
      %v3943 = vadd.f32 %v3842, %v3937
      %v3944 = vadd.f32 %v3844, %v3939
      %3945 = vmatprep.subr.bf16.mxu0 %v1653
      %3946 = vmatpush1.bf16.msra.mxu0 %v1652
      %3947 = vmatprep.subr.bf16.mxu0 %v1655
      %3948 = vmatpush1.bf16.msra.mxu0 %v1654
      %3949 = vmatprep.subr.bf16.mxu0 %v1657
      %3950 = vmatpush1.bf16.msra.mxu0 %v1656
      %3951 = vmatprep.subr.bf16.mxu0 %v1659
      %3952 = vmatpush1.bf16.msra.mxu0 %v1658
      %3953 = vmatprep.subr.bf16.mxu0 %v1661
      %3954 = vmatpush1.bf16.msra.mxu0 %v1660
      %3955 = vmatprep.subr.bf16.mxu0 %v1663
      %3956 = vmatpush1.bf16.msra.mxu0 %v1662
      %3957 = vmatprep.subr.bf16.mxu0 %v1665
      %3958 = vmatpush1.bf16.msra.mxu0 %v1664
      %3959 = vmatprep.subr.bf16.mxu0 %v1667
      %3960 = vmatpush1.bf16.msra.mxu0 %v1666
      %3961 = vmatprep.subr.bf16.mxu0 %v1669
      %3962 = vmatpush1.bf16.msra.mxu0 %v1668
      %3963 = vmatprep.subr.bf16.mxu0 %v1671
      %3964 = vmatpush1.bf16.msra.mxu0 %v1670
      %3965 = vmatprep.subr.bf16.mxu0 %v1673
      %3966 = vmatpush1.bf16.msra.mxu0 %v1672
      %3967 = vmatprep.subr.bf16.mxu0 %v1675
      %3968 = vmatpush1.bf16.msra.mxu0 %v1674
      %3969 = vmatprep.subr.bf16.mxu0 %v1677
      %3970 = vmatpush1.bf16.msra.mxu0 %v1676
      %3971 = vmatprep.subr.bf16.mxu0 %v1679
      %3972 = vmatpush1.bf16.msra.mxu0 %v1678
      %3973 = vmatprep.subr.bf16.mxu0 %v1681
      %3974 = vmatpush1.bf16.msra.mxu0 %v1680
      %3975 = vmatprep.subr.bf16.mxu0 %v1683
      %3976 = vmatpush1.bf16.msra.mxu0 %v1682
      %3977 = vmatprep.mubr.bf16.mxu0 %v3656
      %3978 = vmatmul.mubr.bf16.gmra.mrb[0].mxu0 %v3655
      %v3979 = vpop.f32.mrb[0].mxu0
      %v3980 = vadd.f32 0.0, %v3979
      %v3981 = vpop.f32.mrb[0].mxu0
      %v3982 = vadd.f32 0.0, %v3981
      %v3983 = vpop.f32.mrb[0].mxu0
      %v3984 = vpop.f32.mrb[0].mxu0
      %3985 = vdwg.mxu0
      %v3986 = vpack.c.bf16 %v3980, %v3980
      %v3987 = vpack.c.bf16 %v3982, %v3982
      %s3988 = scalar_lea.vmem %s7, 12
      %v3989 = vld [vmem:[%s3988] sm:$0xf]
      %v3991 = vsel %vm3746, %v3989, 0
      %v3994 = vsel %vm3750, %v3986, 0
      %v3997 = vsel %vm3750, %v3987, 0
      %3999 = vmatprep.subr.bf16.mxu0 %v3997
      %4000 = vmatpush1.bf16.msra.mxu0 %v3994
      %4001 = vmatprep.subr.bf16.mxu0 0
      %4002 = vmatpush1.bf16.msra.mxu0 0
      %4003 = vmatprep.subr.bf16.mxu0 0
      %4004 = vmatpush1.bf16.msra.mxu0 0
      %4005 = vmatprep.subr.bf16.mxu0 0
      %4006 = vmatpush1.bf16.msra.mxu0 0
      %4007 = vmatprep.subr.bf16.mxu0 0
      %4008 = vmatpush1.bf16.msra.mxu0 0
      %4009 = vmatprep.subr.bf16.mxu0 0
      %4010 = vmatpush1.bf16.msra.mxu0 0
      %4011 = vmatprep.subr.bf16.mxu0 0
      %4012 = vmatpush1.bf16.msra.mxu0 0
      %4013 = vmatprep.subr.bf16.mxu0 0
      %4014 = vmatpush1.bf16.msra.mxu0 0
      %4015 = vmatprep.subr.bf16.mxu0 0
      %4016 = vmatpush1.bf16.msra.mxu0 0
      %4017 = vmatprep.subr.bf16.mxu0 0
      %4018 = vmatpush1.bf16.msra.mxu0 0
      %4019 = vmatprep.subr.bf16.mxu0 0
      %4020 = vmatpush1.bf16.msra.mxu0 0
      %4021 = vmatprep.subr.bf16.mxu0 0
      %4022 = vmatpush1.bf16.msra.mxu0 0
      %4023 = vmatprep.subr.bf16.mxu0 0
      %4024 = vmatpush1.bf16.msra.mxu0 0
      %4025 = vmatprep.subr.bf16.mxu0 0
      %4026 = vmatpush1.bf16.msra.mxu0 0
      %4027 = vmatprep.subr.bf16.mxu0 0
      %4028 = vmatpush1.bf16.msra.mxu0 0
      %4029 = vmatprep.subr.bf16.mxu0 0
      %4030 = vmatpush1.bf16.msra.mxu0 0
      %4031 = vmatprep.mubr.bf16.mxu0 0
      %4032 = vmatmul.mubr.bf16.gmra.mrb[0].mxu0 %v3991
      %v4033 = vpop.f32.mrb[0].mxu0
      %v4034 = vadd.f32 0.0, %v4033
      %v4035 = vpop.f32.mrb[0].mxu0
      %v4036 = vadd.f32 0.0, %v4035
      %v4037 = vpop.f32.mrb[0].mxu0
      %v4038 = vpop.f32.mrb[0].mxu0
      %4039 = vdwg.mxu0
      %v4040 = vadd.f32 %v3943, %v4034
      %v4041 = vadd.f32 %v3944, %v4036
      %4042 = vmatprep.subr.bf16.mxu0 %v2005
      %4043 = vmatpush1.bf16.msra.mxu0 %v2004
      %4044 = vmatprep.subr.bf16.mxu0 %v2007
      %4045 = vmatpush1.bf16.msra.mxu0 %v2006
      %4046 = vmatprep.subr.bf16.mxu0 %v2009
      %4047 = vmatpush1.bf16.msra.mxu0 %v2008
      %4048 = vmatprep.subr.bf16.mxu0 %v2011
      %4049 = vmatpush1.bf16.msra.mxu0 %v2010
      %4050 = vmatprep.subr.bf16.mxu0 %v2013
      %4051 = vmatpush1.bf16.msra.mxu0 %v2012
      %4052 = vmatprep.subr.bf16.mxu0 %v2015
      %4053 = vmatpush1.bf16.msra.mxu0 %v2014
      %4054 = vmatprep.subr.bf16.mxu0 %v2017
      %4055 = vmatpush1.bf16.msra.mxu0 %v2016
      %4056 = vmatprep.subr.bf16.mxu0 %v2019
      %4057 = vmatpush1.bf16.msra.mxu0 %v2018
      %4058 = vmatprep.subr.bf16.mxu0 %v2021
      %4059 = vmatpush1.bf16.msra.mxu0 %v2020
      %4060 = vmatprep.subr.bf16.mxu0 %v2023
      %4061 = vmatpush1.bf16.msra.mxu0 %v2022
      %4062 = vmatprep.subr.bf16.mxu0 %v2025
      %4063 = vmatpush1.bf16.msra.mxu0 %v2024
      %4064 = vmatprep.subr.bf16.mxu0 %v2027
      %4065 = vmatpush1.bf16.msra.mxu0 %v2026
      %4066 = vmatprep.subr.bf16.mxu0 %v2029
      %4067 = vmatpush1.bf16.msra.mxu0 %v2028
      %4068 = vmatprep.subr.bf16.mxu0 %v2031
      %4069 = vmatpush1.bf16.msra.mxu0 %v2030
      %4070 = vmatprep.subr.bf16.mxu0 %v2033
      %4071 = vmatpush1.bf16.msra.mxu0 %v2032
      %4072 = vmatprep.subr.bf16.mxu0 %v2035
      %4073 = vmatpush1.bf16.msra.mxu0 %v2034
      %4074 = vmatprep.mubr.bf16.mxu0 %v3656
      %4075 = vmatmul.mubr.bf16.gmra.mrb[0].mxu0 %v3655
      %v4076 = vpop.f32.mrb[0].mxu0
      %v4077 = vadd.f32 0.0, %v4076
      %v4078 = vpop.f32.mrb[0].mxu0
      %v4079 = vadd.f32 0.0, %v4078
      %v4080 = vpop.f32.mrb[0].mxu0
      %v4081 = vpop.f32.mrb[0].mxu0
      %4082 = vdwg.mxu0
      %v4083 = vpack.c.bf16 %v4077, %v4077
      %v4084 = vpack.c.bf16 %v4079, %v4079
      %s4085 = scalar_lea.vmem %s7, 16
      %v4086 = vld [vmem:[%s4085] sm:$0xf]
      %v4088 = vsel %vm3746, %v4086, 0
      %v4091 = vsel %vm3750, %v4083, 0
      %v4094 = vsel %vm3750, %v4084, 0
      %4096 = vmatprep.subr.bf16.mxu0 %v4094
      %4097 = vmatpush1.bf16.msra.mxu0 %v4091
      %4098 = vmatprep.subr.bf16.mxu0 0
      %4099 = vmatpush1.bf16.msra.mxu0 0
      %4100 = vmatprep.subr.bf16.mxu0 0
      %4101 = vmatpush1.bf16.msra.mxu0 0
      %4102 = vmatprep.subr.bf16.mxu0 0
      %4103 = vmatpush1.bf16.msra.mxu0 0
      %4104 = vmatprep.subr.bf16.mxu0 0
      %4105 = vmatpush1.bf16.msra.mxu0 0
      %4106 = vmatprep.subr.bf16.mxu0 0
      %4107 = vmatpush1.bf16.msra.mxu0 0
      %4108 = vmatprep.subr.bf16.mxu0 0
      %4109 = vmatpush1.bf16.msra.mxu0 0
      %4110 = vmatprep.subr.bf16.mxu0 0
      %4111 = vmatpush1.bf16.msra.mxu0 0
      %4112 = vmatprep.subr.bf16.mxu0 0
      %4113 = vmatpush1.bf16.msra.mxu0 0
      %4114 = vmatprep.subr.bf16.mxu0 0
      %4115 = vmatpush1.bf16.msra.mxu0 0
      %4116 = vmatprep.subr.bf16.mxu0 0
      %4117 = vmatpush1.bf16.msra.mxu0 0
      %4118 = vmatprep.subr.bf16.mxu0 0
      %4119 = vmatpush1.bf16.msra.mxu0 0
      %4120 = vmatprep.subr.bf16.mxu0 0
      %4121 = vmatpush1.bf16.msra.mxu0 0
      %4122 = vmatprep.subr.bf16.mxu0 0
      %4123 = vmatpush1.bf16.msra.mxu0 0
      %4124 = vmatprep.subr.bf16.mxu0 0
      %4125 = vmatpush1.bf16.msra.mxu0 0
      %4126 = vmatprep.subr.bf16.mxu0 0
      %4127 = vmatpush1.bf16.msra.mxu0 0
      %4128 = vmatprep.mubr.bf16.mxu0 0
      %4129 = vmatmul.mubr.bf16.gmra.mrb[0].mxu0 %v4088
      %v4130 = vpop.f32.mrb[0].mxu0
      %v4131 = vadd.f32 0.0, %v4130
      %v4132 = vpop.f32.mrb[0].mxu0
      %v4133 = vadd.f32 0.0, %v4132
      %v4134 = vpop.f32.mrb[0].mxu0
      %v4135 = vpop.f32.mrb[0].mxu0
      %4136 = vdwg.mxu0
      %v4137 = vadd.f32 %v4040, %v4131
      %v4138 = vadd.f32 %v4041, %v4133
      %4139 = vmatprep.subr.bf16.mxu0 %v2357
      %4140 = vmatpush1.bf16.msra.mxu0 %v2356
      %4141 = vmatprep.subr.bf16.mxu0 %v2359
      %4142 = vmatpush1.bf16.msra.mxu0 %v2358
      %4143 = vmatprep.subr.bf16.mxu0 %v2361
      %4144 = vmatpush1.bf16.msra.mxu0 %v2360
      %4145 = vmatprep.subr.bf16.mxu0 %v2363
      %4146 = vmatpush1.bf16.msra.mxu0 %v2362
      %4147 = vmatprep.subr.bf16.mxu0 %v2365
      %4148 = vmatpush1.bf16.msra.mxu0 %v2364
      %4149 = vmatprep.subr.bf16.mxu0 %v2367
      %4150 = vmatpush1.bf16.msra.mxu0 %v2366
      %4151 = vmatprep.subr.bf16.mxu0 %v2369
      %4152 = vmatpush1.bf16.msra.mxu0 %v2368
      %4153 = vmatprep.subr.bf16.mxu0 %v2371
      %4154 = vmatpush1.bf16.msra.mxu0 %v2370
      %4155 = vmatprep.subr.bf16.mxu0 %v2373
      %4156 = vmatpush1.bf16.msra.mxu0 %v2372
      %4157 = vmatprep.subr.bf16.mxu0 %v2375
      %4158 = vmatpush1.bf16.msra.mxu0 %v2374
      %4159 = vmatprep.subr.bf16.mxu0 %v2377
      %4160 = vmatpush1.bf16.msra.mxu0 %v2376
      %4161 = vmatprep.subr.bf16.mxu0 %v2379
      %4162 = vmatpush1.bf16.msra.mxu0 %v2378
      %4163 = vmatprep.subr.bf16.mxu0 %v2381
      %4164 = vmatpush1.bf16.msra.mxu0 %v2380
      %4165 = vmatprep.subr.bf16.mxu0 %v2383
      %4166 = vmatpush1.bf16.msra.mxu0 %v2382
      %4167 = vmatprep.subr.bf16.mxu0 %v2385
      %4168 = vmatpush1.bf16.msra.mxu0 %v2384
      %4169 = vmatprep.subr.bf16.mxu0 %v2387
      %4170 = vmatpush1.bf16.msra.mxu0 %v2386
      %4171 = vmatprep.mubr.bf16.mxu0 %v3656
      %4172 = vmatmul.mubr.bf16.gmra.mrb[0].mxu0 %v3655
      %v4173 = vpop.f32.mrb[0].mxu0
      %v4174 = vadd.f32 0.0, %v4173
      %v4175 = vpop.f32.mrb[0].mxu0
      %v4176 = vadd.f32 0.0, %v4175
      %v4177 = vpop.f32.mrb[0].mxu0
      %v4178 = vpop.f32.mrb[0].mxu0
      %4179 = vdwg.mxu0
      %v4180 = vpack.c.bf16 %v4174, %v4174
      %v4181 = vpack.c.bf16 %v4176, %v4176
      %s4182 = scalar_lea.vmem %s7, 20
      %v4183 = vld [vmem:[%s4182] sm:$0xf]
      %v4185 = vsel %vm3746, %v4183, 0
      %v4188 = vsel %vm3750, %v4180, 0
      %v4191 = vsel %vm3750, %v4181, 0
      %4193 = vmatprep.subr.bf16.mxu0 %v4191
      %4194 = vmatpush1.bf16.msra.mxu0 %v4188
      %4195 = vmatprep.subr.bf16.mxu0 0
      %4196 = vmatpush1.bf16.msra.mxu0 0
      %4197 = vmatprep.subr.bf16.mxu0 0
      %4198 = vmatpush1.bf16.msra.mxu0 0
      %4199 = vmatprep.subr.bf16.mxu0 0
      %4200 = vmatpush1.bf16.msra.mxu0 0
      %4201 = vmatprep.subr.bf16.mxu0 0
      %4202 = vmatpush1.bf16.msra.mxu0 0
      %4203 = vmatprep.subr.bf16.mxu0 0
      %4204 = vmatpush1.bf16.msra.mxu0 0
      %4205 = vmatprep.subr.bf16.mxu0 0
      %4206 = vmatpush1.bf16.msra.mxu0 0
      %4207 = vmatprep.subr.bf16.mxu0 0
      %4208 = vmatpush1.bf16.msra.mxu0 0
      %4209 = vmatprep.subr.bf16.mxu0 0
      %4210 = vmatpush1.bf16.msra.mxu0 0
      %4211 = vmatprep.subr.bf16.mxu0 0
      %4212 = vmatpush1.bf16.msra.mxu0 0
      %4213 = vmatprep.subr.bf16.mxu0 0
      %4214 = vmatpush1.bf16.msra.mxu0 0
      %4215 = vmatprep.subr.bf16.mxu0 0
      %4216 = vmatpush1.bf16.msra.mxu0 0
      %4217 = vmatprep.subr.bf16.mxu0 0
      %4218 = vmatpush1.bf16.msra.mxu0 0
      %4219 = vmatprep.subr.bf16.mxu0 0
      %4220 = vmatpush1.bf16.msra.mxu0 0
      %4221 = vmatprep.subr.bf16.mxu0 0
      %4222 = vmatpush1.bf16.msra.mxu0 0
      %4223 = vmatprep.subr.bf16.mxu0 0
      %4224 = vmatpush1.bf16.msra.mxu0 0
      %4225 = vmatprep.mubr.bf16.mxu0 0
      %4226 = vmatmul.mubr.bf16.gmra.mrb[0].mxu0 %v4185
      %v4227 = vpop.f32.mrb[0].mxu0
      %v4228 = vadd.f32 0.0, %v4227
      %v4229 = vpop.f32.mrb[0].mxu0
      %v4230 = vadd.f32 0.0, %v4229
      %v4231 = vpop.f32.mrb[0].mxu0
      %v4232 = vpop.f32.mrb[0].mxu0
      %4233 = vdwg.mxu0
      %v4234 = vadd.f32 %v4137, %v4228
      %v4235 = vadd.f32 %v4138, %v4230
      %4236 = vmatprep.subr.bf16.mxu0 %v2709
      %4237 = vmatpush1.bf16.msra.mxu0 %v2708
      %4238 = vmatprep.subr.bf16.mxu0 %v2711
      %4239 = vmatpush1.bf16.msra.mxu0 %v2710
      %4240 = vmatprep.subr.bf16.mxu0 %v2713
      %4241 = vmatpush1.bf16.msra.mxu0 %v2712
      %4242 = vmatprep.subr.bf16.mxu0 %v2715
      %4243 = vmatpush1.bf16.msra.mxu0 %v2714
      %4244 = vmatprep.subr.bf16.mxu0 %v2717
      %4245 = vmatpush1.bf16.msra.mxu0 %v2716
      %4246 = vmatprep.subr.bf16.mxu0 %v2719
      %4247 = vmatpush1.bf16.msra.mxu0 %v2718
      %4248 = vmatprep.subr.bf16.mxu0 %v2721
      %4249 = vmatpush1.bf16.msra.mxu0 %v2720
      %4250 = vmatprep.subr.bf16.mxu0 %v2723
      %4251 = vmatpush1.bf16.msra.mxu0 %v2722
      %4252 = vmatprep.subr.bf16.mxu0 %v2725
      %4253 = vmatpush1.bf16.msra.mxu0 %v2724
      %4254 = vmatprep.subr.bf16.mxu0 %v2727
      %4255 = vmatpush1.bf16.msra.mxu0 %v2726
      %4256 = vmatprep.subr.bf16.mxu0 %v2729
      %4257 = vmatpush1.bf16.msra.mxu0 %v2728
      %4258 = vmatprep.subr.bf16.mxu0 %v2731
      %4259 = vmatpush1.bf16.msra.mxu0 %v2730
      %4260 = vmatprep.subr.bf16.mxu0 %v2733
      %4261 = vmatpush1.bf16.msra.mxu0 %v2732
      %4262 = vmatprep.subr.bf16.mxu0 %v2735
      %4263 = vmatpush1.bf16.msra.mxu0 %v2734
      %4264 = vmatprep.subr.bf16.mxu0 %v2737
      %4265 = vmatpush1.bf16.msra.mxu0 %v2736
      %4266 = vmatprep.subr.bf16.mxu0 %v2739
      %4267 = vmatpush1.bf16.msra.mxu0 %v2738
      %4268 = vmatprep.mubr.bf16.mxu0 %v3656
      %4269 = vmatmul.mubr.bf16.gmra.mrb[0].mxu0 %v3655
      %v4270 = vpop.f32.mrb[0].mxu0
      %v4271 = vadd.f32 0.0, %v4270
      %v4272 = vpop.f32.mrb[0].mxu0
      %v4273 = vadd.f32 0.0, %v4272
      %v4274 = vpop.f32.mrb[0].mxu0
      %v4275 = vpop.f32.mrb[0].mxu0
      %4276 = vdwg.mxu0
      %v4277 = vpack.c.bf16 %v4271, %v4271
      %v4278 = vpack.c.bf16 %v4273, %v4273
      %s4279 = scalar_lea.vmem %s7, 24
      %v4280 = vld [vmem:[%s4279] sm:$0xf]
      %v4282 = vsel %vm3746, %v4280, 0
      %v4285 = vsel %vm3750, %v4277, 0
      %v4288 = vsel %vm3750, %v4278, 0
      %4290 = vmatprep.subr.bf16.mxu0 %v4288
      %4291 = vmatpush1.bf16.msra.mxu0 %v4285
      %4292 = vmatprep.subr.bf16.mxu0 0
      %4293 = vmatpush1.bf16.msra.mxu0 0
      %4294 = vmatprep.subr.bf16.mxu0 0
      %4295 = vmatpush1.bf16.msra.mxu0 0
      %4296 = vmatprep.subr.bf16.mxu0 0
      %4297 = vmatpush1.bf16.msra.mxu0 0
      %4298 = vmatprep.subr.bf16.mxu0 0
      %4299 = vmatpush1.bf16.msra.mxu0 0
      %4300 = vmatprep.subr.bf16.mxu0 0
      %4301 = vmatpush1.bf16.msra.mxu0 0
      %4302 = vmatprep.subr.bf16.mxu0 0
      %4303 = vmatpush1.bf16.msra.mxu0 0
      %4304 = vmatprep.subr.bf16.mxu0 0
      %4305 = vmatpush1.bf16.msra.mxu0 0
      %4306 = vmatprep.subr.bf16.mxu0 0
      %4307 = vmatpush1.bf16.msra.mxu0 0
      %4308 = vmatprep.subr.bf16.mxu0 0
      %4309 = vmatpush1.bf16.msra.mxu0 0
      %4310 = vmatprep.subr.bf16.mxu0 0
      %4311 = vmatpush1.bf16.msra.mxu0 0
      %4312 = vmatprep.subr.bf16.mxu0 0
      %4313 = vmatpush1.bf16.msra.mxu0 0
      %4314 = vmatprep.subr.bf16.mxu0 0
      %4315 = vmatpush1.bf16.msra.mxu0 0
      %4316 = vmatprep.subr.bf16.mxu0 0
      %4317 = vmatpush1.bf16.msra.mxu0 0
      %4318 = vmatprep.subr.bf16.mxu0 0
      %4319 = vmatpush1.bf16.msra.mxu0 0
      %4320 = vmatprep.subr.bf16.mxu0 0
      %4321 = vmatpush1.bf16.msra.mxu0 0
      %4322 = vmatprep.mubr.bf16.mxu0 0
      %4323 = vmatmul.mubr.bf16.gmra.mrb[0].mxu0 %v4282
      %v4324 = vpop.f32.mrb[0].mxu0
      %v4325 = vadd.f32 0.0, %v4324
      %v4326 = vpop.f32.mrb[0].mxu0
      %v4327 = vadd.f32 0.0, %v4326
      %v4328 = vpop.f32.mrb[0].mxu0
      %v4329 = vpop.f32.mrb[0].mxu0
      %4330 = vdwg.mxu0
      %v4331 = vadd.f32 %v4234, %v4325
      %v4332 = vadd.f32 %v4235, %v4327
      %4333 = vmatprep.subr.bf16.mxu0 %v3061
      %4334 = vmatpush1.bf16.msra.mxu0 %v3060
      %4335 = vmatprep.subr.bf16.mxu0 %v3063
      %4336 = vmatpush1.bf16.msra.mxu0 %v3062
      %4337 = vmatprep.subr.bf16.mxu0 %v3065
      %4338 = vmatpush1.bf16.msra.mxu0 %v3064
      %4339 = vmatprep.subr.bf16.mxu0 %v3067
      %4340 = vmatpush1.bf16.msra.mxu0 %v3066
      %4341 = vmatprep.subr.bf16.mxu0 %v3069
      %4342 = vmatpush1.bf16.msra.mxu0 %v3068
      %4343 = vmatprep.subr.bf16.mxu0 %v3071
      %4344 = vmatpush1.bf16.msra.mxu0 %v3070
      %4345 = vmatprep.subr.bf16.mxu0 %v3073
      %4346 = vmatpush1.bf16.msra.mxu0 %v3072
      %4347 = vmatprep.subr.bf16.mxu0 %v3075
      %4348 = vmatpush1.bf16.msra.mxu0 %v3074
      %4349 = vmatprep.subr.bf16.mxu0 %v3077
      %4350 = vmatpush1.bf16.msra.mxu0 %v3076
      %4351 = vmatprep.subr.bf16.mxu0 %v3079
      %4352 = vmatpush1.bf16.msra.mxu0 %v3078
      %4353 = vmatprep.subr.bf16.mxu0 %v3081
      %4354 = vmatpush1.bf16.msra.mxu0 %v3080
      %4355 = vmatprep.subr.bf16.mxu0 %v3083
      %4356 = vmatpush1.bf16.msra.mxu0 %v3082
      %4357 = vmatprep.subr.bf16.mxu0 %v3085
      %4358 = vmatpush1.bf16.msra.mxu0 %v3084
      %4359 = vmatprep.subr.bf16.mxu0 %v3087
      %4360 = vmatpush1.bf16.msra.mxu0 %v3086
      %4361 = vmatprep.subr.bf16.mxu0 %v3089
      %4362 = vmatpush1.bf16.msra.mxu0 %v3088
      %4363 = vmatprep.subr.bf16.mxu0 %v3091
      %4364 = vmatpush1.bf16.msra.mxu0 %v3090
      %4365 = vmatprep.mubr.bf16.mxu0 %v3656
      %4366 = vmatmul.mubr.bf16.gmra.mrb[0].mxu0 %v3655
      %v4367 = vpop.f32.mrb[0].mxu0
      %v4368 = vadd.f32 0.0, %v4367
      %v4369 = vpop.f32.mrb[0].mxu0
      %v4370 = vadd.f32 0.0, %v4369
      %v4371 = vpop.f32.mrb[0].mxu0
      %v4372 = vpop.f32.mrb[0].mxu0
      %4373 = vdwg.mxu0
      %v4374 = vpack.c.bf16 %v4368, %v4368
      %v4375 = vpack.c.bf16 %v4370, %v4370
      %s4376 = scalar_lea.vmem %s7, 28
      %v4377 = vld [vmem:[%s4376] sm:$0xf]
      %v4379 = vsel %vm3746, %v4377, 0
      %v4382 = vsel %vm3750, %v4374, 0
      %v4385 = vsel %vm3750, %v4375, 0
      %4387 = vmatprep.subr.bf16.mxu0 %v4385
      %4388 = vmatpush1.bf16.msra.mxu0 %v4382
      %4389 = vmatprep.subr.bf16.mxu0 0
      %4390 = vmatpush1.bf16.msra.mxu0 0
      %4391 = vmatprep.subr.bf16.mxu0 0
      %4392 = vmatpush1.bf16.msra.mxu0 0
      %4393 = vmatprep.subr.bf16.mxu0 0
      %4394 = vmatpush1.bf16.msra.mxu0 0
      %4395 = vmatprep.subr.bf16.mxu0 0
      %4396 = vmatpush1.bf16.msra.mxu0 0
      %4397 = vmatprep.subr.bf16.mxu0 0
      %4398 = vmatpush1.bf16.msra.mxu0 0
      %4399 = vmatprep.subr.bf16.mxu0 0
      %4400 = vmatpush1.bf16.msra.mxu0 0
      %4401 = vmatprep.subr.bf16.mxu0 0
      %4402 = vmatpush1.bf16.msra.mxu0 0
      %4403 = vmatprep.subr.bf16.mxu0 0
      %4404 = vmatpush1.bf16.msra.mxu0 0
      %4405 = vmatprep.subr.bf16.mxu0 0
      %4406 = vmatpush1.bf16.msra.mxu0 0
      %4407 = vmatprep.subr.bf16.mxu0 0
      %4408 = vmatpush1.bf16.msra.mxu0 0
      %4409 = vmatprep.subr.bf16.mxu0 0
      %4410 = vmatpush1.bf16.msra.mxu0 0
      %4411 = vmatprep.subr.bf16.mxu0 0
      %4412 = vmatpush1.bf16.msra.mxu0 0
      %4413 = vmatprep.subr.bf16.mxu0 0
      %4414 = vmatpush1.bf16.msra.mxu0 0
      %4415 = vmatprep.subr.bf16.mxu0 0
      %4416 = vmatpush1.bf16.msra.mxu0 0
      %4417 = vmatprep.subr.bf16.mxu0 0
      %4418 = vmatpush1.bf16.msra.mxu0 0
      %4419 = vmatprep.mubr.bf16.mxu0 0
      %4420 = vmatmul.mubr.bf16.gmra.mrb[0].mxu0 %v4379
      %v4421 = vpop.f32.mrb[0].mxu0
      %v4422 = vadd.f32 0.0, %v4421
      %v4423 = vpop.f32.mrb[0].mxu0
      %v4424 = vadd.f32 0.0, %v4423
      %v4425 = vpop.f32.mrb[0].mxu0
      %v4426 = vpop.f32.mrb[0].mxu0
      %4427 = vdwg.mxu0
      %v4428 = vadd.f32 %v4331, %v4422
      %v4429 = vadd.f32 %v4332, %v4424
      %4430 = vmatprep.subr.bf16.mxu0 %v3413
      %4431 = vmatpush1.bf16.msra.mxu0 %v3412
      %4432 = vmatprep.subr.bf16.mxu0 %v3415
      %4433 = vmatpush1.bf16.msra.mxu0 %v3414
      %4434 = vmatprep.subr.bf16.mxu0 %v3417
      %4435 = vmatpush1.bf16.msra.mxu0 %v3416
      %4436 = vmatprep.subr.bf16.mxu0 %v3419
      %4437 = vmatpush1.bf16.msra.mxu0 %v3418
      %4438 = vmatprep.subr.bf16.mxu0 %v3421
      %4439 = vmatpush1.bf16.msra.mxu0 %v3420
      %4440 = vmatprep.subr.bf16.mxu0 %v3423
      %4441 = vmatpush1.bf16.msra.mxu0 %v3422
      %4442 = vmatprep.subr.bf16.mxu0 %v3425
      %4443 = vmatpush1.bf16.msra.mxu0 %v3424
      %4444 = vmatprep.subr.bf16.mxu0 %v3427
      %4445 = vmatpush1.bf16.msra.mxu0 %v3426
      %4446 = vmatprep.subr.bf16.mxu0 %v3429
      %4447 = vmatpush1.bf16.msra.mxu0 %v3428
      %4448 = vmatprep.subr.bf16.mxu0 %v3431
      %4449 = vmatpush1.bf16.msra.mxu0 %v3430
      %4450 = vmatprep.subr.bf16.mxu0 %v3433
      %4451 = vmatpush1.bf16.msra.mxu0 %v3432
      %4452 = vmatprep.subr.bf16.mxu0 %v3435
      %4453 = vmatpush1.bf16.msra.mxu0 %v3434
      %4454 = vmatprep.subr.bf16.mxu0 %v3437
      %4455 = vmatpush1.bf16.msra.mxu0 %v3436
      %4456 = vmatprep.subr.bf16.mxu0 %v3439
      %4457 = vmatpush1.bf16.msra.mxu0 %v3438
      %4458 = vmatprep.subr.bf16.mxu0 %v3441
      %4459 = vmatpush1.bf16.msra.mxu0 %v3440
      %4460 = vmatprep.subr.bf16.mxu0 %v3443
      %4461 = vmatpush1.bf16.msra.mxu0 %v3442
      %4462 = vmatprep.mubr.bf16.mxu0 %v3656
      %4463 = vmatmul.mubr.bf16.gmra.mrb[0].mxu0 %v3655
      %v4464 = vpop.f32.mrb[0].mxu0
      %v4465 = vadd.f32 0.0, %v4464
      %v4466 = vpop.f32.mrb[0].mxu0
      %v4467 = vadd.f32 0.0, %v4466
      %v4468 = vpop.f32.mrb[0].mxu0
      %v4469 = vpop.f32.mrb[0].mxu0
      %4470 = vdwg.mxu0
      %v4471 = vpack.c.bf16 %v4465, %v4465
      %v4472 = vpack.c.bf16 %v4467, %v4467
      %s4473 = scalar_lea.vmem %s7, 32
      %v4474 = vld [vmem:[%s4473] sm:$0xf]
      %v4476 = vsel %vm3746, %v4474, 0
      %v4479 = vsel %vm3750, %v4471, 0
      %v4482 = vsel %vm3750, %v4472, 0
      %4484 = vmatprep.subr.bf16.mxu0 %v4482
      %4485 = vmatpush1.bf16.msra.mxu0 %v4479
      %4486 = vmatprep.subr.bf16.mxu0 0
      %4487 = vmatpush1.bf16.msra.mxu0 0
      %4488 = vmatprep.subr.bf16.mxu0 0
      %4489 = vmatpush1.bf16.msra.mxu0 0
      %4490 = vmatprep.subr.bf16.mxu0 0
      %4491 = vmatpush1.bf16.msra.mxu0 0
      %4492 = vmatprep.subr.bf16.mxu0 0
      %4493 = vmatpush1.bf16.msra.mxu0 0
      %4494 = vmatprep.subr.bf16.mxu0 0
      %4495 = vmatpush1.bf16.msra.mxu0 0
      %4496 = vmatprep.subr.bf16.mxu0 0
      %4497 = vmatpush1.bf16.msra.mxu0 0
      %4498 = vmatprep.subr.bf16.mxu0 0
      %4499 = vmatpush1.bf16.msra.mxu0 0
      %4500 = vmatprep.subr.bf16.mxu0 0
      %4501 = vmatpush1.bf16.msra.mxu0 0
      %4502 = vmatprep.subr.bf16.mxu0 0
      %4503 = vmatpush1.bf16.msra.mxu0 0
      %4504 = vmatprep.subr.bf16.mxu0 0
      %4505 = vmatpush1.bf16.msra.mxu0 0
      %4506 = vmatprep.subr.bf16.mxu0 0
      %4507 = vmatpush1.bf16.msra.mxu0 0
      %4508 = vmatprep.subr.bf16.mxu0 0
      %4509 = vmatpush1.bf16.msra.mxu0 0
      %4510 = vmatprep.subr.bf16.mxu0 0
      %4511 = vmatpush1.bf16.msra.mxu0 0
      %4512 = vmatprep.subr.bf16.mxu0 0
      %4513 = vmatpush1.bf16.msra.mxu0 0
      %4514 = vmatprep.subr.bf16.mxu0 0
      %4515 = vmatpush1.bf16.msra.mxu0 0
      %4516 = vmatprep.mubr.bf16.mxu0 0
      %4517 = vmatmul.mubr.bf16.gmra.mrb[0].mxu0 %v4476
      %v4518 = vpop.f32.mrb[0].mxu0
      %v4519 = vadd.f32 0.0, %v4518
      %v4520 = vpop.f32.mrb[0].mxu0
      %v4521 = vadd.f32 0.0, %v4520
      %v4522 = vpop.f32.mrb[0].mxu0
      %v4523 = vpop.f32.mrb[0].mxu0
      %4524 = vdwg.mxu0
      %v4525 = vadd.f32 %v4428, %v4519
      %v4526 = vadd.f32 %v4429, %v4521
      %v4527 = vld [vmem:[%s8] sm:$0xff]
      %4529 = vset.pattern.permute.xlu0 0
      %4530 = vperm.xlu0 %4529, %v4527
      %v4531 = vpop.permute.xlu0 %4530
      %v4533 = vadd.f32 %v4525, %v4531
      %v4534 = vadd.f32 %v4526, %v4531
      %v4535 = vmax.f32 %v4533, 0.0
      %v4536 = vmax.f32 %v4534, 0.0
      %v4537 = vld [vmem:[%s9] sm:$0xf]
      %v4538 = vpack.c.bf16 %v3633, %v3633
      %v4539 = vpack.c.bf16 %v3634, %v3634
      %v4540 = vld [vmem:[%s10] sm:$0xff]
      %4542 = vset.pattern.permute.xlu0 0
      %4543 = vperm.xlu0 %4542, %v4540
      %v4544 = vpop.permute.xlu0 %4543
      %v4547 = vsel %vm417, %v4537, 0
      %v4550 = vsel %vm421, %v4538, 0
      %v4553 = vsel %vm421, %v4539, 0
      %4555 = vmatprep.subr.bf16.mxu0 %v4553
      %4556 = vmatpush1.bf16.msra.mxu0 %v4550
      %4557 = vmatprep.subr.bf16.mxu0 0
      %4558 = vmatpush1.bf16.msra.mxu0 0
      %4559 = vmatprep.subr.bf16.mxu0 0
      %4560 = vmatpush1.bf16.msra.mxu0 0
      %4561 = vmatprep.subr.bf16.mxu0 0
      %4562 = vmatpush1.bf16.msra.mxu0 0
      %4563 = vmatprep.subr.bf16.mxu0 0
      %4564 = vmatpush1.bf16.msra.mxu0 0
      %4565 = vmatprep.subr.bf16.mxu0 0
      %4566 = vmatpush1.bf16.msra.mxu0 0
      %4567 = vmatprep.subr.bf16.mxu0 0
      %4568 = vmatpush1.bf16.msra.mxu0 0
      %4569 = vmatprep.subr.bf16.mxu0 0
      %4570 = vmatpush1.bf16.msra.mxu0 0
      %4571 = vmatprep.subr.bf16.mxu0 0
      %4572 = vmatpush1.bf16.msra.mxu0 0
      %4573 = vmatprep.subr.bf16.mxu0 0
      %4574 = vmatpush1.bf16.msra.mxu0 0
      %4575 = vmatprep.subr.bf16.mxu0 0
      %4576 = vmatpush1.bf16.msra.mxu0 0
      %4577 = vmatprep.subr.bf16.mxu0 0
      %4578 = vmatpush1.bf16.msra.mxu0 0
      %4579 = vmatprep.subr.bf16.mxu0 0
      %4580 = vmatpush1.bf16.msra.mxu0 0
      %4581 = vmatprep.subr.bf16.mxu0 0
      %4582 = vmatpush1.bf16.msra.mxu0 0
      %4583 = vmatprep.subr.bf16.mxu0 0
      %4584 = vmatpush1.bf16.msra.mxu0 0
      %4585 = vmatprep.subr.bf16.mxu0 0
      %4586 = vmatpush1.bf16.msra.mxu0 0
      %4587 = vmatprep.mubr.bf16.mxu0 0
      %4588 = vmatmul.mubr.bf16.gmra.mrb[0].mxu0 %v4547
      %v4589 = vpop.f32.mrb[0].mxu0
      %v4590 = vadd.f32 %v4544, %v4589
      %v4591 = vpop.f32.mrb[0].mxu0
      %v4592 = vadd.f32 %v4544, %v4591
      %v4593 = vpop.f32.mrb[0].mxu0
      %v4594 = vpop.f32.mrb[0].mxu0
      %4595 = vdwg.mxu0
      %v4596 = vmax.f32 %v4590, 0.0
      %v4597 = vmax.f32 %v4592, 0.0
      %4598 = vst [vmem:[%s386] sm:$0xff] %v471
      %4599 = vst [vmem:[%s386 + $0x8] sm:$0xff] %v472
      %4600 = vst [vmem:[%s386 + $0x10] sm:$0xff] %v3651
      %4601 = vst [vmem:[%s386 + $0x18] sm:$0xff] %v3652
      %4602 = vst [vmem:[%s386 + $0x20] sm:$0xff] %v4535
      %4603 = vst [vmem:[%s386 + $0x28] sm:$0xff] %v4536
      %4604 = vst [vmem:[%s386 + $0x30] sm:$0xff] %v4596
      %4605 = vst [vmem:[%s386 + $0x38] sm:$0xff] %v4597
      %p4606 = scmp.lt.s32.totalorder %s22, 1
      %s4607 = scalar_select %p4606, %s22, 1
      %s4608 = smul.addr %s4607, 8
      %s4609 = smul.addr %s4608, 8
      %s4610 = scalar_lea.vmem %s11, %s4609
      // Predicated region
      $region65: #{inception_forward.1} parent=63 // pred_check
        %p4611 = pneg %p276
      $region66: #{inception_forward.1} parent=63 // pred_check_branch
        %4613 = sbr.rel (%p4611) target = $region68
      $region67: #{inception_forward.1} parent=63 // pred_region
        _
      $region68: #{inception_forward.1} parent=63 // pred_fallthru
        _
    $region64: #{inception_forward.1} parent=5 // pred_fallthru
      _
    %p4614 = scmp.le.s32.totalorder 2, %s17
    // Predicated region
    $region69: #{inception_forward.1} parent=5 // pred_check
      %p4615 = pneg %p4614
    $region70: #{inception_forward.1} parent=5 // pred_check_branch
      %4617 = sbr.rel (%p4615) target = $region72
    $region71: #{inception_forward.1} parent=5 // pred_region
      %s4618 = ssub.s32 %s17, 2
      // Predicated region
      $region73: #{inception_forward.1} parent=71 // pred_check
        %p4619 = pneg %p282
      $region74: #{inception_forward.1} parent=71 // pred_check_branch
        %4621 = sbr.rel (%p4619) target = $region76
      $region75: #{inception_forward.1} parent=71 // pred_region
        %p4622 = scmp.lt.s32.totalorder %s23, 1
        %s4623 = scalar_select %p4622, %s23, 1
        %s4624 = smul.addr %s4623, 8
        %s4625 = smul.addr %s4624, 8
        %s4626 = scalar_lea.vmem %s11, %s4625
      $region76: #{inception_forward.1} parent=71 // pred_fallthru
        _
    $region72: #{inception_forward.1} parent=5 // pred_fallthru
      _
  $region6: #{inception_forward.1} parent=0 // loop_footer
    %s21 = sadd.s32 1, %s17
  $region7: #{inception_forward.1} parent=0 // loop_footer_branch
    %16 = sbr.rel target = $region3
  $region8: #{inception_forward.1} parent=0 // loop_exit
    _

</llo_original>
